<compile_context>
chip_gen: v7x
topology: tpu7x:2x2x1
jax: 0.10.0
libtpu: 0.0.40
codegen_flags: <defaults>
</compile_context>

<pallas_src>
import functools

import jax
import jax.numpy as jnp
from jax import lax
from jax.experimental import pallas as pl
from jax.experimental.pallas import tpu as pltpu


def encoder_block_kernel(
    x_ref,                          # (1, S, E)  full sequence for batch b
    ln1_g_ref, ln1_b_ref,           # (1, E)
    wq_t_ref, bq_ref,               # (E, E) pre-transposed + pre-scaled, (1, E)
    wkv_t_ref, bkv_ref,             # (E, 2E) pre-transposed, (1, 2E)
    wo_t_ref, bo_ref,               # (E, E) pre-transposed, (1, E)
    w1_t_ref, b1_ref,               # (E, M) pre-transposed, (1, M)
    w2_t_ref, b2_ref,               # (M, E) pre-transposed, (1, E)
    ln2_g_ref, ln2_b_ref,           # (1, E)
    o_ref,                          # (1, tq, E)
    kh_ref, vh_ref,                 # VMEM scratch (H, S, hd), compute dtype
    *, num_heads, kv_tile, approx_recip, eps=1e-5,
):
    f32 = jnp.float32
    cdt = wq_t_ref.dtype            # MXU compute dtype (bf16 in the default path)
    S, E = x_ref.shape[1], x_ref.shape[2]
    tq = o_ref.shape[1]
    H = num_heads
    hd = E // H

    def layer_norm(v, g_ref, b_ref):
        mu = jnp.mean(v, axis=-1, keepdims=True)
        c = v - mu
        var = jnp.mean(c * c, axis=-1, keepdims=True)
        return c * lax.rsqrt(var + eps) * g_ref[...] + b_ref[...]

    # ---- K/V cache: full-seq LN1 + KV projection + head transpose, once per batch ----
    @pl.when(pl.program_id(1) == 0)
    def _():
        x_all = x_ref[0].astype(f32)                                     # (S, E)
        xn = layer_norm(x_all, ln1_g_ref, ln1_b_ref)
        kv = (jnp.dot(xn.astype(cdt), wkv_t_ref[...],
                      preferred_element_type=f32) + bkv_ref[...]).astype(cdt)  # (S, 2E)
        kh_ref[...] = jnp.transpose(kv[:, :E].reshape(S, H, hd), (1, 0, 2))
        vh_ref[...] = jnp.transpose(kv[:, E:].reshape(S, H, hd), (1, 0, 2))

    # ---- Query path for this (batch, query-tile) step ----
    q_start = pl.multiple_of(pl.program_id(1) * tq, tq)
    x_q = x_ref[0, pl.ds(q_start, tq), :].astype(f32)                    # (tq, E)
    xq_n = layer_norm(x_q, ln1_g_ref, ln1_b_ref)
    # 1/sqrt(hd) scale is already folded into wq_t / bq.
    q = jnp.dot(xq_n.astype(cdt), wq_t_ref[...],
                preferred_element_type=f32) + bq_ref[...]                # (tq, E)
    qh = jnp.transpose(q.reshape(tq, H, hd), (1, 0, 2)).astype(cdt)      # (H, tq, hd)

    # ---- Online-softmax attention over KV tiles (score tile = (H, tq, kv_tile)) ----
    n_kv = S // kv_tile

    def kv_step(ks, carry):
        m, l, acc = carry
        kt = kh_ref[:, pl.ds(ks, kv_tile), :]                            # (H, tk, hd)
        vt = vh_ref[:, pl.ds(ks, kv_tile), :]
        s = jnp.einsum("hqd,hkd->hqk", qh, kt,
                       preferred_element_type=f32)                       # (H, tq, tk)
        m_new = jnp.maximum(m, jnp.max(s, axis=-1, keepdims=True))
        alpha = jnp.exp(m - m_new)
        p = jnp.exp(s - m_new)                                           # f32
        l_new = alpha * l + jnp.sum(p, axis=-1, keepdims=True)
        acc_new = alpha * acc + jnp.einsum("hqk,hkd->hqd", p.astype(cdt), vt,
                                           preferred_element_type=f32)
        return m_new, l_new, acc_new

    carry = (jnp.full((H, tq, 1), -jnp.inf, f32),
             jnp.zeros((H, tq, 1), f32),
             jnp.zeros((H, tq, hd), f32))
    if n_kv <= 4:
        # Static unroll: chunk starts are compile-time constants, LLO sees the whole body.
        for t in range(n_kv):
            carry = kv_step(t * kv_tile, carry)
    else:
        carry = lax.fori_loop(
            0, n_kv,
            lambda t, c: kv_step(pl.multiple_of(t * kv_tile, kv_tile), c),
            carry)
    _, l, acc = carry

    # Normalize the small (H, tq, hd) context, not the (H, tq, S) scores.
    if approx_recip:
        ctx_h = acc * pl.reciprocal(l, approx=True)   # EUP slot, bf16 path
    else:
        ctx_h = acc / l                               # exact, f32 verification path
    ctx = jnp.transpose(ctx_h, (1, 0, 2)).reshape(tq, E)                 # (tq, E)

    attn_out = jnp.dot(ctx.astype(cdt), wo_t_ref[...],
                       preferred_element_type=f32) + bo_ref[...]
    x1 = x_q + attn_out                                                  # residual 1 (f32)

    # ---- LN2 + FFN ----
    xn2 = layer_norm(x1, ln2_g_ref, ln2_b_ref)
    h1 = jnp.maximum(jnp.dot(xn2.astype(cdt), w1_t_ref[...],
                             preferred_element_type=f32) + b1_ref[...], 0.0).astype(cdt)
    ffn = jnp.dot(h1, w2_t_ref[...], preferred_element_type=f32) + b2_ref[...]

    o_ref[0] = (x1 + ffn).astype(o_ref.dtype)                            # residual 2


def _tpu_vmem_capacity_bytes():
    try:
        return int(pltpu.get_tpu_info().vmem_capacity_bytes)
    except Exception:
        return 64 * 1024 * 1024   # conservative (v7x-sized) default


def _pick_divisor_tile(size, target):
    """Largest divisor of `size` <= target, preferring multiples of 256 (MXU M dim on
    v6e/v7x), then 128 (v5e), then 8."""
    if size <= target:
        return size
    for quantum in (256, 128, 8):
        t = (target // quantum) * quantum
        while t >= quantum:
            if size % t == 0:
                return t
            t -= quantum
    # TODO(synk): pad/mask the query tail instead of falling back to full length for
    # awkward (e.g. prime) sequence lengths.
    return size


def encoder_block(x, params, num_heads, *, max_query_tile=None, kv_tile=None,
                  matmul_dtype=jnp.bfloat16):
    """params are in PyTorch layout:
    (ln1_g, ln1_b, wqkv(3E,E), bqkv(1,3E), wo(E,E), bo(1,E),
     w1(M,E), b1(1,M), w2(E,M), b2(1,E), ln2_g, ln2_b)."""
    (ln1_g, ln1_b, wqkv, bqkv, wo, bo, w1, b1, w2, b2, ln2_g, ln2_b) = params
    B, S, E = x.shape
    M = w1.shape[0]
    H = num_heads
    assert E % H == 0
    hd = E // H
    f32 = jnp.float32
    scale = 1.0 / float(hd) ** 0.5

    vmem_cap = _tpu_vmem_capacity_bytes()
    if max_query_tile is None:
        # Bigger tiles on 128-MiB-VMEM parts (v5e/v6e); 256 on v7x (64 MiB).
        max_query_tile = 512 if vmem_cap >= 96 * 1024 * 1024 else 256

    tq = _pick_divisor_tile(S, max_query_tile)
    if kv_tile is None:
        kv_tile = _pick_divisor_tile(S, 512)
    assert S % tq == 0 and S % kv_tile == 0

    # Pre-transpose / downcast weights ONCE; fold the attention scale into wq/bq.
    wq_t = (wqkv[:E].T * scale).astype(matmul_dtype)     # (E, E)
    bq = (bqkv[:, :E] * scale).astype(f32)               # (1, E)
    wkv_t = wqkv[E:].T.astype(matmul_dtype)              # (E, 2E)
    bkv = bqkv[:, E:].astype(f32)                        # (1, 2E)
    wo_t = wo.T.astype(matmul_dtype)                     # (E, E)
    w1_t = w1.T.astype(matmul_dtype)                     # (E, M)
    w2_t = w2.T.astype(matmul_dtype)                     # (M, E)

    weights = (ln1_g.astype(f32), ln1_b.astype(f32),
               wq_t, bq, wkv_t, bkv,
               wo_t, bo.astype(f32),
               w1_t, b1.astype(f32), w2_t, b2.astype(f32),
               ln2_g.astype(f32), ln2_b.astype(f32))

    grid = (B, S // tq)

    kernel = functools.partial(
        encoder_block_kernel, num_heads=H, kv_tile=kv_tile,
        approx_recip=(matmul_dtype != jnp.float32))

    # Cost of the ACTUAL kernel: KV projection / full-seq LN run once per batch element.
    flops = 2 * B * S * E * (4 * E + 2 * S + 2 * M)
    bytes_accessed = (2 * int(x.size) * x.dtype.itemsize
                      + sum(int(p.size) * p.dtype.itemsize for p in weights))
    cost = pl.CostEstimate(flops=int(flops),
                           transcendentals=int(B * H * S * S),
                           bytes_accessed=int(bytes_accessed))

    compiler_params = pltpu.CompilerParams(
        # qi must be "arbitrary": the K/V cache scratch persists across qi steps.
        dimension_semantics=("parallel", "arbitrary"),
        vmem_limit_bytes=int(min((vmem_cap * 3) // 4, 112 * 1024 * 1024)))

    out_shape = jax.ShapeDtypeStruct((B, S, E), x.dtype)
    scratch = [pltpu.VMEM((H, S, hd), matmul_dtype),     # head-major K cache
               pltpu.VMEM((H, S, hd), matmul_dtype)]     # head-major V cache

    def build(single_buffer_weights):
        def const_spec(p):
            nd = p.ndim
            idx = lambda b, qi, nd=nd: (0,) * nd
            if single_buffer_weights:
                # Constant block index -> double-buffering buys nothing; halve residency.
                return pl.BlockSpec(p.shape, idx, pipeline_mode=pl.Buffered(1))
            return pl.BlockSpec(p.shape, idx)

        in_specs = ([pl.BlockSpec((1, S, E), lambda b, qi: (b, 0, 0))]   # full seq of x
                    + [const_spec(p) for p in weights])
        return pl.pallas_call(
            kernel,
            out_shape=out_shape,
            grid=grid,
            in_specs=in_specs,
            out_specs=pl.BlockSpec((1, tq, E), lambda b, qi: (b, qi, 0)),
            scratch_shapes=scratch,
            compiler_params=compiler_params,
            cost_estimate=cost)

    try:
        return build(single_buffer_weights=True)(x, *weights)
    except Exception:
        # Fallback for jax builds where pl.Buffered(1) on a pallas_call BlockSpec is
        # not supported; semantics are identical, only weight VMEM residency differs.
        return build(single_buffer_weights=False)(x, *weights)


def reference_encoder_block(x, params, num_heads, eps=1e-5):
    (ln1_g, ln1_b, wqkv, bqkv, wo, bo, w1, b1, w2, b2, ln2_g, ln2_b) = params
    B, S, E = x.shape
    hd = E // num_heads
    scale = 1.0 / (hd ** 0.5)

    def ln(v, g, b):
        mu = jnp.mean(v, axis=-1, keepdims=True)
        var = jnp.mean((v - mu) ** 2, axis=-1, keepdims=True)
        return (v - mu) / jnp.sqrt(var + eps) * g[0] + b[0]

    xn = ln(x, ln1_g, ln1_b)
    qkv = jnp.einsum("bse,fe->bsf", xn, wqkv) + bqkv[0]
    q, k, v = qkv[..., :E], qkv[..., E:2 * E], qkv[..., 2 * E:]
    q = q.reshape(B, S, num_heads, hd).transpose(0, 2, 1, 3) * scale
    k = k.reshape(B, S, num_heads, hd).transpose(0, 2, 1, 3)
    v = v.reshape(B, S, num_heads, hd).transpose(0, 2, 1, 3)
    s = jnp.einsum("bhqd,bhkd->bhqk", q, k)
    p = jax.nn.softmax(s, axis=-1)
    ctx = jnp.einsum("bhqk,bhkd->bhqd", p, v).transpose(0, 2, 1, 3).reshape(B, S, E)
    attn_out = jnp.einsum("bse,fe->bsf", ctx, wo) + bo[0]
    x = x + attn_out
    xn2 = ln(x, ln2_g, ln2_b)
    h1 = jnp.maximum(jnp.einsum("bse,me->bsm", xn2, w1) + b1[0], 0.0)
    ffn = jnp.einsum("bsm,em->bse", h1, w2) + b2[0]
    return x + ffn


if __name__ == "__main__":
    # Small shapes consistent with the module (scaled down from 256/4/512).
    B, S, E, H, M = 2, 16, 32, 4, 64

    key = jax.random.PRNGKey(0)
    keys = jax.random.split(key, 8)

    x = jax.random.normal(keys[0], (B, S, E), dtype=jnp.float32)

    # Deterministic synthetic parameters (nn.LayerNorm / nn.MultiheadAttention / nn.Linear).
    ln1_g = jnp.ones((1, E), jnp.float32)
    ln1_b = jnp.zeros((1, E), jnp.float32)
    wqkv = 0.1 * jax.random.normal(keys[1], (3 * E, E), jnp.float32)   # in_proj_weight
    bqkv = 0.1 * jax.random.normal(keys[2], (1, 3 * E), jnp.float32)   # in_proj_bias
    wo = 0.1 * jax.random.normal(keys[3], (E, E), jnp.float32)         # out_proj.weight
    bo = 0.1 * jax.random.normal(keys[4], (1, E), jnp.float32)         # out_proj.bias
    w1 = 0.1 * jax.random.normal(keys[5], (M, E), jnp.float32)         # ffn[0].weight
    b1 = 0.1 * jax.random.normal(keys[6], (1, M), jnp.float32)         # ffn[0].bias
    w2 = 0.1 * jax.random.normal(keys[7], (E, M), jnp.float32)         # ffn[2].weight
    b2 = jnp.zeros((1, E), jnp.float32)                                # ffn[2].bias
    ln2_g = jnp.ones((1, E), jnp.float32)
    ln2_b = jnp.zeros((1, E), jnp.float32)

    params = (ln1_g, ln1_b, wqkv, bqkv, wo, bo, w1, b1, w2, b2, ln2_g, ln2_b)

    ref = reference_encoder_block(x, params, num_heads=H)

    # Default (production) path: bf16 matmuls, f32 stats, single KV chunk at this S.
    out_bf16 = jax.block_until_ready(encoder_block(x, params, num_heads=H))
    assert out_bf16.shape == (B, S, E)
    assert jnp.allclose(out_bf16, ref, atol=7e-2, rtol=7e-2), "bf16 kernel mismatch"

    # Full-f32 path with exact softmax normalization: tighter semantic check.
    out_f32 = jax.block_until_ready(
        encoder_block(x, params, num_heads=H, matmul_dtype=jnp.float32))
    assert jnp.allclose(out_f32, ref, atol=2e-2, rtol=2e-2), "f32 kernel mismatch"

    # Exercise the multi-chunk online-softmax path (kv_tile=8 -> 2 KV chunks).
    out_f32_tiled = jax.block_until_ready(
        encoder_block(x, params, num_heads=H, matmul_dtype=jnp.float32, kv_tile=8))
    assert jnp.allclose(out_f32_tiled, ref, atol=2e-2, rtol=2e-2), "online-softmax mismatch"

    out_bf16_tiled = jax.block_until_ready(
        encoder_block(x, params, num_heads=H, kv_tile=8))
    assert jnp.allclose(out_bf16_tiled, ref, atol=7e-2, rtol=7e-2), "bf16 online mismatch"

    print("KERNEL_OK")
</pallas_src>

<mosaic_0001>
module attributes {stable_mosaic.version = 11 : i64} {
  func.func @encoder_block_kernel(%arg0: i32, %arg1: i32, %arg2: memref<1x16x32xf32, #tpu.memory_space<vmem>>, %arg3: memref<1x32xf32, #tpu.memory_space<vmem>>, %arg4: memref<1x32xf32, #tpu.memory_space<vmem>>, %arg5: memref<32x32xbf16, #tpu.memory_space<vmem>>, %arg6: memref<1x32xf32, #tpu.memory_space<vmem>>, %arg7: memref<32x64xbf16, #tpu.memory_space<vmem>>, %arg8: memref<1x64xf32, #tpu.memory_space<vmem>>, %arg9: memref<32x32xbf16, #tpu.memory_space<vmem>>, %arg10: memref<1x32xf32, #tpu.memory_space<vmem>>, %arg11: memref<32x64xbf16, #tpu.memory_space<vmem>>, %arg12: memref<1x64xf32, #tpu.memory_space<vmem>>, %arg13: memref<64x32xbf16, #tpu.memory_space<vmem>>, %arg14: memref<1x32xf32, #tpu.memory_space<vmem>>, %arg15: memref<1x32xf32, #tpu.memory_space<vmem>>, %arg16: memref<1x32xf32, #tpu.memory_space<vmem>>, %arg17: memref<1x16x32xf32, #tpu.memory_space<vmem>>, %arg18: memref<4x16x8xbf16, #tpu.memory_space<vmem>>, %arg19: memref<4x16x8xbf16, #tpu.memory_space<vmem>>) attributes {dimension_semantics = [#tpu.dimension_semantics<parallel>, #tpu.dimension_semantics<arbitrary>], iteration_bounds = array<i64: 2, 1>, scalar_prefetch = 0 : i64, scratch_operands = 2 : i64, tpu.core_type = #tpu.core_type<tc>, window_params = [{transform_indices = @transform_0, window_bounds = array<i64: 1, 16, 32>}, {pipeline_mode = #tpu.pipeline_mode<synchronous>, transform_indices = @transform_1, window_bounds = array<i64: 1, 32>}, {pipeline_mode = #tpu.pipeline_mode<synchronous>, transform_indices = @transform_2, window_bounds = array<i64: 1, 32>}, {pipeline_mode = #tpu.pipeline_mode<synchronous>, transform_indices = @transform_3, window_bounds = array<i64: 32, 32>}, {pipeline_mode = #tpu.pipeline_mode<synchronous>, transform_indices = @transform_4, window_bounds = array<i64: 1, 32>}, {pipeline_mode = #tpu.pipeline_mode<synchronous>, transform_indices = @transform_5, window_bounds = array<i64: 32, 64>}, {pipeline_mode = #tpu.pipeline_mode<synchronous>, transform_indices = @transform_6, window_bounds = array<i64: 1, 64>}, {pipeline_mode = #tpu.pipeline_mode<synchronous>, transform_indices = @transform_7, window_bounds = array<i64: 32, 32>}, {pipeline_mode = #tpu.pipeline_mode<synchronous>, transform_indices = @transform_8, window_bounds = array<i64: 1, 32>}, {pipeline_mode = #tpu.pipeline_mode<synchronous>, transform_indices = @transform_9, window_bounds = array<i64: 32, 64>}, {pipeline_mode = #tpu.pipeline_mode<synchronous>, transform_indices = @transform_10, window_bounds = array<i64: 1, 64>}, {pipeline_mode = #tpu.pipeline_mode<synchronous>, transform_indices = @transform_11, window_bounds = array<i64: 64, 32>}, {pipeline_mode = #tpu.pipeline_mode<synchronous>, transform_indices = @transform_12, window_bounds = array<i64: 1, 32>}, {pipeline_mode = #tpu.pipeline_mode<synchronous>, transform_indices = @transform_13, window_bounds = array<i64: 1, 32>}, {pipeline_mode = #tpu.pipeline_mode<synchronous>, transform_indices = @transform_14, window_bounds = array<i64: 1, 32>}, {transform_indices = @transform_15, window_bounds = array<i64: 1, 16, 32>}]} {
    %c0_i32 = arith.constant 0 : i32
    %0 = arith.cmpi eq, %arg1, %c0_i32 : i32
    %1 = arith.extui %0 : i1 to i32
    %c0_i32_0 = arith.constant 0 : i32
    %2 = arith.cmpi ne, %1, %c0_i32_0 : i32
    scf.if %2 {
      %c0_56 = arith.constant 0 : index
      %c0_57 = arith.constant 0 : index
      %c0_58 = arith.constant 0 : index
      %114 = vector.load %arg2[%c0_56, %c0_57, %c0_58] : memref<1x16x32xf32, #tpu.memory_space<vmem>>, vector<1x16x32xf32>
      %115 = vector.shape_cast %114 : vector<1x16x32xf32> to vector<16x32xf32>
      %cst_59 = arith.constant dense<0.000000e+00> : vector<16xf32>
      %116 = vector.multi_reduction <add>, %115, %cst_59 [1] : vector<16x32xf32> to vector<16xf32>
      %117 = vector.shape_cast %116 : vector<16xf32> to vector<16x1xf32>
      %cst_60 = arith.constant 3.200000e+01 : f32
      %118 = vector.broadcast %cst_60 : f32 to vector<16x1xf32>
      %119 = arith.divf %117, %118 : vector<16x1xf32>
      %120 = vector.broadcast %119 : vector<16x1xf32> to vector<16x32xf32>
      %121 = arith.subf %115, %120 : vector<16x32xf32>
      %122 = arith.mulf %121, %121 : vector<16x32xf32>
      %cst_61 = arith.constant dense<0.000000e+00> : vector<16xf32>
      %123 = vector.multi_reduction <add>, %122, %cst_61 [1] : vector<16x32xf32> to vector<16xf32>
      %124 = vector.shape_cast %123 : vector<16xf32> to vector<16x1xf32>
      %cst_62 = arith.constant 3.200000e+01 : f32
      %125 = vector.broadcast %cst_62 : f32 to vector<16x1xf32>
      %126 = arith.divf %124, %125 : vector<16x1xf32>
      %cst_63 = arith.constant 9.99999974E-6 : f32
      %127 = vector.broadcast %cst_63 : f32 to vector<16x1xf32>
      %128 = arith.addf %126, %127 : vector<16x1xf32>
      %129 = math.rsqrt %128 : vector<16x1xf32>
      %130 = vector.broadcast %129 : vector<16x1xf32> to vector<16x32xf32>
      %131 = arith.mulf %121, %130 : vector<16x32xf32>
      %c0_64 = arith.constant 0 : index
      %c0_65 = arith.constant 0 : index
      %132 = vector.load %arg3[%c0_64, %c0_65] : memref<1x32xf32, #tpu.memory_space<vmem>>, vector<1x32xf32>
      %133 = vector.broadcast %132 : vector<1x32xf32> to vector<16x32xf32>
      %134 = arith.mulf %131, %133 : vector<16x32xf32>
      %c0_66 = arith.constant 0 : index
      %c0_67 = arith.constant 0 : index
      %135 = vector.load %arg4[%c0_66, %c0_67] : memref<1x32xf32, #tpu.memory_space<vmem>>, vector<1x32xf32>
      %136 = vector.broadcast %135 : vector<1x32xf32> to vector<16x32xf32>
      %137 = arith.addf %134, %136 : vector<16x32xf32>
      %138 = arith.truncf %137 : vector<16x32xf32> to vector<16x32xbf16>
      %c0_68 = arith.constant 0 : index
      %c0_69 = arith.constant 0 : index
      %139 = vector.load %arg7[%c0_68, %c0_69] : memref<32x64xbf16, #tpu.memory_space<vmem>>, vector<32x64xbf16>
      %cst_70 = arith.constant dense<0.000000e+00> : vector<16x64xf32>
      %140 = tpu.matmul %138, %139, %cst_70 {dimension_numbers = #tpu.dot_dimension_numbers<[1], [0], [0], [1], [0, 0, 1, 1], [], []>} : vector<16x32xbf16>, vector<32x64xbf16>, vector<16x64xf32> -> vector<16x64xf32>
      %c0_71 = arith.constant 0 : index
      %c0_72 = arith.constant 0 : index
      %141 = vector.load %arg8[%c0_71, %c0_72] : memref<1x64xf32, #tpu.memory_space<vmem>>, vector<1x64xf32>
      %142 = vector.broadcast %141 : vector<1x64xf32> to vector<16x64xf32>
      %143 = arith.addf %140, %142 : vector<16x64xf32>
      %144 = arith.truncf %143 : vector<16x64xf32> to vector<16x64xbf16>
      %145 = vector.extract_strided_slice %144 {offsets = [0, 0], sizes = [16, 32], strides = [1, 1]} : vector<16x64xbf16> to vector<16x32xbf16>
      %146 = vector.shape_cast %145 : vector<16x32xbf16> to vector<16x4x8xbf16>
      %147 = tpu.transpose %146, [1, 0, 2] : vector<16x4x8xbf16> -> vector<4x16x8xbf16>
      %c0_73 = arith.constant 0 : index
      %c0_74 = arith.constant 0 : index
      %c0_75 = arith.constant 0 : index
      %148 = vector.load %arg18[%c0_73, %c0_74, %c0_75] : memref<4x16x8xbf16, #tpu.memory_space<vmem>>, vector<4x16x8xbf16>
      tpu.vector_store %arg18[%c0_73, %c0_74, %c0_75], %147 {strides = array<i32>} : memref<4x16x8xbf16, #tpu.memory_space<vmem>>, vector<4x16x8xbf16>,
      %149 = vector.extract_strided_slice %144 {offsets = [0, 32], sizes = [16, 32], strides = [1, 1]} : vector<16x64xbf16> to vector<16x32xbf16>
      %150 = vector.shape_cast %149 : vector<16x32xbf16> to vector<16x4x8xbf16>
      %151 = tpu.transpose %150, [1, 0, 2] : vector<16x4x8xbf16> -> vector<4x16x8xbf16>
      %c0_76 = arith.constant 0 : index
      %c0_77 = arith.constant 0 : index
      %c0_78 = arith.constant 0 : index
      %152 = vector.load %arg19[%c0_76, %c0_77, %c0_78] : memref<4x16x8xbf16, #tpu.memory_space<vmem>>, vector<4x16x8xbf16>
      tpu.vector_store %arg19[%c0_76, %c0_77, %c0_78], %151 {strides = array<i32>} : memref<4x16x8xbf16, #tpu.memory_space<vmem>>, vector<4x16x8xbf16>,
    } else {
    }
    %c16_i32 = arith.constant 16 : i32
    %3 = arith.muli %arg1, %c16_i32 : i32
    %4 = tpu.assume_multiple %3, 16 : i32
    %c0 = arith.constant 0 : index
    %5 = arith.index_cast %4 : i32 to index
    %c0_1 = arith.constant 0 : index
    %6 = vector.load %arg2[%c0, %5, %c0_1] : memref<1x16x32xf32, #tpu.memory_space<vmem>>, vector<1x16x32xf32>
    %7 = vector.shape_cast %6 : vector<1x16x32xf32> to vector<16x32xf32>
    %cst = arith.constant dense<0.000000e+00> : vector<16xf32>
    %8 = vector.multi_reduction <add>, %7, %cst [1] : vector<16x32xf32> to vector<16xf32>
    %9 = vector.shape_cast %8 : vector<16xf32> to vector<16x1xf32>
    %cst_2 = arith.constant 3.200000e+01 : f32
    %10 = vector.broadcast %cst_2 : f32 to vector<16x1xf32>
    %11 = arith.divf %9, %10 : vector<16x1xf32>
    %12 = vector.broadcast %11 : vector<16x1xf32> to vector<16x32xf32>
    %13 = arith.subf %7, %12 : vector<16x32xf32>
    %14 = arith.mulf %13, %13 : vector<16x32xf32>
    %cst_3 = arith.constant dense<0.000000e+00> : vector<16xf32>
    %15 = vector.multi_reduction <add>, %14, %cst_3 [1] : vector<16x32xf32> to vector<16xf32>
    %16 = vector.shape_cast %15 : vector<16xf32> to vector<16x1xf32>
    %cst_4 = arith.constant 3.200000e+01 : f32
    %17 = vector.broadcast %cst_4 : f32 to vector<16x1xf32>
    %18 = arith.divf %16, %17 : vector<16x1xf32>
    %cst_5 = arith.constant 9.99999974E-6 : f32
    %19 = vector.broadcast %cst_5 : f32 to vector<16x1xf32>
    %20 = arith.addf %18, %19 : vector<16x1xf32>
    %21 = math.rsqrt %20 : vector<16x1xf32>
    %22 = vector.broadcast %21 : vector<16x1xf32> to vector<16x32xf32>
    %23 = arith.mulf %13, %22 : vector<16x32xf32>
    %c0_6 = arith.constant 0 : index
    %c0_7 = arith.constant 0 : index
    %24 = vector.load %arg3[%c0_6, %c0_7] : memref<1x32xf32, #tpu.memory_space<vmem>>, vector<1x32xf32>
    %25 = vector.broadcast %24 : vector<1x32xf32> to vector<16x32xf32>
    %26 = arith.mulf %23, %25 : vector<16x32xf32>
    %c0_8 = arith.constant 0 : index
    %c0_9 = arith.constant 0 : index
    %27 = vector.load %arg4[%c0_8, %c0_9] : memref<1x32xf32, #tpu.memory_space<vmem>>, vector<1x32xf32>
    %28 = vector.broadcast %27 : vector<1x32xf32> to vector<16x32xf32>
    %29 = arith.addf %26, %28 : vector<16x32xf32>
    %30 = arith.truncf %29 : vector<16x32xf32> to vector<16x32xbf16>
    %c0_10 = arith.constant 0 : index
    %c0_11 = arith.constant 0 : index
    %31 = vector.load %arg5[%c0_10, %c0_11] : memref<32x32xbf16, #tpu.memory_space<vmem>>, vector<32x32xbf16>
    %cst_12 = arith.constant dense<0.000000e+00> : vector<16x32xf32>
    %32 = tpu.matmul %30, %31, %cst_12 {dimension_numbers = #tpu.dot_dimension_numbers<[1], [0], [0], [1], [0, 0, 1, 1], [], []>} : vector<16x32xbf16>, vector<32x32xbf16>, vector<16x32xf32> -> vector<16x32xf32>
    %c0_13 = arith.constant 0 : index
    %c0_14 = arith.constant 0 : index
    %33 = vector.load %arg6[%c0_13, %c0_14] : memref<1x32xf32, #tpu.memory_space<vmem>>, vector<1x32xf32>
    %34 = vector.broadcast %33 : vector<1x32xf32> to vector<16x32xf32>
    %35 = arith.addf %32, %34 : vector<16x32xf32>
    %36 = vector.shape_cast %35 : vector<16x32xf32> to vector<16x4x8xf32>
    %37 = tpu.transpose %36, [1, 0, 2] : vector<16x4x8xf32> -> vector<4x16x8xf32>
    %38 = arith.truncf %37 : vector<4x16x8xf32> to vector<4x16x8xbf16>
    %cst_15 = arith.constant 0xFF800000 : f32
    %39 = vector.broadcast %cst_15 : f32 to vector<4x16x1xf32>
    %cst_16 = arith.constant 0.000000e+00 : f32
    %40 = vector.broadcast %cst_16 : f32 to vector<4x16x1xf32>
    %cst_17 = arith.constant 0.000000e+00 : f32
    %41 = vector.broadcast %cst_17 : f32 to vector<4x16x8xf32>
    %c0_18 = arith.constant 0 : index
    %c0_19 = arith.constant 0 : index
    %c0_20 = arith.constant 0 : index
    %42 = vector.load %arg18[%c0_18, %c0_19, %c0_20] : memref<4x16x8xbf16, #tpu.memory_space<vmem>>, vector<4x16x8xbf16>
    %c0_21 = arith.constant 0 : index
    %c0_22 = arith.constant 0 : index
    %c0_23 = arith.constant 0 : index
    %43 = vector.load %arg19[%c0_21, %c0_22, %c0_23] : memref<4x16x8xbf16, #tpu.memory_space<vmem>>, vector<4x16x8xbf16>
    "tpu.trace_start"() <{level = 10 : i32, message = "hqd,hkd->hqk"}> : () -> ()
    %cst_24 = arith.constant dense<0.000000e+00> : vector<4x16x16xf32>
    %44 = tpu.matmul %38, %42, %cst_24 {dimension_numbers = #tpu.dot_dimension_numbers<[2], [2], [1], [1], [0, 0, 0, 1, 1, 1], [0], [0]>} : vector<4x16x8xbf16>, vector<4x16x8xbf16>, vector<4x16x16xf32> -> vector<4x16x16xf32>
    "tpu.trace_stop"() : () -> ()
    %cst_25 = arith.constant dense<0xFF800000> : vector<4x16xf32>
    %45 = vector.multi_reduction <maximumf>, %44, %cst_25 [2] : vector<4x16x16xf32> to vector<4x16xf32>
    %46 = vector.shape_cast %45 : vector<4x16xf32> to vector<4x16x1xf32>
    %47 = arith.maximumf %39, %46 : vector<4x16x1xf32>
    %48 = arith.subf %39, %47 : vector<4x16x1xf32>
    %49 = math.exp %48 : vector<4x16x1xf32>
    %50 = vector.broadcast %47 : vector<4x16x1xf32> to vector<4x16x16xf32>
    %51 = arith.subf %44, %50 : vector<4x16x16xf32>
    %52 = math.exp %51 : vector<4x16x16xf32>
    %53 = arith.mulf %49, %40 : vector<4x16x1xf32>
    %cst_26 = arith.constant dense<0.000000e+00> : vector<4x16xf32>
    %54 = vector.multi_reduction <add>, %52, %cst_26 [2] : vector<4x16x16xf32> to vector<4x16xf32>
    %55 = vector.shape_cast %54 : vector<4x16xf32> to vector<4x16x1xf32>
    %56 = arith.addf %53, %55 : vector<4x16x1xf32>
    %57 = vector.broadcast %49 : vector<4x16x1xf32> to vector<4x16x8xf32>
    %58 = arith.mulf %57, %41 : vector<4x16x8xf32>
    %59 = arith.truncf %52 : vector<4x16x16xf32> to vector<4x16x16xbf16>
    "tpu.trace_start"() <{level = 10 : i32, message = "hqk,hkd->hqd"}> : () -> ()
    %cst_27 = arith.constant dense<0.000000e+00> : vector<4x16x8xf32>
    %60 = tpu.matmul %59, %43, %cst_27 {dimension_numbers = #tpu.dot_dimension_numbers<[2], [1], [1], [2], [0, 0, 0, 1, 1, 2], [0], [0]>} : vector<4x16x16xbf16>, vector<4x16x8xbf16>, vector<4x16x8xf32> -> vector<4x16x8xf32>
    "tpu.trace_stop"() : () -> ()
    %61 = arith.addf %58, %60 : vector<4x16x8xf32>
    %62 = tpu.reciprocal %56 {approx = true} : vector<4x16x1xf32> -> vector<4x16x1xf32>
    %63 = vector.broadcast %62 : vector<4x16x1xf32> to vector<4x16x8xf32>
    %64 = arith.mulf %61, %63 : vector<4x16x8xf32>
    %65 = tpu.transpose %64, [1, 0, 2] : vector<4x16x8xf32> -> vector<16x4x8xf32>
    %66 = vector.shape_cast %65 : vector<16x4x8xf32> to vector<16x32xf32>
    %67 = arith.truncf %66 : vector<16x32xf32> to vector<16x32xbf16>
    %c0_28 = arith.constant 0 : index
    %c0_29 = arith.constant 0 : index
    %68 = vector.load %arg9[%c0_28, %c0_29] : memref<32x32xbf16, #tpu.memory_space<vmem>>, vector<32x32xbf16>
    %cst_30 = arith.constant dense<0.000000e+00> : vector<16x32xf32>
    %69 = tpu.matmul %67, %68, %cst_30 {dimension_numbers = #tpu.dot_dimension_numbers<[1], [0], [0], [1], [0, 0, 1, 1], [], []>} : vector<16x32xbf16>, vector<32x32xbf16>, vector<16x32xf32> -> vector<16x32xf32>
    %c0_31 = arith.constant 0 : index
    %c0_32 = arith.constant 0 : index
    %70 = vector.load %arg10[%c0_31, %c0_32] : memref<1x32xf32, #tpu.memory_space<vmem>>, vector<1x32xf32>
    %71 = vector.broadcast %70 : vector<1x32xf32> to vector<16x32xf32>
    %72 = arith.addf %69, %71 : vector<16x32xf32>
    %73 = arith.addf %7, %72 : vector<16x32xf32>
    %cst_33 = arith.constant dense<0.000000e+00> : vector<16xf32>
    %74 = vector.multi_reduction <add>, %73, %cst_33 [1] : vector<16x32xf32> to vector<16xf32>
    %75 = vector.shape_cast %74 : vector<16xf32> to vector<16x1xf32>
    %cst_34 = arith.constant 3.200000e+01 : f32
    %76 = vector.broadcast %cst_34 : f32 to vector<16x1xf32>
    %77 = arith.divf %75, %76 : vector<16x1xf32>
    %78 = vector.broadcast %77 : vector<16x1xf32> to vector<16x32xf32>
    %79 = arith.subf %73, %78 : vector<16x32xf32>
    %80 = arith.mulf %79, %79 : vector<16x32xf32>
    %cst_35 = arith.constant dense<0.000000e+00> : vector<16xf32>
    %81 = vector.multi_reduction <add>, %80, %cst_35 [1] : vector<16x32xf32> to vector<16xf32>
    %82 = vector.shape_cast %81 : vector<16xf32> to vector<16x1xf32>
    %cst_36 = arith.constant 3.200000e+01 : f32
    %83 = vector.broadcast %cst_36 : f32 to vector<16x1xf32>
    %84 = arith.divf %82, %83 : vector<16x1xf32>
    %cst_37 = arith.constant 9.99999974E-6 : f32
    %85 = vector.broadcast %cst_37 : f32 to vector<16x1xf32>
    %86 = arith.addf %84, %85 : vector<16x1xf32>
    %87 = math.rsqrt %86 : vector<16x1xf32>
    %88 = vector.broadcast %87 : vector<16x1xf32> to vector<16x32xf32>
    %89 = arith.mulf %79, %88 : vector<16x32xf32>
    %c0_38 = arith.constant 0 : index
    %c0_39 = arith.constant 0 : index
    %90 = vector.load %arg15[%c0_38, %c0_39] : memref<1x32xf32, #tpu.memory_space<vmem>>, vector<1x32xf32>
    %91 = vector.broadcast %90 : vector<1x32xf32> to vector<16x32xf32>
    %92 = arith.mulf %89, %91 : vector<16x32xf32>
    %c0_40 = arith.constant 0 : index
    %c0_41 = arith.constant 0 : index
    %93 = vector.load %arg16[%c0_40, %c0_41] : memref<1x32xf32, #tpu.memory_space<vmem>>, vector<1x32xf32>
    %94 = vector.broadcast %93 : vector<1x32xf32> to vector<16x32xf32>
    %95 = arith.addf %92, %94 : vector<16x32xf32>
    %96 = arith.truncf %95 : vector<16x32xf32> to vector<16x32xbf16>
    %c0_42 = arith.constant 0 : index
    %c0_43 = arith.constant 0 : index
    %97 = vector.load %arg11[%c0_42, %c0_43] : memref<32x64xbf16, #tpu.memory_space<vmem>>, vector<32x64xbf16>
    %cst_44 = arith.constant dense<0.000000e+00> : vector<16x64xf32>
    %98 = tpu.matmul %96, %97, %cst_44 {dimension_numbers = #tpu.dot_dimension_numbers<[1], [0], [0], [1], [0, 0, 1, 1], [], []>} : vector<16x32xbf16>, vector<32x64xbf16>, vector<16x64xf32> -> vector<16x64xf32>
    %c0_45 = arith.constant 0 : index
    %c0_46 = arith.constant 0 : index
    %99 = vector.load %arg12[%c0_45, %c0_46] : memref<1x64xf32, #tpu.memory_space<vmem>>, vector<1x64xf32>
    %100 = vector.broadcast %99 : vector<1x64xf32> to vector<16x64xf32>
    %101 = arith.addf %98, %100 : vector<16x64xf32>
    %cst_47 = arith.constant 0.000000e+00 : f32
    %102 = vector.broadcast %cst_47 : f32 to vector<16x64xf32>
    %103 = arith.maximumf %101, %102 : vector<16x64xf32>
    %104 = arith.truncf %103 : vector<16x64xf32> to vector<16x64xbf16>
    %c0_48 = arith.constant 0 : index
    %c0_49 = arith.constant 0 : index
    %105 = vector.load %arg13[%c0_48, %c0_49] : memref<64x32xbf16, #tpu.memory_space<vmem>>, vector<64x32xbf16>
    %cst_50 = arith.constant dense<0.000000e+00> : vector<16x32xf32>
    %106 = tpu.matmul %104, %105, %cst_50 {dimension_numbers = #tpu.dot_dimension_numbers<[1], [0], [0], [1], [0, 0, 1, 1], [], []>} : vector<16x64xbf16>, vector<64x32xbf16>, vector<16x32xf32> -> vector<16x32xf32>
    %c0_51 = arith.constant 0 : index
    %c0_52 = arith.constant 0 : index
    %107 = vector.load %arg14[%c0_51, %c0_52] : memref<1x32xf32, #tpu.memory_space<vmem>>, vector<1x32xf32>
    %108 = vector.broadcast %107 : vector<1x32xf32> to vector<16x32xf32>
    %109 = arith.addf %106, %108 : vector<16x32xf32>
    %110 = arith.addf %73, %109 : vector<16x32xf32>
    %c0_53 = arith.constant 0 : index
    %c0_54 = arith.constant 0 : index
    %c0_55 = arith.constant 0 : index
    %111 = vector.load %arg17[%c0_53, %c0_54, %c0_55] : memref<1x16x32xf32, #tpu.memory_space<vmem>>, vector<1x16x32xf32>
    %112 = vector.shape_cast %111 : vector<1x16x32xf32> to vector<16x32xf32>
    %113 = vector.shape_cast %110 : vector<16x32xf32> to vector<1x16x32xf32>
    tpu.vector_store %arg17[%c0_53, %c0_54, %c0_55], %113 {strides = array<i32>} : memref<1x16x32xf32, #tpu.memory_space<vmem>>, vector<1x16x32xf32>,
    return
  }
  func.func @transform_0(%arg0: i32, %arg1: i32) -> (i32, i32, i32) {
    %c0_i32 = arith.constant 0 : i32
    %c0_i32_0 = arith.constant 0 : i32
    %c0_i32_1 = arith.constant 0 : i32
    return %arg0, %c0_i32, %c0_i32_0 : i32, i32, i32
  }
  func.func @transform_1(%arg0: i32, %arg1: i32) -> (i32, i32) {
    %c0_i32 = arith.constant 0 : i32
    %c0_i32_0 = arith.constant 0 : i32
    %c0_i32_1 = arith.constant 0 : i32
    return %c0_i32, %c0_i32_0 : i32, i32
  }
  func.func @transform_2(%arg0: i32, %arg1: i32) -> (i32, i32) {
    %c0_i32 = arith.constant 0 : i32
    %c0_i32_0 = arith.constant 0 : i32
    %c0_i32_1 = arith.constant 0 : i32
    return %c0_i32, %c0_i32_0 : i32, i32
  }
  func.func @transform_3(%arg0: i32, %arg1: i32) -> (i32, i32) {
    %c0_i32 = arith.constant 0 : i32
    %c0_i32_0 = arith.constant 0 : i32
    %c0_i32_1 = arith.constant 0 : i32
    return %c0_i32, %c0_i32_0 : i32, i32
  }
  func.func @transform_4(%arg0: i32, %arg1: i32) -> (i32, i32) {
    %c0_i32 = arith.constant 0 : i32
    %c0_i32_0 = arith.constant 0 : i32
    %c0_i32_1 = arith.constant 0 : i32
    return %c0_i32, %c0_i32_0 : i32, i32
  }
  func.func @transform_5(%arg0: i32, %arg1: i32) -> (i32, i32) {
    %c0_i32 = arith.constant 0 : i32
    %c0_i32_0 = arith.constant 0 : i32
    %c0_i32_1 = arith.constant 0 : i32
    return %c0_i32, %c0_i32_0 : i32, i32
  }
  func.func @transform_6(%arg0: i32, %arg1: i32) -> (i32, i32) {
    %c0_i32 = arith.constant 0 : i32
    %c0_i32_0 = arith.constant 0 : i32
    %c0_i32_1 = arith.constant 0 : i32
    return %c0_i32, %c0_i32_0 : i32, i32
  }
  func.func @transform_7(%arg0: i32, %arg1: i32) -> (i32, i32) {
    %c0_i32 = arith.constant 0 : i32
    %c0_i32_0 = arith.constant 0 : i32
    %c0_i32_1 = arith.constant 0 : i32
    return %c0_i32, %c0_i32_0 : i32, i32
  }
  func.func @transform_8(%arg0: i32, %arg1: i32) -> (i32, i32) {
    %c0_i32 = arith.constant 0 : i32
    %c0_i32_0 = arith.constant 0 : i32
    %c0_i32_1 = arith.constant 0 : i32
    return %c0_i32, %c0_i32_0 : i32, i32
  }
  func.func @transform_9(%arg0: i32, %arg1: i32) -> (i32, i32) {
    %c0_i32 = arith.constant 0 : i32
    %c0_i32_0 = arith.constant 0 : i32
    %c0_i32_1 = arith.constant 0 : i32
    return %c0_i32, %c0_i32_0 : i32, i32
  }
  func.func @transform_10(%arg0: i32, %arg1: i32) -> (i32, i32) {
    %c0_i32 = arith.constant 0 : i32
    %c0_i32_0 = arith.constant 0 : i32
    %c0_i32_1 = arith.constant 0 : i32
    return %c0_i32, %c0_i32_0 : i32, i32
  }
  func.func @transform_11(%arg0: i32, %arg1: i32) -> (i32, i32) {
    %c0_i32 = arith.constant 0 : i32
    %c0_i32_0 = arith.constant 0 : i32
    %c0_i32_1 = arith.constant 0 : i32
    return %c0_i32, %c0_i32_0 : i32, i32
  }
  func.func @transform_12(%arg0: i32, %arg1: i32) -> (i32, i32) {
    %c0_i32 = arith.constant 0 : i32
    %c0_i32_0 = arith.constant 0 : i32
    %c0_i32_1 = arith.constant 0 : i32
    return %c0_i32, %c0_i32_0 : i32, i32
  }
  func.func @transform_13(%arg0: i32, %arg1: i32) -> (i32, i32) {
    %c0_i32 = arith.constant 0 : i32
    %c0_i32_0 = arith.constant 0 : i32
    %c0_i32_1 = arith.constant 0 : i32
    return %c0_i32, %c0_i32_0 : i32, i32
  }
  func.func @transform_14(%arg0: i32, %arg1: i32) -> (i32, i32) {
    %c0_i32 = arith.constant 0 : i32
    %c0_i32_0 = arith.constant 0 : i32
    %c0_i32_1 = arith.constant 0 : i32
    return %c0_i32, %c0_i32_0 : i32, i32
  }
  func.func @transform_15(%arg0: i32, %arg1: i32) -> (i32, i32, i32) {
    %c0_i32 = arith.constant 0 : i32
    %c0_i32_0 = arith.constant 0 : i32
    return %arg0, %arg1, %c0_i32 : i32, i32, i32
  }
}

module attributes {stable_mosaic.version = 11 : i64} {
  func.func @encoder_block_kernel(%arg0: i32, %arg1: i32, %arg2: memref<1x16x32xf32, #tpu.memory_space<vmem>>, %arg3: memref<1x32xf32, #tpu.memory_space<vmem>>, %arg4: memref<1x32xf32, #tpu.memory_space<vmem>>, %arg5: memref<32x32xbf16, #tpu.memory_space<vmem>>, %arg6: memref<1x32xf32, #tpu.memory_space<vmem>>, %arg7: memref<32x64xbf16, #tpu.memory_space<vmem>>, %arg8: memref<1x64xf32, #tpu.memory_space<vmem>>, %arg9: memref<32x32xbf16, #tpu.memory_space<vmem>>, %arg10: memref<1x32xf32, #tpu.memory_space<vmem>>, %arg11: memref<32x64xbf16, #tpu.memory_space<vmem>>, %arg12: memref<1x64xf32, #tpu.memory_space<vmem>>, %arg13: memref<64x32xbf16, #tpu.memory_space<vmem>>, %arg14: memref<1x32xf32, #tpu.memory_space<vmem>>, %arg15: memref<1x32xf32, #tpu.memory_space<vmem>>, %arg16: memref<1x32xf32, #tpu.memory_space<vmem>>, %arg17: memref<1x16x32xf32, #tpu.memory_space<vmem>>, %arg18: memref<4x16x8xbf16, #tpu.memory_space<vmem>>, %arg19: memref<4x16x8xbf16, #tpu.memory_space<vmem>>) attributes {dimension_semantics = [#tpu.dimension_semantics<parallel>, #tpu.dimension_semantics<arbitrary>], iteration_bounds = array<i64: 2, 1>, scalar_prefetch = 0 : i64, scratch_operands = 2 : i64, tpu.core_type = #tpu.core_type<tc>, window_params = [{transform_indices = @transform_0, window_bounds = array<i64: 1, 16, 32>}, {pipeline_mode = #tpu.pipeline_mode<synchronous>, transform_indices = @transform_1, window_bounds = array<i64: 1, 32>}, {pipeline_mode = #tpu.pipeline_mode<synchronous>, transform_indices = @transform_2, window_bounds = array<i64: 1, 32>}, {pipeline_mode = #tpu.pipeline_mode<synchronous>, transform_indices = @transform_3, window_bounds = array<i64: 32, 32>}, {pipeline_mode = #tpu.pipeline_mode<synchronous>, transform_indices = @transform_4, window_bounds = array<i64: 1, 32>}, {pipeline_mode = #tpu.pipeline_mode<synchronous>, transform_indices = @transform_5, window_bounds = array<i64: 32, 64>}, {pipeline_mode = #tpu.pipeline_mode<synchronous>, transform_indices = @transform_6, window_bounds = array<i64: 1, 64>}, {pipeline_mode = #tpu.pipeline_mode<synchronous>, transform_indices = @transform_7, window_bounds = array<i64: 32, 32>}, {pipeline_mode = #tpu.pipeline_mode<synchronous>, transform_indices = @transform_8, window_bounds = array<i64: 1, 32>}, {pipeline_mode = #tpu.pipeline_mode<synchronous>, transform_indices = @transform_9, window_bounds = array<i64: 32, 64>}, {pipeline_mode = #tpu.pipeline_mode<synchronous>, transform_indices = @transform_10, window_bounds = array<i64: 1, 64>}, {pipeline_mode = #tpu.pipeline_mode<synchronous>, transform_indices = @transform_11, window_bounds = array<i64: 64, 32>}, {pipeline_mode = #tpu.pipeline_mode<synchronous>, transform_indices = @transform_12, window_bounds = array<i64: 1, 32>}, {pipeline_mode = #tpu.pipeline_mode<synchronous>, transform_indices = @transform_13, window_bounds = array<i64: 1, 32>}, {pipeline_mode = #tpu.pipeline_mode<synchronous>, transform_indices = @transform_14, window_bounds = array<i64: 1, 32>}, {transform_indices = @transform_15, window_bounds = array<i64: 1, 16, 32>}]} {
    %c0_i32 = arith.constant 0 : i32
    %0 = arith.cmpi eq, %arg1, %c0_i32 : i32
    %1 = arith.extui %0 : i1 to i32
    %c0_i32_0 = arith.constant 0 : i32
    %2 = arith.cmpi ne, %1, %c0_i32_0 : i32
    scf.if %2 {
      %c0_56 = arith.constant 0 : index
      %c0_57 = arith.constant 0 : index
      %c0_58 = arith.constant 0 : index
      %114 = vector.load %arg2[%c0_56, %c0_57, %c0_58] : memref<1x16x32xf32, #tpu.memory_space<vmem>>, vector<1x16x32xf32>
      %115 = vector.shape_cast %114 : vector<1x16x32xf32> to vector<16x32xf32>
      %cst_59 = arith.constant dense<0.000000e+00> : vector<16xf32>
      %116 = vector.multi_reduction <add>, %115, %cst_59 [1] : vector<16x32xf32> to vector<16xf32>
      %117 = vector.shape_cast %116 : vector<16xf32> to vector<16x1xf32>
      %cst_60 = arith.constant 3.200000e+01 : f32
      %118 = vector.broadcast %cst_60 : f32 to vector<16x1xf32>
      %119 = arith.divf %117, %118 : vector<16x1xf32>
      %120 = vector.broadcast %119 : vector<16x1xf32> to vector<16x32xf32>
      %121 = arith.subf %115, %120 : vector<16x32xf32>
      %122 = arith.mulf %121, %121 : vector<16x32xf32>
      %cst_61 = arith.constant dense<0.000000e+00> : vector<16xf32>
      %123 = vector.multi_reduction <add>, %122, %cst_61 [1] : vector<16x32xf32> to vector<16xf32>
      %124 = vector.shape_cast %123 : vector<16xf32> to vector<16x1xf32>
      %cst_62 = arith.constant 3.200000e+01 : f32
      %125 = vector.broadcast %cst_62 : f32 to vector<16x1xf32>
      %126 = arith.divf %124, %125 : vector<16x1xf32>
      %cst_63 = arith.constant 9.99999974E-6 : f32
      %127 = vector.broadcast %cst_63 : f32 to vector<16x1xf32>
      %128 = arith.addf %126, %127 : vector<16x1xf32>
      %129 = math.rsqrt %128 : vector<16x1xf32>
      %130 = vector.broadcast %129 : vector<16x1xf32> to vector<16x32xf32>
      %131 = arith.mulf %121, %130 : vector<16x32xf32>
      %c0_64 = arith.constant 0 : index
      %c0_65 = arith.constant 0 : index
      %132 = vector.load %arg3[%c0_64, %c0_65] : memref<1x32xf32, #tpu.memory_space<vmem>>, vector<1x32xf32>
      %133 = vector.broadcast %132 : vector<1x32xf32> to vector<16x32xf32>
      %134 = arith.mulf %131, %133 : vector<16x32xf32>
      %c0_66 = arith.constant 0 : index
      %c0_67 = arith.constant 0 : index
      %135 = vector.load %arg4[%c0_66, %c0_67] : memref<1x32xf32, #tpu.memory_space<vmem>>, vector<1x32xf32>
      %136 = vector.broadcast %135 : vector<1x32xf32> to vector<16x32xf32>
      %137 = arith.addf %134, %136 : vector<16x32xf32>
      %138 = arith.truncf %137 : vector<16x32xf32> to vector<16x32xbf16>
      %c0_68 = arith.constant 0 : index
      %c0_69 = arith.constant 0 : index
      %139 = vector.load %arg7[%c0_68, %c0_69] : memref<32x64xbf16, #tpu.memory_space<vmem>>, vector<32x64xbf16>
      %cst_70 = arith.constant dense<0.000000e+00> : vector<16x64xf32>
      %140 = tpu.matmul %138, %139, %cst_70 {dimension_numbers = #tpu.dot_dimension_numbers<[1], [0], [0], [1], [0, 0, 1, 1], [], []>} : vector<16x32xbf16>, vector<32x64xbf16>, vector<16x64xf32> -> vector<16x64xf32>
      %c0_71 = arith.constant 0 : index
      %c0_72 = arith.constant 0 : index
      %141 = vector.load %arg8[%c0_71, %c0_72] : memref<1x64xf32, #tpu.memory_space<vmem>>, vector<1x64xf32>
      %142 = vector.broadcast %141 : vector<1x64xf32> to vector<16x64xf32>
      %143 = arith.addf %140, %142 : vector<16x64xf32>
      %144 = arith.truncf %143 : vector<16x64xf32> to vector<16x64xbf16>
      %145 = vector.extract_strided_slice %144 {offsets = [0, 0], sizes = [16, 32], strides = [1, 1]} : vector<16x64xbf16> to vector<16x32xbf16>
      %146 = vector.shape_cast %145 : vector<16x32xbf16> to vector<16x4x8xbf16>
      %147 = tpu.transpose %146, [1, 0, 2] : vector<16x4x8xbf16> -> vector<4x16x8xbf16>
      %c0_73 = arith.constant 0 : index
      %c0_74 = arith.constant 0 : index
      %c0_75 = arith.constant 0 : index
      %148 = vector.load %arg18[%c0_73, %c0_74, %c0_75] : memref<4x16x8xbf16, #tpu.memory_space<vmem>>, vector<4x16x8xbf16>
      tpu.vector_store %arg18[%c0_73, %c0_74, %c0_75], %147 {strides = array<i32>} : memref<4x16x8xbf16, #tpu.memory_space<vmem>>, vector<4x16x8xbf16>,
      %149 = vector.extract_strided_slice %144 {offsets = [0, 32], sizes = [16, 32], strides = [1, 1]} : vector<16x64xbf16> to vector<16x32xbf16>
      %150 = vector.shape_cast %149 : vector<16x32xbf16> to vector<16x4x8xbf16>
      %151 = tpu.transpose %150, [1, 0, 2] : vector<16x4x8xbf16> -> vector<4x16x8xbf16>
      %c0_76 = arith.constant 0 : index
      %c0_77 = arith.constant 0 : index
      %c0_78 = arith.constant 0 : index
      %152 = vector.load %arg19[%c0_76, %c0_77, %c0_78] : memref<4x16x8xbf16, #tpu.memory_space<vmem>>, vector<4x16x8xbf16>
      tpu.vector_store %arg19[%c0_76, %c0_77, %c0_78], %151 {strides = array<i32>} : memref<4x16x8xbf16, #tpu.memory_space<vmem>>, vector<4x16x8xbf16>,
    } else {
    }
    %c16_i32 = arith.constant 16 : i32
    %3 = arith.muli %arg1, %c16_i32 : i32
    %4 = tpu.assume_multiple %3, 16 : i32
    %c0 = arith.constant 0 : index
    %5 = arith.index_cast %4 : i32 to index
    %c0_1 = arith.constant 0 : index
    %6 = vector.load %arg2[%c0, %5, %c0_1] : memref<1x16x32xf32, #tpu.memory_space<vmem>>, vector<1x16x32xf32>
    %7 = vector.shape_cast %6 : vector<1x16x32xf32> to vector<16x32xf32>
    %cst = arith.constant dense<0.000000e+00> : vector<16xf32>
    %8 = vector.multi_reduction <add>, %7, %cst [1] : vector<16x32xf32> to vector<16xf32>
    %9 = vector.shape_cast %8 : vector<16xf32> to vector<16x1xf32>
    %cst_2 = arith.constant 3.200000e+01 : f32
    %10 = vector.broadcast %cst_2 : f32 to vector<16x1xf32>
    %11 = arith.divf %9, %10 : vector<16x1xf32>
    %12 = vector.broadcast %11 : vector<16x1xf32> to vector<16x32xf32>
    %13 = arith.subf %7, %12 : vector<16x32xf32>
    %14 = arith.mulf %13, %13 : vector<16x32xf32>
    %cst_3 = arith.constant dense<0.000000e+00> : vector<16xf32>
    %15 = vector.multi_reduction <add>, %14, %cst_3 [1] : vector<16x32xf32> to vector<16xf32>
    %16 = vector.shape_cast %15 : vector<16xf32> to vector<16x1xf32>
    %cst_4 = arith.constant 3.200000e+01 : f32
    %17 = vector.broadcast %cst_4 : f32 to vector<16x1xf32>
    %18 = arith.divf %16, %17 : vector<16x1xf32>
    %cst_5 = arith.constant 9.99999974E-6 : f32
    %19 = vector.broadcast %cst_5 : f32 to vector<16x1xf32>
    %20 = arith.addf %18, %19 : vector<16x1xf32>
    %21 = math.rsqrt %20 : vector<16x1xf32>
    %22 = vector.broadcast %21 : vector<16x1xf32> to vector<16x32xf32>
    %23 = arith.mulf %13, %22 : vector<16x32xf32>
    %c0_6 = arith.constant 0 : index
    %c0_7 = arith.constant 0 : index
    %24 = vector.load %arg3[%c0_6, %c0_7] : memref<1x32xf32, #tpu.memory_space<vmem>>, vector<1x32xf32>
    %25 = vector.broadcast %24 : vector<1x32xf32> to vector<16x32xf32>
    %26 = arith.mulf %23, %25 : vector<16x32xf32>
    %c0_8 = arith.constant 0 : index
    %c0_9 = arith.constant 0 : index
    %27 = vector.load %arg4[%c0_8, %c0_9] : memref<1x32xf32, #tpu.memory_space<vmem>>, vector<1x32xf32>
    %28 = vector.broadcast %27 : vector<1x32xf32> to vector<16x32xf32>
    %29 = arith.addf %26, %28 : vector<16x32xf32>
    %30 = arith.truncf %29 : vector<16x32xf32> to vector<16x32xbf16>
    %c0_10 = arith.constant 0 : index
    %c0_11 = arith.constant 0 : index
    %31 = vector.load %arg5[%c0_10, %c0_11] : memref<32x32xbf16, #tpu.memory_space<vmem>>, vector<32x32xbf16>
    %cst_12 = arith.constant dense<0.000000e+00> : vector<16x32xf32>
    %32 = tpu.matmul %30, %31, %cst_12 {dimension_numbers = #tpu.dot_dimension_numbers<[1], [0], [0], [1], [0, 0, 1, 1], [], []>} : vector<16x32xbf16>, vector<32x32xbf16>, vector<16x32xf32> -> vector<16x32xf32>
    %c0_13 = arith.constant 0 : index
    %c0_14 = arith.constant 0 : index
    %33 = vector.load %arg6[%c0_13, %c0_14] : memref<1x32xf32, #tpu.memory_space<vmem>>, vector<1x32xf32>
    %34 = vector.broadcast %33 : vector<1x32xf32> to vector<16x32xf32>
    %35 = arith.addf %32, %34 : vector<16x32xf32>
    %36 = vector.shape_cast %35 : vector<16x32xf32> to vector<16x4x8xf32>
    %37 = tpu.transpose %36, [1, 0, 2] : vector<16x4x8xf32> -> vector<4x16x8xf32>
    %38 = arith.truncf %37 : vector<4x16x8xf32> to vector<4x16x8xbf16>
    %cst_15 = arith.constant 0xFF800000 : f32
    %39 = vector.broadcast %cst_15 : f32 to vector<4x16x1xf32>
    %cst_16 = arith.constant 0.000000e+00 : f32
    %40 = vector.broadcast %cst_16 : f32 to vector<4x16x1xf32>
    %cst_17 = arith.constant 0.000000e+00 : f32
    %41 = vector.broadcast %cst_17 : f32 to vector<4x16x8xf32>
    %c0_18 = arith.constant 0 : index
    %c0_19 = arith.constant 0 : index
    %c0_20 = arith.constant 0 : index
    %42 = vector.load %arg18[%c0_18, %c0_19, %c0_20] : memref<4x16x8xbf16, #tpu.memory_space<vmem>>, vector<4x16x8xbf16>
    %c0_21 = arith.constant 0 : index
    %c0_22 = arith.constant 0 : index
    %c0_23 = arith.constant 0 : index
    %43 = vector.load %arg19[%c0_21, %c0_22, %c0_23] : memref<4x16x8xbf16, #tpu.memory_space<vmem>>, vector<4x16x8xbf16>
    "tpu.trace_start"() <{level = 10 : i32, message = "hqd,hkd->hqk"}> : () -> ()
    %cst_24 = arith.constant dense<0.000000e+00> : vector<4x16x16xf32>
    %44 = tpu.matmul %38, %42, %cst_24 {dimension_numbers = #tpu.dot_dimension_numbers<[2], [2], [1], [1], [0, 0, 0, 1, 1, 1], [0], [0]>} : vector<4x16x8xbf16>, vector<4x16x8xbf16>, vector<4x16x16xf32> -> vector<4x16x16xf32>
    "tpu.trace_stop"() : () -> ()
    %cst_25 = arith.constant dense<0xFF800000> : vector<4x16xf32>
    %45 = vector.multi_reduction <maximumf>, %44, %cst_25 [2] : vector<4x16x16xf32> to vector<4x16xf32>
    %46 = vector.shape_cast %45 : vector<4x16xf32> to vector<4x16x1xf32>
    %47 = arith.maximumf %39, %46 : vector<4x16x1xf32>
    %48 = arith.subf %39, %47 : vector<4x16x1xf32>
    %49 = math.exp %48 : vector<4x16x1xf32>
    %50 = vector.broadcast %47 : vector<4x16x1xf32> to vector<4x16x16xf32>
    %51 = arith.subf %44, %50 : vector<4x16x16xf32>
    %52 = math.exp %51 : vector<4x16x16xf32>
    %53 = arith.mulf %49, %40 : vector<4x16x1xf32>
    %cst_26 = arith.constant dense<0.000000e+00> : vector<4x16xf32>
    %54 = vector.multi_reduction <add>, %52, %cst_26 [2] : vector<4x16x16xf32> to vector<4x16xf32>
    %55 = vector.shape_cast %54 : vector<4x16xf32> to vector<4x16x1xf32>
    %56 = arith.addf %53, %55 : vector<4x16x1xf32>
    %57 = vector.broadcast %49 : vector<4x16x1xf32> to vector<4x16x8xf32>
    %58 = arith.mulf %57, %41 : vector<4x16x8xf32>
    %59 = arith.truncf %52 : vector<4x16x16xf32> to vector<4x16x16xbf16>
    "tpu.trace_start"() <{level = 10 : i32, message = "hqk,hkd->hqd"}> : () -> ()
    %cst_27 = arith.constant dense<0.000000e+00> : vector<4x16x8xf32>
    %60 = tpu.matmul %59, %43, %cst_27 {dimension_numbers = #tpu.dot_dimension_numbers<[2], [1], [1], [2], [0, 0, 0, 1, 1, 2], [0], [0]>} : vector<4x16x16xbf16>, vector<4x16x8xbf16>, vector<4x16x8xf32> -> vector<4x16x8xf32>
    "tpu.trace_stop"() : () -> ()
    %61 = arith.addf %58, %60 : vector<4x16x8xf32>
    %62 = tpu.reciprocal %56 {approx = true} : vector<4x16x1xf32> -> vector<4x16x1xf32>
    %63 = vector.broadcast %62 : vector<4x16x1xf32> to vector<4x16x8xf32>
    %64 = arith.mulf %61, %63 : vector<4x16x8xf32>
    %65 = tpu.transpose %64, [1, 0, 2] : vector<4x16x8xf32> -> vector<16x4x8xf32>
    %66 = vector.shape_cast %65 : vector<16x4x8xf32> to vector<16x32xf32>
    %67 = arith.truncf %66 : vector<16x32xf32> to vector<16x32xbf16>
    %c0_28 = arith.constant 0 : index
    %c0_29 = arith.constant 0 : index
    %68 = vector.load %arg9[%c0_28, %c0_29] : memref<32x32xbf16, #tpu.memory_space<vmem>>, vector<32x32xbf16>
    %cst_30 = arith.constant dense<0.000000e+00> : vector<16x32xf32>
    %69 = tpu.matmul %67, %68, %cst_30 {dimension_numbers = #tpu.dot_dimension_numbers<[1], [0], [0], [1], [0, 0, 1, 1], [], []>} : vector<16x32xbf16>, vector<32x32xbf16>, vector<16x32xf32> -> vector<16x32xf32>
    %c0_31 = arith.constant 0 : index
    %c0_32 = arith.constant 0 : index
    %70 = vector.load %arg10[%c0_31, %c0_32] : memref<1x32xf32, #tpu.memory_space<vmem>>, vector<1x32xf32>
    %71 = vector.broadcast %70 : vector<1x32xf32> to vector<16x32xf32>
    %72 = arith.addf %69, %71 : vector<16x32xf32>
    %73 = arith.addf %7, %72 : vector<16x32xf32>
    %cst_33 = arith.constant dense<0.000000e+00> : vector<16xf32>
    %74 = vector.multi_reduction <add>, %73, %cst_33 [1] : vector<16x32xf32> to vector<16xf32>
    %75 = vector.shape_cast %74 : vector<16xf32> to vector<16x1xf32>
    %cst_34 = arith.constant 3.200000e+01 : f32
    %76 = vector.broadcast %cst_34 : f32 to vector<16x1xf32>
    %77 = arith.divf %75, %76 : vector<16x1xf32>
    %78 = vector.broadcast %77 : vector<16x1xf32> to vector<16x32xf32>
    %79 = arith.subf %73, %78 : vector<16x32xf32>
    %80 = arith.mulf %79, %79 : vector<16x32xf32>
    %cst_35 = arith.constant dense<0.000000e+00> : vector<16xf32>
    %81 = vector.multi_reduction <add>, %80, %cst_35 [1] : vector<16x32xf32> to vector<16xf32>
    %82 = vector.shape_cast %81 : vector<16xf32> to vector<16x1xf32>
    %cst_36 = arith.constant 3.200000e+01 : f32
    %83 = vector.broadcast %cst_36 : f32 to vector<16x1xf32>
    %84 = arith.divf %82, %83 : vector<16x1xf32>
    %cst_37 = arith.constant 9.99999974E-6 : f32
    %85 = vector.broadcast %cst_37 : f32 to vector<16x1xf32>
    %86 = arith.addf %84, %85 : vector<16x1xf32>
    %87 = math.rsqrt %86 : vector<16x1xf32>
    %88 = vector.broadcast %87 : vector<16x1xf32> to vector<16x32xf32>
    %89 = arith.mulf %79, %88 : vector<16x32xf32>
    %c0_38 = arith.constant 0 : index
    %c0_39 = arith.constant 0 : index
    %90 = vector.load %arg15[%c0_38, %c0_39] : memref<1x32xf32, #tpu.memory_space<vmem>>, vector<1x32xf32>
    %91 = vector.broadcast %90 : vector<1x32xf32> to vector<16x32xf32>
    %92 = arith.mulf %89, %91 : vector<16x32xf32>
    %c0_40 = arith.constant 0 : index
    %c0_41 = arith.constant 0 : index
    %93 = vector.load %arg16[%c0_40, %c0_41] : memref<1x32xf32, #tpu.memory_space<vmem>>, vector<1x32xf32>
    %94 = vector.broadcast %93 : vector<1x32xf32> to vector<16x32xf32>
    %95 = arith.addf %92, %94 : vector<16x32xf32>
    %96 = arith.truncf %95 : vector<16x32xf32> to vector<16x32xbf16>
    %c0_42 = arith.constant 0 : index
    %c0_43 = arith.constant 0 : index
    %97 = vector.load %arg11[%c0_42, %c0_43] : memref<32x64xbf16, #tpu.memory_space<vmem>>, vector<32x64xbf16>
    %cst_44 = arith.constant dense<0.000000e+00> : vector<16x64xf32>
    %98 = tpu.matmul %96, %97, %cst_44 {dimension_numbers = #tpu.dot_dimension_numbers<[1], [0], [0], [1], [0, 0, 1, 1], [], []>} : vector<16x32xbf16>, vector<32x64xbf16>, vector<16x64xf32> -> vector<16x64xf32>
    %c0_45 = arith.constant 0 : index
    %c0_46 = arith.constant 0 : index
    %99 = vector.load %arg12[%c0_45, %c0_46] : memref<1x64xf32, #tpu.memory_space<vmem>>, vector<1x64xf32>
    %100 = vector.broadcast %99 : vector<1x64xf32> to vector<16x64xf32>
    %101 = arith.addf %98, %100 : vector<16x64xf32>
    %cst_47 = arith.constant 0.000000e+00 : f32
    %102 = vector.broadcast %cst_47 : f32 to vector<16x64xf32>
    %103 = arith.maximumf %101, %102 : vector<16x64xf32>
    %104 = arith.truncf %103 : vector<16x64xf32> to vector<16x64xbf16>
    %c0_48 = arith.constant 0 : index
    %c0_49 = arith.constant 0 : index
    %105 = vector.load %arg13[%c0_48, %c0_49] : memref<64x32xbf16, #tpu.memory_space<vmem>>, vector<64x32xbf16>
    %cst_50 = arith.constant dense<0.000000e+00> : vector<16x32xf32>
    %106 = tpu.matmul %104, %105, %cst_50 {dimension_numbers = #tpu.dot_dimension_numbers<[1], [0], [0], [1], [0, 0, 1, 1], [], []>} : vector<16x64xbf16>, vector<64x32xbf16>, vector<16x32xf32> -> vector<16x32xf32>
    %c0_51 = arith.constant 0 : index
    %c0_52 = arith.constant 0 : index
    %107 = vector.load %arg14[%c0_51, %c0_52] : memref<1x32xf32, #tpu.memory_space<vmem>>, vector<1x32xf32>
    %108 = vector.broadcast %107 : vector<1x32xf32> to vector<16x32xf32>
    %109 = arith.addf %106, %108 : vector<16x32xf32>
    %110 = arith.addf %73, %109 : vector<16x32xf32>
    %c0_53 = arith.constant 0 : index
    %c0_54 = arith.constant 0 : index
    %c0_55 = arith.constant 0 : index
    %111 = vector.load %arg17[%c0_53, %c0_54, %c0_55] : memref<1x16x32xf32, #tpu.memory_space<vmem>>, vector<1x16x32xf32>
    %112 = vector.shape_cast %111 : vector<1x16x32xf32> to vector<16x32xf32>
    %113 = vector.shape_cast %110 : vector<16x32xf32> to vector<1x16x32xf32>
    tpu.vector_store %arg17[%c0_53, %c0_54, %c0_55], %113 {strides = array<i32>} : memref<1x16x32xf32, #tpu.memory_space<vmem>>, vector<1x16x32xf32>,
    return
  }
  func.func @transform_0(%arg0: i32, %arg1: i32) -> (i32, i32, i32) {
    %c0_i32 = arith.constant 0 : i32
    %c0_i32_0 = arith.constant 0 : i32
    %c0_i32_1 = arith.constant 0 : i32
    return %arg0, %c0_i32, %c0_i32_0 : i32, i32, i32
  }
  func.func @transform_1(%arg0: i32, %arg1: i32) -> (i32, i32) {
    %c0_i32 = arith.constant 0 : i32
    %c0_i32_0 = arith.constant 0 : i32
    %c0_i32_1 = arith.constant 0 : i32
    return %c0_i32, %c0_i32_0 : i32, i32
  }
  func.func @transform_2(%arg0: i32, %arg1: i32) -> (i32, i32) {
    %c0_i32 = arith.constant 0 : i32
    %c0_i32_0 = arith.constant 0 : i32
    %c0_i32_1 = arith.constant 0 : i32
    return %c0_i32, %c0_i32_0 : i32, i32
  }
  func.func @transform_3(%arg0: i32, %arg1: i32) -> (i32, i32) {
    %c0_i32 = arith.constant 0 : i32
    %c0_i32_0 = arith.constant 0 : i32
    %c0_i32_1 = arith.constant 0 : i32
    return %c0_i32, %c0_i32_0 : i32, i32
  }
  func.func @transform_4(%arg0: i32, %arg1: i32) -> (i32, i32) {
    %c0_i32 = arith.constant 0 : i32
    %c0_i32_0 = arith.constant 0 : i32
    %c0_i32_1 = arith.constant 0 : i32
    return %c0_i32, %c0_i32_0 : i32, i32
  }
  func.func @transform_5(%arg0: i32, %arg1: i32) -> (i32, i32) {
    %c0_i32 = arith.constant 0 : i32
    %c0_i32_0 = arith.constant 0 : i32
    %c0_i32_1 = arith.constant 0 : i32
    return %c0_i32, %c0_i32_0 : i32, i32
  }
  func.func @transform_6(%arg0: i32, %arg1: i32) -> (i32, i32) {
    %c0_i32 = arith.constant 0 : i32
    %c0_i32_0 = arith.constant 0 : i32
    %c0_i32_1 = arith.constant 0 : i32
    return %c0_i32, %c0_i32_0 : i32, i32
  }
  func.func @transform_7(%arg0: i32, %arg1: i32) -> (i32, i32) {
    %c0_i32 = arith.constant 0 : i32
    %c0_i32_0 = arith.constant 0 : i32
    %c0_i32_1 = arith.constant 0 : i32
    return %c0_i32, %c0_i32_0 : i32, i32
  }
  func.func @transform_8(%arg0: i32, %arg1: i32) -> (i32, i32) {
    %c0_i32 = arith.constant 0 : i32
    %c0_i32_0 = arith.constant 0 : i32
    %c0_i32_1 = arith.constant 0 : i32
    return %c0_i32, %c0_i32_0 : i32, i32
  }
  func.func @transform_9(%arg0: i32, %arg1: i32) -> (i32, i32) {
    %c0_i32 = arith.constant 0 : i32
    %c0_i32_0 = arith.constant 0 : i32
    %c0_i32_1 = arith.constant 0 : i32
    return %c0_i32, %c0_i32_0 : i32, i32
  }
  func.func @transform_10(%arg0: i32, %arg1: i32) -> (i32, i32) {
    %c0_i32 = arith.constant 0 : i32
    %c0_i32_0 = arith.constant 0 : i32
    %c0_i32_1 = arith.constant 0 : i32
    return %c0_i32, %c0_i32_0 : i32, i32
  }
  func.func @transform_11(%arg0: i32, %arg1: i32) -> (i32, i32) {
    %c0_i32 = arith.constant 0 : i32
    %c0_i32_0 = arith.constant 0 : i32
    %c0_i32_1 = arith.constant 0 : i32
    return %c0_i32, %c0_i32_0 : i32, i32
  }
  func.func @transform_12(%arg0: i32, %arg1: i32) -> (i32, i32) {
    %c0_i32 = arith.constant 0 : i32
    %c0_i32_0 = arith.constant 0 : i32
    %c0_i32_1 = arith.constant 0 : i32
    return %c0_i32, %c0_i32_0 : i32, i32
  }
  func.func @transform_13(%arg0: i32, %arg1: i32) -> (i32, i32) {
    %c0_i32 = arith.constant 0 : i32
    %c0_i32_0 = arith.constant 0 : i32
    %c0_i32_1 = arith.constant 0 : i32
    return %c0_i32, %c0_i32_0 : i32, i32
  }
  func.func @transform_14(%arg0: i32, %arg1: i32) -> (i32, i32) {
    %c0_i32 = arith.constant 0 : i32
    %c0_i32_0 = arith.constant 0 : i32
    %c0_i32_1 = arith.constant 0 : i32
    return %c0_i32, %c0_i32_0 : i32, i32
  }
  func.func @transform_15(%arg0: i32, %arg1: i32) -> (i32, i32, i32) {
    %c0_i32 = arith.constant 0 : i32
    %c0_i32_0 = arith.constant 0 : i32
    return %arg0, %arg1, %c0_i32 : i32, i32, i32
  }
}

</mosaic_0001>

<llo_original>
// kernel: tpu_custom_call.1
$region0: #{tpu_custom_call.1}
  #allocation0 [shape = 'u32[]', space=smem, size = 0x4, offset = 0x4, fixed_abs, tag = 'smem constant byte address 0x4 - core index']
  #allocation1 [shape = 'u32[144,128]{1,0:T(1,128)}', space=vmem, size = 0x12000, scoped, tag = 'internal scratch']
  #allocation2 [shape = 'bf16[4,16,8]{2,1,0:T(16,128)(2,1)}', space=vmem, size = 0x4000, scoped, tag = 'scratch operand']
  #allocation3 [shape = 'bf16[4,16,8]{2,1,0:T(16,128)(2,1)}', space=vmem, size = 0x4000, scoped, tag = 'scratch operand']
  %s0 = inlined_call_operand.vmem [shape: f32[2,16,32], index: 0, kind: input, shape index: {}]
  %s1 = inlined_call_operand.vmem [shape: f32[1,32], index: 1, kind: input, shape index: {}]
  %s2 = inlined_call_operand.vmem [shape: f32[1,32], index: 2, kind: input, shape index: {}]
  %s3 = inlined_call_operand.vmem [shape: bf16[32,32], index: 3, kind: input, shape index: {}]
  %s4 = inlined_call_operand.hbm [shape: f32[1,32], index: 4, kind: input, shape index: {}]
  %s5 = inlined_call_operand.hbm [shape: bf16[32,64], index: 5, kind: input, shape index: {}]
  %s6 = inlined_call_operand.hbm [shape: f32[1,64], index: 6, kind: input, shape index: {}]
  %s7 = inlined_call_operand.hbm [shape: bf16[32,32], index: 7, kind: input, shape index: {}]
  %s8 = inlined_call_operand.hbm [shape: f32[1,32], index: 8, kind: input, shape index: {}]
  %s9 = inlined_call_operand.vmem [shape: bf16[32,64], index: 9, kind: input, shape index: {}]
  %s10 = inlined_call_operand.vmem [shape: f32[1,64], index: 10, kind: input, shape index: {}]
  %s11 = inlined_call_operand.vmem [shape: bf16[64,32], index: 11, kind: input, shape index: {}]
  %s12 = inlined_call_operand.vmem [shape: f32[1,32], index: 12, kind: input, shape index: {}]
  %s13 = inlined_call_operand.vmem [shape: f32[1,32], index: 13, kind: input, shape index: {}]
  %s14 = inlined_call_operand.vmem [shape: f32[1,32], index: 14, kind: input, shape index: {}]
  %s15 = inlined_call_operand.hbm [shape: f32[2,16,32], index: 15, kind: output, shape index: {}]
  %s16 = sld [smem:[#allocation0]]
  $region117: #{tpu_custom_call.1} parent=0
    _
  %s18 = ssub.s32 1, %s16
  %s19 = scalar_select 0, %s18, %s16
  $region1: #{tpu_custom_call.1} parent=0
    #allocation4 [shape = 'u8[512]{0}', space=vmem, size = 0x400, scoped, tag = 'input window, operand 4, single buffered']
    #allocation5 [shape = 's32[2]{0}', space=sflag, size = 0x8, scoped, tag = 'scoped memory for tpu_custom_call.1']
    #allocation6 [shape = 's32[2]{0}', space=sflag, size = 0x8, scoped, tag = 'scoped memory for tpu_custom_call.1']
    #allocation7 [shape = 'u8[8192]{0}', space=vmem, size = 0x2000, scoped, tag = 'input window, operand 5, single buffered']
    #allocation8 [shape = 's32[1]{0}', space=sflag, size = 0x4, scoped, tag = 'scoped memory for tpu_custom_call.1']
    #allocation9 [shape = 'u8[512]{0}', space=vmem, size = 0x400, scoped, tag = 'input window, operand 6, single buffered']
    #allocation10 [shape = 'u8[8192]{0}', space=vmem, size = 0x2000, scoped, tag = 'input window, operand 7, single buffered']
    #allocation11 [shape = 's32[1]{0}', space=sflag, size = 0x4, scoped, tag = 'scoped memory for tpu_custom_call.1']
    #allocation12 [shape = 'u8[512]{0}', space=vmem, size = 0x400, scoped, tag = 'input window, operand 8, single buffered']
    #allocation13 [shape = 'u8[16384]{0}', space=vmem, size = 0x4000, scoped, tag = 'output window, operand 0']
    %20 = vsyncpa [#allocation5], 0
    %21 = vsyncpa [#allocation8], 0
    %22 = vsyncpa [#allocation11], 0
    %23 = vsyncpa [#allocation6], 0
    %s24 = scalar_lea.sflag [#allocation6], 1
    %25 = vsyncpa %s24, 0
    loop: start=0, step=1, limit=4
    $region2: #{tpu_custom_call.1} parent=1 // loop_pre_header
      _
    $region3: #{tpu_custom_call.1} parent=1 // loop_header
      %s27 = sphi 0, %s31
      %p28 = scmp.ge.s32.totalorder %s27, 4
      %s34 = sphi 0, %s46
      %s35 = sphi 0, %s42
      %s36 = sphi 0, %s34
      %s37 = sphi 0, %s35
      %s38 = sphi 0, %s36
      %s39 = sphi 0, %s37
      %s49 = sphi 0, %s51
      %s52 = sphi 0, %s49
      %s53 = sphi 0, %s52
      %s69 = sphi 0, %s53
      %s73 = sphi 0, %s73
      %s75 = sphi 0, %s73
      %s76 = sphi 0, %s75
      %s90 = sphi 0, %s76
      %s94 = sphi 0, %s94
      %s96 = sphi 0, %s94
      %s97 = sphi 0, %s96
      %s111 = sphi 0, %s97
      %s115 = sphi 0, %s115
      %s117 = sphi 0, %s115
      %s118 = sphi 0, %s117
      %s132 = sphi 0, %s118
      %s136 = sphi 0, %s136
      %s138 = sphi 0, %s136
      %s139 = sphi 0, %s138
      %s153 = sphi 0, %s139
      %s157 = sphi 0, %s157
      %s159 = sphi 0, %s157
      %s160 = sphi 0, %s159
      %s174 = sphi 0, %s160
      %s178 = sphi 0, %s178
      %s180 = sphi 0, %s178
      %s181 = sphi 0, %s180
      %s195 = sphi 0, %s181
      %s199 = sphi 0, %s199
      %s201 = sphi 0, %s199
      %s202 = sphi 0, %s201
      %s216 = sphi 0, %s202
      %s220 = sphi 0, %s220
      %s222 = sphi 0, %s220
      %s223 = sphi 0, %s222
      %s237 = sphi 0, %s223
      %s241 = sphi 0, %s241
      %s243 = sphi 0, %s241
      %s244 = sphi 0, %s243
      %s258 = sphi 0, %s244
      %s262 = sphi 0, %s262
      %s264 = sphi 0, %s262
      %s265 = sphi 0, %s264
      %s279 = sphi 0, %s265
      %s283 = sphi 0, %s283
      %s285 = sphi 0, %s283
      %s286 = sphi 0, %s285
      %s300 = sphi 0, %s286
      %s304 = sphi 0, %s304
      %s306 = sphi 0, %s304
      %s307 = sphi 0, %s306
      %s321 = sphi 0, %s307
      %s325 = sphi 0, %s325
      %s327 = sphi 0, %s325
      %s328 = sphi 0, %s327
      %s342 = sphi 0, %s328
      %s346 = sphi 0, %s346
      %s348 = sphi 0, %s346
      %s349 = sphi 0, %s348
      %s363 = sphi 0, %s349
      %s371 = sphi 0, %s373
      %s374 = sphi 0, %s371
      %s375 = sphi 0, %s374
      %s391 = sphi 0, %s375
    $region4: #{tpu_custom_call.1} parent=1 // loop_header_branch
      %30 = sbr.rel (%p28) target = $region8
    $region5: #{tpu_custom_call.1} parent=1 // loop_body
      %s32 = ssub.s32 %s27, 1
      %s33 = ssub.s32 %s27, 2
      %s40 = sadd.s32 1, %s35
      %p41 = scmp.ge.s32.totalorder %s40, 1
      %s42 = scalar_select %p41, 0, %s40
      %s43 = sadd.s32 1, %s34
      %s44 = scalar_select %p41, %s43, %s34
      %p45 = scmp.ge.s32.totalorder %s44, 2
      %s46 = scalar_select %p45, 0, %s44
      %s47 = ssub.s32 %s34, %s46
      %p48 = scmp.eq.s32.totalorder %s47, 0
      %s50 = sadd.s32 %s49, 1
      %s51 = scalar_select %p48, %s49, %s50
      %p54 = pneg %p48
      %p55 = scmp.eq.s32.totalorder %s27, 1
      %p56 = por %p54, %p55
      %p57 = scmp.ne.s32.totalorder %s49, %s52
      %p58 = scmp.eq.s32.totalorder %s27, 0
      %p59 = por %p57, %p58
      %p60 = scmp.ne.s32.totalorder %s49, %s52
      %p61 = scmp.eq.s32.totalorder %s32, 1
      %p62 = por %p60, %p61
      %p63 = scmp.ne.s32.totalorder %s52, %s53
      %p64 = scmp.eq.s32.totalorder %s32, 0
      %p65 = por %p63, %p64
      %p66 = scmp.ne.s32.totalorder %s52, %s53
      %p67 = scmp.eq.s32.totalorder %s33, 1
      %p68 = por %p66, %p67
      %p70 = scmp.ne.s32.totalorder %s53, %s69
      %p71 = scmp.eq.s32.totalorder %s33, 0
      %p72 = por %p70, %p71
      %s74 = sadd.s32 %s73, 1
      %p77 = scmp.eq.s32.totalorder %s27, 1
      %p78 = scmp.ne.s32.totalorder %s73, %s75
      %p79 = scmp.eq.s32.totalorder %s27, 0
      %p80 = por %p78, %p79
      %p81 = scmp.ne.s32.totalorder %s73, %s75
      %p82 = scmp.eq.s32.totalorder %s32, 1
      %p83 = por %p81, %p82
      %p84 = scmp.ne.s32.totalorder %s75, %s76
      %p85 = scmp.eq.s32.totalorder %s32, 0
      %p86 = por %p84, %p85
      %p87 = scmp.ne.s32.totalorder %s75, %s76
      %p88 = scmp.eq.s32.totalorder %s33, 1
      %p89 = por %p87, %p88
      %p91 = scmp.ne.s32.totalorder %s76, %s90
      %p92 = scmp.eq.s32.totalorder %s33, 0
      %p93 = por %p91, %p92
      %s95 = sadd.s32 %s94, 1
      %p98 = scmp.eq.s32.totalorder %s27, 1
      %p99 = scmp.ne.s32.totalorder %s94, %s96
      %p100 = scmp.eq.s32.totalorder %s27, 0
      %p101 = por %p99, %p100
      %p102 = scmp.ne.s32.totalorder %s94, %s96
      %p103 = scmp.eq.s32.totalorder %s32, 1
      %p104 = por %p102, %p103
      %p105 = scmp.ne.s32.totalorder %s96, %s97
      %p106 = scmp.eq.s32.totalorder %s32, 0
      %p107 = por %p105, %p106
      %p108 = scmp.ne.s32.totalorder %s96, %s97
      %p109 = scmp.eq.s32.totalorder %s33, 1
      %p110 = por %p108, %p109
      %p112 = scmp.ne.s32.totalorder %s97, %s111
      %p113 = scmp.eq.s32.totalorder %s33, 0
      %p114 = por %p112, %p113
      %s116 = sadd.s32 %s115, 1
      %p119 = scmp.eq.s32.totalorder %s27, 1
      %p120 = scmp.ne.s32.totalorder %s115, %s117
      %p121 = scmp.eq.s32.totalorder %s27, 0
      %p122 = por %p120, %p121
      %p123 = scmp.ne.s32.totalorder %s115, %s117
      %p124 = scmp.eq.s32.totalorder %s32, 1
      %p125 = por %p123, %p124
      %p126 = scmp.ne.s32.totalorder %s117, %s118
      %p127 = scmp.eq.s32.totalorder %s32, 0
      %p128 = por %p126, %p127
      %p129 = scmp.ne.s32.totalorder %s117, %s118
      %p130 = scmp.eq.s32.totalorder %s33, 1
      %p131 = por %p129, %p130
      %p133 = scmp.ne.s32.totalorder %s118, %s132
      %p134 = scmp.eq.s32.totalorder %s33, 0
      %p135 = por %p133, %p134
      %s137 = sadd.s32 %s136, 1
      %p140 = scmp.eq.s32.totalorder %s27, 1
      %p141 = scmp.ne.s32.totalorder %s136, %s138
      %p142 = scmp.eq.s32.totalorder %s27, 0
      %p143 = por %p141, %p142
      %p144 = scmp.ne.s32.totalorder %s136, %s138
      %p145 = scmp.eq.s32.totalorder %s32, 1
      %p146 = por %p144, %p145
      %p147 = scmp.ne.s32.totalorder %s138, %s139
      %p148 = scmp.eq.s32.totalorder %s32, 0
      %p149 = por %p147, %p148
      %p150 = scmp.ne.s32.totalorder %s138, %s139
      %p151 = scmp.eq.s32.totalorder %s33, 1
      %p152 = por %p150, %p151
      %p154 = scmp.ne.s32.totalorder %s139, %s153
      %p155 = scmp.eq.s32.totalorder %s33, 0
      %p156 = por %p154, %p155
      %s158 = sadd.s32 %s157, 1
      %p161 = scmp.eq.s32.totalorder %s27, 1
      %p162 = scmp.ne.s32.totalorder %s157, %s159
      %p163 = scmp.eq.s32.totalorder %s27, 0
      %p164 = por %p162, %p163
      %p165 = scmp.ne.s32.totalorder %s157, %s159
      %p166 = scmp.eq.s32.totalorder %s32, 1
      %p167 = por %p165, %p166
      %p168 = scmp.ne.s32.totalorder %s159, %s160
      %p169 = scmp.eq.s32.totalorder %s32, 0
      %p170 = por %p168, %p169
      %p171 = scmp.ne.s32.totalorder %s159, %s160
      %p172 = scmp.eq.s32.totalorder %s33, 1
      %p173 = por %p171, %p172
      %p175 = scmp.ne.s32.totalorder %s160, %s174
      %p176 = scmp.eq.s32.totalorder %s33, 0
      %p177 = por %p175, %p176
      %s179 = sadd.s32 %s178, 1
      %p182 = scmp.eq.s32.totalorder %s27, 1
      %p183 = scmp.ne.s32.totalorder %s178, %s180
      %p184 = scmp.eq.s32.totalorder %s27, 0
      %p185 = por %p183, %p184
      %p186 = scmp.ne.s32.totalorder %s178, %s180
      %p187 = scmp.eq.s32.totalorder %s32, 1
      %p188 = por %p186, %p187
      %p189 = scmp.ne.s32.totalorder %s180, %s181
      %p190 = scmp.eq.s32.totalorder %s32, 0
      %p191 = por %p189, %p190
      %p192 = scmp.ne.s32.totalorder %s180, %s181
      %p193 = scmp.eq.s32.totalorder %s33, 1
      %p194 = por %p192, %p193
      %p196 = scmp.ne.s32.totalorder %s181, %s195
      %p197 = scmp.eq.s32.totalorder %s33, 0
      %p198 = por %p196, %p197
      %s200 = sadd.s32 %s199, 1
      %p203 = scmp.eq.s32.totalorder %s27, 1
      %p204 = scmp.ne.s32.totalorder %s199, %s201
      %p205 = scmp.eq.s32.totalorder %s27, 0
      %p206 = por %p204, %p205
      %p207 = scmp.ne.s32.totalorder %s199, %s201
      %p208 = scmp.eq.s32.totalorder %s32, 1
      %p209 = por %p207, %p208
      %p210 = scmp.ne.s32.totalorder %s201, %s202
      %p211 = scmp.eq.s32.totalorder %s32, 0
      %p212 = por %p210, %p211
      %p213 = scmp.ne.s32.totalorder %s201, %s202
      %p214 = scmp.eq.s32.totalorder %s33, 1
      %p215 = por %p213, %p214
      %p217 = scmp.ne.s32.totalorder %s202, %s216
      %p218 = scmp.eq.s32.totalorder %s33, 0
      %p219 = por %p217, %p218
      %s221 = sadd.s32 %s220, 1
      %p224 = scmp.eq.s32.totalorder %s27, 1
      %p225 = scmp.ne.s32.totalorder %s220, %s222
      %p226 = scmp.eq.s32.totalorder %s27, 0
      %p227 = por %p225, %p226
      %p228 = scmp.ne.s32.totalorder %s220, %s222
      %p229 = scmp.eq.s32.totalorder %s32, 1
      %p230 = por %p228, %p229
      %p231 = scmp.ne.s32.totalorder %s222, %s223
      %p232 = scmp.eq.s32.totalorder %s32, 0
      %p233 = por %p231, %p232
      %p234 = scmp.ne.s32.totalorder %s222, %s223
      %p235 = scmp.eq.s32.totalorder %s33, 1
      %p236 = por %p234, %p235
      %p238 = scmp.ne.s32.totalorder %s223, %s237
      %p239 = scmp.eq.s32.totalorder %s33, 0
      %p240 = por %p238, %p239
      %s242 = sadd.s32 %s241, 1
      %p245 = scmp.eq.s32.totalorder %s27, 1
      %p246 = scmp.ne.s32.totalorder %s241, %s243
      %p247 = scmp.eq.s32.totalorder %s27, 0
      %p248 = por %p246, %p247
      %p249 = scmp.ne.s32.totalorder %s241, %s243
      %p250 = scmp.eq.s32.totalorder %s32, 1
      %p251 = por %p249, %p250
      %p252 = scmp.ne.s32.totalorder %s243, %s244
      %p253 = scmp.eq.s32.totalorder %s32, 0
      %p254 = por %p252, %p253
      %p255 = scmp.ne.s32.totalorder %s243, %s244
      %p256 = scmp.eq.s32.totalorder %s33, 1
      %p257 = por %p255, %p256
      %p259 = scmp.ne.s32.totalorder %s244, %s258
      %p260 = scmp.eq.s32.totalorder %s33, 0
      %p261 = por %p259, %p260
      %s263 = sadd.s32 %s262, 1
      %p266 = scmp.eq.s32.totalorder %s27, 1
      %p267 = scmp.ne.s32.totalorder %s262, %s264
      %p268 = scmp.eq.s32.totalorder %s27, 0
      %p269 = por %p267, %p268
      %p270 = scmp.ne.s32.totalorder %s262, %s264
      %p271 = scmp.eq.s32.totalorder %s32, 1
      %p272 = por %p270, %p271
      %p273 = scmp.ne.s32.totalorder %s264, %s265
      %p274 = scmp.eq.s32.totalorder %s32, 0
      %p275 = por %p273, %p274
      %p276 = scmp.ne.s32.totalorder %s264, %s265
      %p277 = scmp.eq.s32.totalorder %s33, 1
      %p278 = por %p276, %p277
      %p280 = scmp.ne.s32.totalorder %s265, %s279
      %p281 = scmp.eq.s32.totalorder %s33, 0
      %p282 = por %p280, %p281
      %s284 = sadd.s32 %s283, 1
      %p287 = scmp.eq.s32.totalorder %s27, 1
      %p288 = scmp.ne.s32.totalorder %s283, %s285
      %p289 = scmp.eq.s32.totalorder %s27, 0
      %p290 = por %p288, %p289
      %p291 = scmp.ne.s32.totalorder %s283, %s285
      %p292 = scmp.eq.s32.totalorder %s32, 1
      %p293 = por %p291, %p292
      %p294 = scmp.ne.s32.totalorder %s285, %s286
      %p295 = scmp.eq.s32.totalorder %s32, 0
      %p296 = por %p294, %p295
      %p297 = scmp.ne.s32.totalorder %s285, %s286
      %p298 = scmp.eq.s32.totalorder %s33, 1
      %p299 = por %p297, %p298
      %p301 = scmp.ne.s32.totalorder %s286, %s300
      %p302 = scmp.eq.s32.totalorder %s33, 0
      %p303 = por %p301, %p302
      %s305 = sadd.s32 %s304, 1
      %p308 = scmp.eq.s32.totalorder %s27, 1
      %p309 = scmp.ne.s32.totalorder %s304, %s306
      %p310 = scmp.eq.s32.totalorder %s27, 0
      %p311 = por %p309, %p310
      %p312 = scmp.ne.s32.totalorder %s304, %s306
      %p313 = scmp.eq.s32.totalorder %s32, 1
      %p314 = por %p312, %p313
      %p315 = scmp.ne.s32.totalorder %s306, %s307
      %p316 = scmp.eq.s32.totalorder %s32, 0
      %p317 = por %p315, %p316
      %p318 = scmp.ne.s32.totalorder %s306, %s307
      %p319 = scmp.eq.s32.totalorder %s33, 1
      %p320 = por %p318, %p319
      %p322 = scmp.ne.s32.totalorder %s307, %s321
      %p323 = scmp.eq.s32.totalorder %s33, 0
      %p324 = por %p322, %p323
      %s326 = sadd.s32 %s325, 1
      %p329 = scmp.eq.s32.totalorder %s27, 1
      %p330 = scmp.ne.s32.totalorder %s325, %s327
      %p331 = scmp.eq.s32.totalorder %s27, 0
      %p332 = por %p330, %p331
      %p333 = scmp.ne.s32.totalorder %s325, %s327
      %p334 = scmp.eq.s32.totalorder %s32, 1
      %p335 = por %p333, %p334
      %p336 = scmp.ne.s32.totalorder %s327, %s328
      %p337 = scmp.eq.s32.totalorder %s32, 0
      %p338 = por %p336, %p337
      %p339 = scmp.ne.s32.totalorder %s327, %s328
      %p340 = scmp.eq.s32.totalorder %s33, 1
      %p341 = por %p339, %p340
      %p343 = scmp.ne.s32.totalorder %s328, %s342
      %p344 = scmp.eq.s32.totalorder %s33, 0
      %p345 = por %p343, %p344
      %s347 = sadd.s32 %s346, 1
      %p350 = scmp.eq.s32.totalorder %s27, 1
      %p351 = scmp.ne.s32.totalorder %s346, %s348
      %p352 = scmp.eq.s32.totalorder %s27, 0
      %p353 = por %p351, %p352
      %p354 = scmp.ne.s32.totalorder %s346, %s348
      %p355 = scmp.eq.s32.totalorder %s32, 1
      %p356 = por %p354, %p355
      %p357 = scmp.ne.s32.totalorder %s348, %s349
      %p358 = scmp.eq.s32.totalorder %s32, 0
      %p359 = por %p357, %p358
      %p360 = scmp.ne.s32.totalorder %s348, %s349
      %p361 = scmp.eq.s32.totalorder %s33, 1
      %p362 = por %p360, %p361
      %p364 = scmp.ne.s32.totalorder %s349, %s363
      %p365 = scmp.eq.s32.totalorder %s33, 0
      %p366 = por %p364, %p365
      %s367 = ssub.s32 %s34, %s46
      %s368 = ssub.s32 %s35, %s42
      %s369 = sor.u32 %s367, %s368
      %p370 = scmp.eq.s32.totalorder %s369, 0
      %s372 = sadd.s32 %s371, 1
      %s373 = scalar_select %p370, %s371, %s372
      %p376 = pneg %p370
      %p377 = scmp.eq.s32.totalorder %s27, 1
      %p378 = por %p376, %p377
      %p379 = scmp.ne.s32.totalorder %s371, %s374
      %p380 = scmp.eq.s32.totalorder %s27, 0
      %p381 = por %p379, %p380
      %p382 = scmp.ne.s32.totalorder %s371, %s374
      %p383 = scmp.eq.s32.totalorder %s32, 1
      %p384 = por %p382, %p383
      %p385 = scmp.ne.s32.totalorder %s374, %s375
      %p386 = scmp.eq.s32.totalorder %s32, 0
      %p387 = por %p385, %p386
      %p388 = scmp.ne.s32.totalorder %s374, %s375
      %p389 = scmp.eq.s32.totalorder %s33, 1
      %p390 = por %p388, %p389
      %p392 = scmp.ne.s32.totalorder %s375, %s391
      %p393 = scmp.eq.s32.totalorder %s33, 0
      %p394 = por %p392, %p393
      %p395 = scmp.le.s32.totalorder 1, %s27
      %p396 = scmp.lt.s32.totalorder %s27, 3
      %p397 = pnand %p395, %p396
      %p398 = pneg %p397
      // Predicated region
      $region9: #{tpu_custom_call.1} parent=5 // pred_check
        _
      $region10: #{tpu_custom_call.1} parent=5 // pred_check_branch
        %400 = sbr.rel (%p397) target = $region12
      $region11: #{tpu_custom_call.1} parent=5 // pred_region
        %s401 = ssub.s32 %s27, 1
        // Predicated region
        $region13: #{tpu_custom_call.1} parent=11 // pred_check
          %p402 = pneg %p86
        $region14: #{tpu_custom_call.1} parent=11 // pred_check_branch
          %404 = sbr.rel (%p402) target = $region16
        $region15: #{tpu_custom_call.1} parent=11 // pred_region
          _
        $region16: #{tpu_custom_call.1} parent=11 // pred_fallthru
          _
        // Predicated region
        $region17: #{tpu_custom_call.1} parent=11 // pred_check
          %p405 = pneg %p107
        $region18: #{tpu_custom_call.1} parent=11 // pred_check_branch
          %407 = sbr.rel (%p405) target = $region20
        $region19: #{tpu_custom_call.1} parent=11 // pred_region
          _
        $region20: #{tpu_custom_call.1} parent=11 // pred_fallthru
          _
        // Predicated region
        $region21: #{tpu_custom_call.1} parent=11 // pred_check
          %p408 = pneg %p128
        $region22: #{tpu_custom_call.1} parent=11 // pred_check_branch
          %410 = sbr.rel (%p408) target = $region24
        $region23: #{tpu_custom_call.1} parent=11 // pred_region
          _
        $region24: #{tpu_custom_call.1} parent=11 // pred_fallthru
          _
        // Predicated region
        $region25: #{tpu_custom_call.1} parent=11 // pred_check
          %p411 = pneg %p149
        $region26: #{tpu_custom_call.1} parent=11 // pred_check_branch
          %413 = sbr.rel (%p411) target = $region28
        $region27: #{tpu_custom_call.1} parent=11 // pred_region
          %s415 = ssub.s32 16, 16
          %416 = vsyncadd [#allocation5], %s415
          %s418 = sshll.u32 [#allocation4], 4
          %s419 = int_to_ptr.vmem [resolvable:$true] %s418
          %421 = dma.hbm_to_vmem [thread:$0]  %s4, 16, %s419, [#allocation5]
        $region28: #{tpu_custom_call.1} parent=11 // pred_fallthru
          _
        // Predicated region
        $region29: #{tpu_custom_call.1} parent=11 // pred_check
          %p422 = pneg %p170
        $region30: #{tpu_custom_call.1} parent=11 // pred_check_branch
          %424 = sbr.rel (%p422) target = $region32
        $region31: #{tpu_custom_call.1} parent=11 // pred_region
          %s426 = ssub.s32 256, 256
          %427 = vsyncadd [#allocation8], %s426
          %s428 = sshll.u32 [#allocation7], 4
          %s429 = int_to_ptr.vmem [resolvable:$true] %s428
          %434 = dma.hbm_to_vmem [thread:$0]  %s5, 256, %s429, [#allocation8], 64, 64, 4
        $region32: #{tpu_custom_call.1} parent=11 // pred_fallthru
          _
        // Predicated region
        $region33: #{tpu_custom_call.1} parent=11 // pred_check
          %p435 = pneg %p191
        $region34: #{tpu_custom_call.1} parent=11 // pred_check_branch
          %437 = sbr.rel (%p435) target = $region36
        $region35: #{tpu_custom_call.1} parent=11 // pred_region
          %s439 = ssub.s32 16, 16
          %440 = vsyncadd [#allocation8], %s439
          %s442 = sshll.u32 [#allocation9], 4
          %s443 = int_to_ptr.vmem [resolvable:$true] %s442
          %445 = dma.hbm_to_vmem [thread:$0]  %s6, 16, %s443, [#allocation8]
        $region36: #{tpu_custom_call.1} parent=11 // pred_fallthru
          _
        // Predicated region
        $region37: #{tpu_custom_call.1} parent=11 // pred_check
          %p446 = pneg %p212
        $region38: #{tpu_custom_call.1} parent=11 // pred_check_branch
          %448 = sbr.rel (%p446) target = $region40
        $region39: #{tpu_custom_call.1} parent=11 // pred_region
          %s450 = ssub.s32 256, 256
          %451 = vsyncadd [#allocation11], %s450
          %s452 = sshll.u32 [#allocation10], 4
          %s453 = int_to_ptr.vmem [resolvable:$true] %s452
          %458 = dma.hbm_to_vmem [thread:$0]  %s7, 256, %s453, [#allocation11], 64, 64, 4
        $region40: #{tpu_custom_call.1} parent=11 // pred_fallthru
          _
        // Predicated region
        $region41: #{tpu_custom_call.1} parent=11 // pred_check
          %p459 = pneg %p233
        $region42: #{tpu_custom_call.1} parent=11 // pred_check_branch
          %461 = sbr.rel (%p459) target = $region44
        $region43: #{tpu_custom_call.1} parent=11 // pred_region
          %s463 = ssub.s32 16, 16
          %464 = vsyncadd [#allocation11], %s463
          %s466 = sshll.u32 [#allocation12], 4
          %s467 = int_to_ptr.vmem [resolvable:$true] %s466
          %469 = dma.hbm_to_vmem [thread:$0]  %s8, 16, %s467, [#allocation11]
        $region44: #{tpu_custom_call.1} parent=11 // pred_fallthru
          _
        // Predicated region
        $region45: #{tpu_custom_call.1} parent=11 // pred_check
          %p470 = pneg %p254
        $region46: #{tpu_custom_call.1} parent=11 // pred_check_branch
          %472 = sbr.rel (%p470) target = $region48
        $region47: #{tpu_custom_call.1} parent=11 // pred_region
          _
        $region48: #{tpu_custom_call.1} parent=11 // pred_fallthru
          _
        // Predicated region
        $region49: #{tpu_custom_call.1} parent=11 // pred_check
          %p473 = pneg %p275
        $region50: #{tpu_custom_call.1} parent=11 // pred_check_branch
          %475 = sbr.rel (%p473) target = $region52
        $region51: #{tpu_custom_call.1} parent=11 // pred_region
          _
        $region52: #{tpu_custom_call.1} parent=11 // pred_fallthru
          _
        // Predicated region
        $region53: #{tpu_custom_call.1} parent=11 // pred_check
          %p476 = pneg %p296
        $region54: #{tpu_custom_call.1} parent=11 // pred_check_branch
          %478 = sbr.rel (%p476) target = $region56
        $region55: #{tpu_custom_call.1} parent=11 // pred_region
          _
        $region56: #{tpu_custom_call.1} parent=11 // pred_fallthru
          _
        // Predicated region
        $region57: #{tpu_custom_call.1} parent=11 // pred_check
          %p479 = pneg %p317
        $region58: #{tpu_custom_call.1} parent=11 // pred_check_branch
          %481 = sbr.rel (%p479) target = $region60
        $region59: #{tpu_custom_call.1} parent=11 // pred_region
          _
        $region60: #{tpu_custom_call.1} parent=11 // pred_fallthru
          _
        // Predicated region
        $region61: #{tpu_custom_call.1} parent=11 // pred_check
          %p482 = pneg %p338
        $region62: #{tpu_custom_call.1} parent=11 // pred_check_branch
          %484 = sbr.rel (%p482) target = $region64
        $region63: #{tpu_custom_call.1} parent=11 // pred_region
          _
        $region64: #{tpu_custom_call.1} parent=11 // pred_fallthru
          _
        // Predicated region
        $region65: #{tpu_custom_call.1} parent=11 // pred_check
          %p485 = pneg %p359
        $region66: #{tpu_custom_call.1} parent=11 // pred_check_branch
          %487 = sbr.rel (%p485) target = $region68
        $region67: #{tpu_custom_call.1} parent=11 // pred_region
          _
        $region68: #{tpu_custom_call.1} parent=11 // pred_fallthru
          _
      $region12: #{tpu_custom_call.1} parent=5 // pred_fallthru
        _
      %p488 = scmp.lt.s32.totalorder %s27, 2
      // Predicated region
      $region69: #{tpu_custom_call.1} parent=5 // pred_check
        %p489 = pneg %p488
      $region70: #{tpu_custom_call.1} parent=5 // pred_check_branch
        %491 = sbr.rel (%p489) target = $region72
      $region71: #{tpu_custom_call.1} parent=5 // pred_region
        // Predicated region
        $region73: #{tpu_custom_call.1} parent=71 // pred_check
          %p492 = pneg %p59
        $region74: #{tpu_custom_call.1} parent=71 // pred_check_branch
          %494 = sbr.rel (%p492) target = $region76
        $region75: #{tpu_custom_call.1} parent=71 // pred_region
          %p495 = scmp.lt.s32.totalorder %s34, 1
          %s496 = scalar_select %p495, %s34, 1
          %s497 = smul.addr %s496, 2
          %s498 = smul.addr %s497, 8
          %s499 = scalar_lea.vmem %s0, %s498
        $region76: #{tpu_custom_call.1} parent=71 // pred_fallthru
          _
      $region72: #{tpu_custom_call.1} parent=5 // pred_fallthru
        _
      %p500 = scmp.le.s32.totalorder 1, %s27
      %p501 = scmp.lt.s32.totalorder %s27, 3
      %p502 = pnand %p500, %p501
      %p503 = pneg %p502
      // Predicated region
      $region77: #{tpu_custom_call.1} parent=5 // pred_check
        _
      $region78: #{tpu_custom_call.1} parent=5 // pred_check_branch
        %505 = sbr.rel (%p502) target = $region80
      $region79: #{tpu_custom_call.1} parent=5 // pred_region
        %s506 = ssub.s32 %s27, 1
        // Predicated region
        $region81: #{tpu_custom_call.1} parent=79 // pred_check
          %p507 = pneg %p149
        $region82: #{tpu_custom_call.1} parent=79 // pred_check_branch
          %509 = sbr.rel (%p507) target = $region84
        $region83: #{tpu_custom_call.1} parent=79 // pred_region
          %510 = dma.done [#allocation5], 16
        $region84: #{tpu_custom_call.1} parent=79 // pred_fallthru
          _
        // Predicated region
        $region85: #{tpu_custom_call.1} parent=79 // pred_check
          %p511 = pneg %p170
        $region86: #{tpu_custom_call.1} parent=79 // pred_check_branch
          %513 = sbr.rel (%p511) target = $region88
        $region87: #{tpu_custom_call.1} parent=79 // pred_region
          %514 = dma.done [#allocation8], 256
        $region88: #{tpu_custom_call.1} parent=79 // pred_fallthru
          _
        // Predicated region
        $region89: #{tpu_custom_call.1} parent=79 // pred_check
          %p515 = pneg %p191
        $region90: #{tpu_custom_call.1} parent=79 // pred_check_branch
          %517 = sbr.rel (%p515) target = $region92
        $region91: #{tpu_custom_call.1} parent=79 // pred_region
          %518 = dma.done [#allocation8], 16
        $region92: #{tpu_custom_call.1} parent=79 // pred_fallthru
          _
        // Predicated region
        $region93: #{tpu_custom_call.1} parent=79 // pred_check
          %p519 = pneg %p212
        $region94: #{tpu_custom_call.1} parent=79 // pred_check_branch
          %521 = sbr.rel (%p519) target = $region96
        $region95: #{tpu_custom_call.1} parent=79 // pred_region
          %522 = dma.done [#allocation11], 256
        $region96: #{tpu_custom_call.1} parent=79 // pred_fallthru
          _
        // Predicated region
        $region97: #{tpu_custom_call.1} parent=79 // pred_check
          %p523 = pneg %p233
        $region98: #{tpu_custom_call.1} parent=79 // pred_check_branch
          %525 = sbr.rel (%p523) target = $region100
        $region99: #{tpu_custom_call.1} parent=79 // pred_region
          %526 = dma.done [#allocation11], 16
        $region100: #{tpu_custom_call.1} parent=79 // pred_fallthru
          _
        %p527 = scmp.lt.s32.totalorder %s36, 1
        %s528 = scalar_select %p527, %s36, 1
        %s529 = smul.addr %s528, 2
        %s530 = smul.addr %s529, 8
        %s531 = scalar_lea.vmem %s0, %s530
        %p532 = pneg %p65
        %p533 = pneg %p62
        %p534 = pneg %p86
        %p535 = pneg %p83
        %p536 = pneg %p107
        %p537 = pneg %p104
        %p538 = pneg %p128
        %p539 = pneg %p125
        %p540 = pneg %p149
        %p541 = pneg %p146
        %p542 = pneg %p170
        %p543 = pneg %p167
        %p544 = pneg %p191
        %p545 = pneg %p188
        %p546 = pneg %p212
        %p547 = pneg %p209
        %p548 = pneg %p233
        %p549 = pneg %p230
        %p550 = pneg %p254
        %p551 = pneg %p251
        %p552 = pneg %p275
        %p553 = pneg %p272
        %p554 = pneg %p296
        %p555 = pneg %p293
        %p556 = pneg %p317
        %p557 = pneg %p314
        %p558 = pneg %p338
        %p559 = pneg %p335
        %p560 = pneg %p359
        %p561 = pneg %p356
        %p562 = pneg %p387
        %p563 = pneg %p384
        %s564 = sand.u32 %s374, 1
        %s565 = scalar_lea.sflag [#allocation6], %s564
        %s566 = sand.u32 %s374, 1
        %s567 = smul.addr %s566, 16
        %s568 = scalar_lea.vmem [#allocation13], %s567
        %p569 = scmp.lt.s32.totalorder %s36, 1
        %s570 = scalar_select %p569, %s36, 1
        %s571 = smul.addr %s570, 2
        %s572 = smul.addr %s571, 8
        %s573 = scalar_lea.vmem %s0, %s572
        %s574 = smul.u32 2, %s37
        %p576 = scmp.eq.s32.totalorder %s37, 0
        // Predicated region
        $region101: #{tpu_custom_call.1} parent=79 // pred_check
          %p577 = pneg %p576
        $region102: #{tpu_custom_call.1} parent=79 // pred_check_branch
          %579 = sbr.rel (%p577) target = $region104
        $region103: #{tpu_custom_call.1} parent=79 // pred_region
          %v580 = vld [vmem:[%s573] sm:$0xff]
          %v581 = vld [vmem:[%s573 + $0x8] sm:$0xff]
          %vm582 = vcmask 261120
          %v583 = vsel %vm582, %v580, 0.0
          %584 = vadd.xlane.f32.xlu0 %v583
          %v585 = vpop.xlane.xlu0 %584
          %v586 = vsel %vm582, %v581, 0.0
          %587 = vadd.xlane.f32.xlu0 %v586
          %v588 = vpop.xlane.xlu0 %587
          %v589 = vrcp.pop 32.0
          %v590 = vmul.f32 %v585, %v589
          %v591 = vmul.f32 %v588, %v589
          %v592 = vsub.f32 %v580, %v590
          %v593 = vsub.f32 %v581, %v591
          %v594 = vmul.f32 %v592, %v592
          %v595 = vmul.f32 %v593, %v593
          %v596 = vsel %vm582, %v594, 0.0
          %597 = vadd.xlane.f32.xlu0 %v596
          %v598 = vpop.xlane.xlu0 %597
          %v599 = vsel %vm582, %v595, 0.0
          %600 = vadd.xlane.f32.xlu0 %v599
          %v601 = vpop.xlane.xlu0 %600
          %v602 = vmul.f32 %v598, %v589
          %v603 = vmul.f32 %v601, %v589
          %v604 = vadd.f32 %v602, 1e-05
          %v605 = vadd.f32 %v603, 1e-05
          %v606 = vrsqrt.pop %v604
          %v607 = vrsqrt.pop %v605
          %v608 = vmul.f32 %v592, %v606
          %v609 = vmul.f32 %v593, %v607
          %v610 = vld [vmem:[%s1] sm:$0x1]
          %v612 = vlaneseq
          %v613 = vshrl.u32 %v612, 7
          %v614 = vsub.s32 0, %v613
          %v615 = vrot.slane %v610, %v614
          %v617 = vmul.f32 %v608, %v615
          %v618 = vmul.f32 %v609, %v615
          %v619 = vld [vmem:[%s2] sm:$0x1]
          %v621 = vlaneseq
          %v622 = vshrl.u32 %v621, 7
          %v623 = vsub.s32 0, %v622
          %v624 = vrot.slane %v619, %v623
          %v626 = vadd.f32 %v617, %v624
          %v627 = vadd.f32 %v618, %v624
          %v628 = vpack.c.bf16 %v627, %v626
          %v629 = vld [vmem:[#allocation7] sm:$0xf]
          %v630 = vld [vmem:[#allocation7 + $0x4] sm:$0xf]
          %v631 = vld [vmem:[#allocation7 + $0x8] sm:$0xf]
          %v632 = vld [vmem:[#allocation7 + $0xc] sm:$0xf]
          %v633 = vld [vmem:[#allocation9] sm:$0x1]
          %v635 = vlaneseq
          %v636 = vshrl.u32 %v635, 7
          %v637 = vsub.s32 0, %v636
          %v638 = vrot.slane %v633, %v637
          %v644 = vunpack.c.l.b16 %v629
          %v645 = vunpack.c.l.b16 %v630
          %v646 = vunpack.c.l.b16 %v631
          %v647 = vunpack.c.l.b16 %v632
          %v648 = vpack.c.b16 %v645, %v644
          %v649 = vpack.c.b16 %v647, %v646
          %v653 = vsel %vm582, %v628, 0
          %655 = vmatprep.subr.bf16.mxu0 0
          %656 = vmatpush1.bf16.msra.mxu0 %v648
          %657 = vmatprep.subr.bf16.mxu0 0
          %658 = vmatpush1.bf16.msra.mxu0 %v649
          %659 = vmatprep.subr.bf16.mxu0 0
          %660 = vmatpush1.bf16.msra.mxu0 0
          %661 = vmatprep.subr.bf16.mxu0 0
          %662 = vmatpush1.bf16.msra.mxu0 0
          %663 = vmatprep.subr.bf16.mxu0 0
          %664 = vmatpush1.bf16.msra.mxu0 0
          %665 = vmatprep.subr.bf16.mxu0 0
          %666 = vmatpush1.bf16.msra.mxu0 0
          %667 = vmatprep.subr.bf16.mxu0 0
          %668 = vmatpush1.bf16.msra.mxu0 0
          %669 = vmatprep.subr.bf16.mxu0 0
          %670 = vmatpush1.bf16.msra.mxu0 0
          %671 = vmatprep.subr.bf16.mxu0 0
          %672 = vmatpush1.bf16.msra.mxu0 0
          %673 = vmatprep.subr.bf16.mxu0 0
          %674 = vmatpush1.bf16.msra.mxu0 0
          %675 = vmatprep.subr.bf16.mxu0 0
          %676 = vmatpush1.bf16.msra.mxu0 0
          %677 = vmatprep.subr.bf16.mxu0 0
          %678 = vmatpush1.bf16.msra.mxu0 0
          %679 = vmatprep.subr.bf16.mxu0 0
          %680 = vmatpush1.bf16.msra.mxu0 0
          %681 = vmatprep.subr.bf16.mxu0 0
          %682 = vmatpush1.bf16.msra.mxu0 0
          %683 = vmatprep.subr.bf16.mxu0 0
          %684 = vmatpush1.bf16.msra.mxu0 0
          %685 = vmatprep.subr.bf16.mxu0 0
          %686 = vmatpush1.bf16.msra.mxu0 0
          %687 = vmatprep.mubr.bf16.mxu0 0
          %688 = vmatmul.mubr.bf16.gmra.mrb[0].mxu0 %v653
          %v689 = vpop.f32.mrb[0].mxu0
          %v690 = vadd.f32 %v638, %v689
          %v691 = vpop.f32.mrb[0].mxu0
          %v692 = vpop.f32.mrb[0].mxu0
          %v693 = vadd.f32 %v638, %v692
          %v694 = vpop.f32.mrb[0].mxu0
          %695 = vdwg.mxu0
          %v696 = vpack.c.bf16 %v693, %v690
          %698 = vrot.lane.b32.xlu0 %v696, 120
          %v699 = vpop.permute.xlu0 %698
          %700 = vrot.lane.b32.xlu0 %v696, 112
          %v701 = vpop.permute.xlu0 %700
          %702 = vrot.lane.b32.xlu0 %v696, 104
          %v703 = vpop.permute.xlu0 %702
          %v706 = vpack.i.b16 %v699, %v696
          %v708 = vshrl.u32 %v696, 16
          %v709 = vshrl.u32 %v699, 16
          %v710 = vpack.i.b16 %v709, %v708
          %v714 = vpack.i.b16 %v703, %v701
          %v716 = vshrl.u32 %v701, 16
          %v717 = vshrl.u32 %v703, 16
          %v718 = vpack.i.b16 %v717, %v716
          %v721 = vpack.i.b16 0, 0
          %v723 = vshrl.u32 0, 16
          %v724 = vpack.i.b16 %v723, %v723
          %v726 = vcombine.high %v706, %v721
          %v728 = vunpack.c.l.s4 1983009808
          %v729 = vunpack.c.0.s8 %v728
          %v730 = vlaneseq
          %v731 = vshrl.u32 %v730, 7
          %v732 = vsub.s32 %v729, %v731
          %v733 = vrot.slane %v706, %v732
          %v735 = vunpack.c.l.s4 1983009808
          %v736 = vunpack.c.0.s8 %v735
          %v737 = vlaneseq
          %v738 = vshrl.u32 %v737, 7
          %v739 = vsub.s32 %v736, %v738
          %v740 = vrot.slane %v726, %v739
          %v741 = vcombine.high %v714, %v721
          %v743 = vunpack.c.l.s4 1983009808
          %v744 = vunpack.c.0.s8 %v743
          %v745 = vlaneseq
          %v746 = vshrl.u32 %v745, 7
          %v747 = vsub.s32 %v744, %v746
          %v748 = vrot.slane %v714, %v747
          %v750 = vunpack.c.l.s4 1983009808
          %v751 = vunpack.c.0.s8 %v750
          %v752 = vlaneseq
          %v753 = vshrl.u32 %v752, 7
          %v754 = vsub.s32 %v751, %v753
          %v755 = vrot.slane %v741, %v754
          %v756 = vcombine.low %v733, %v748
          %v757 = vcombine.high %v733, %v748
          %v759 = vunpack.c.l.s4 1934713408
          %v760 = vunpack.c.0.s8 %v759
          %v761 = vlaneseq
          %v762 = vshrl.u32 %v761, 7
          %v763 = vsub.s32 %v760, %v762
          %v764 = vrot.slane %v756, %v763
          %v766 = vunpack.c.l.s4 1934713408
          %v767 = vunpack.c.0.s8 %v766
          %v768 = vlaneseq
          %v769 = vshrl.u32 %v768, 7
          %v770 = vsub.s32 %v767, %v769
          %v771 = vrot.slane %v757, %v770
          %v772 = vcombine.low %v740, %v755
          %v773 = vcombine.high %v740, %v755
          %v775 = vunpack.c.l.s4 1934713408
          %v776 = vunpack.c.0.s8 %v775
          %v777 = vlaneseq
          %v778 = vshrl.u32 %v777, 7
          %v779 = vsub.s32 %v776, %v778
          %v780 = vrot.slane %v772, %v779
          %v782 = vunpack.c.l.s4 1934713408
          %v783 = vunpack.c.0.s8 %v782
          %v784 = vlaneseq
          %v785 = vshrl.u32 %v784, 7
          %v786 = vsub.s32 %v783, %v785
          %v787 = vrot.slane %v773, %v786
          %v788 = vcombine.high %v764, 0
          %v789 = vcombine.high %v771, 0
          %v790 = vcombine.high %v780, 0
          %v791 = vcombine.high %v787, 0
          %v792 = vcombine.high %v710, %v724
          %v794 = vunpack.c.l.s4 1983009808
          %v795 = vunpack.c.0.s8 %v794
          %v796 = vlaneseq
          %v797 = vshrl.u32 %v796, 7
          %v798 = vsub.s32 %v795, %v797
          %v799 = vrot.slane %v710, %v798
          %v801 = vunpack.c.l.s4 1983009808
          %v802 = vunpack.c.0.s8 %v801
          %v803 = vlaneseq
          %v804 = vshrl.u32 %v803, 7
          %v805 = vsub.s32 %v802, %v804
          %v806 = vrot.slane %v792, %v805
          %v807 = vcombine.high %v718, %v724
          %v809 = vunpack.c.l.s4 1983009808
          %v810 = vunpack.c.0.s8 %v809
          %v811 = vlaneseq
          %v812 = vshrl.u32 %v811, 7
          %v813 = vsub.s32 %v810, %v812
          %v814 = vrot.slane %v718, %v813
          %v816 = vunpack.c.l.s4 1983009808
          %v817 = vunpack.c.0.s8 %v816
          %v818 = vlaneseq
          %v819 = vshrl.u32 %v818, 7
          %v820 = vsub.s32 %v817, %v819
          %v821 = vrot.slane %v807, %v820
          %v822 = vcombine.low %v799, %v814
          %v823 = vcombine.high %v799, %v814
          %v825 = vunpack.c.l.s4 1934713408
          %v826 = vunpack.c.0.s8 %v825
          %v827 = vlaneseq
          %v828 = vshrl.u32 %v827, 7
          %v829 = vsub.s32 %v826, %v828
          %v830 = vrot.slane %v822, %v829
          %v832 = vunpack.c.l.s4 1934713408
          %v833 = vunpack.c.0.s8 %v832
          %v834 = vlaneseq
          %v835 = vshrl.u32 %v834, 7
          %v836 = vsub.s32 %v833, %v835
          %v837 = vrot.slane %v823, %v836
          %v838 = vcombine.low %v806, %v821
          %v839 = vcombine.high %v806, %v821
          %v841 = vunpack.c.l.s4 1934713408
          %v842 = vunpack.c.0.s8 %v841
          %v843 = vlaneseq
          %v844 = vshrl.u32 %v843, 7
          %v845 = vsub.s32 %v842, %v844
          %v846 = vrot.slane %v838, %v845
          %v848 = vunpack.c.l.s4 1934713408
          %v849 = vunpack.c.0.s8 %v848
          %v850 = vlaneseq
          %v851 = vshrl.u32 %v850, 7
          %v852 = vsub.s32 %v849, %v851
          %v853 = vrot.slane %v839, %v852
          %v854 = vcombine.high %v830, 0
          %v855 = vcombine.high %v837, 0
          %v856 = vcombine.high %v846, 0
          %v857 = vcombine.high %v853, 0
          %v858 = vcombine.low %v764, %v771
          %v860 = vunpack.c.l.s4 1983009808
          %v861 = vunpack.c.0.s8 %v860
          %v862 = vlaneseq
          %v863 = vshrl.u32 %v862, 7
          %v864 = vsub.s32 %v861, %v863
          %v865 = vrot.slane %v858, %v864
          %v866 = vcombine.low %v788, %v789
          %v868 = vunpack.c.l.s4 1983009808
          %v869 = vunpack.c.0.s8 %v868
          %v870 = vlaneseq
          %v871 = vshrl.u32 %v870, 7
          %v872 = vsub.s32 %v869, %v871
          %v873 = vrot.slane %v866, %v872
          %v874 = vcombine.low %v780, %v787
          %v876 = vunpack.c.l.s4 1983009808
          %v877 = vunpack.c.0.s8 %v876
          %v878 = vlaneseq
          %v879 = vshrl.u32 %v878, 7
          %v880 = vsub.s32 %v877, %v879
          %v881 = vrot.slane %v874, %v880
          %v882 = vcombine.low %v790, %v791
          %v884 = vunpack.c.l.s4 1983009808
          %v885 = vunpack.c.0.s8 %v884
          %v886 = vlaneseq
          %v887 = vshrl.u32 %v886, 7
          %v888 = vsub.s32 %v885, %v887
          %v889 = vrot.slane %v882, %v888
          %v890 = vcombine.low %v865, %v873
          %v892 = vunpack.c.l.s4 1934713408
          %v893 = vunpack.c.0.s8 %v892
          %v894 = vlaneseq
          %v895 = vshrl.u32 %v894, 7
          %v896 = vsub.s32 %v893, %v895
          %v897 = vrot.slane %v890, %v896
          %v898 = vcombine.low %v881, %v889
          %v900 = vunpack.c.l.s4 1934713408
          %v901 = vunpack.c.0.s8 %v900
          %v902 = vlaneseq
          %v903 = vshrl.u32 %v902, 7
          %v904 = vsub.s32 %v901, %v903
          %v905 = vrot.slane %v898, %v904
          %v906 = vcombine.low %v897, %v905
          %v907 = vcombine.high %v897, %v905
          %v908 = vcombine.low %v830, %v837
          %v910 = vunpack.c.l.s4 1983009808
          %v911 = vunpack.c.0.s8 %v910
          %v912 = vlaneseq
          %v913 = vshrl.u32 %v912, 7
          %v914 = vsub.s32 %v911, %v913
          %v915 = vrot.slane %v908, %v914
          %v916 = vcombine.low %v854, %v855
          %v918 = vunpack.c.l.s4 1983009808
          %v919 = vunpack.c.0.s8 %v918
          %v920 = vlaneseq
          %v921 = vshrl.u32 %v920, 7
          %v922 = vsub.s32 %v919, %v921
          %v923 = vrot.slane %v916, %v922
          %v924 = vcombine.low %v846, %v853
          %v926 = vunpack.c.l.s4 1983009808
          %v927 = vunpack.c.0.s8 %v926
          %v928 = vlaneseq
          %v929 = vshrl.u32 %v928, 7
          %v930 = vsub.s32 %v927, %v929
          %v931 = vrot.slane %v924, %v930
          %v932 = vcombine.low %v856, %v857
          %v934 = vunpack.c.l.s4 1983009808
          %v935 = vunpack.c.0.s8 %v934
          %v936 = vlaneseq
          %v937 = vshrl.u32 %v936, 7
          %v938 = vsub.s32 %v935, %v937
          %v939 = vrot.slane %v932, %v938
          %v940 = vcombine.low %v915, %v923
          %v942 = vunpack.c.l.s4 1934713408
          %v943 = vunpack.c.0.s8 %v942
          %v944 = vlaneseq
          %v945 = vshrl.u32 %v944, 7
          %v946 = vsub.s32 %v943, %v945
          %v947 = vrot.slane %v940, %v946
          %v948 = vcombine.low %v931, %v939
          %v950 = vunpack.c.l.s4 1934713408
          %v951 = vunpack.c.0.s8 %v950
          %v952 = vlaneseq
          %v953 = vshrl.u32 %v952, 7
          %v954 = vsub.s32 %v951, %v953
          %v955 = vrot.slane %v948, %v954
          %v956 = vcombine.low %v947, %v955
          %v957 = vcombine.high %v947, %v955
          %v960 = vpack.i.b16 %v956, %v906
          %v962 = vshrl.u32 %v906, 16
          %v963 = vshrl.u32 %v956, 16
          %v964 = vpack.i.b16 %v963, %v962
          %v968 = vpack.i.b16 %v957, %v907
          %v970 = vshrl.u32 %v907, 16
          %v971 = vshrl.u32 %v957, 16
          %v972 = vpack.i.b16 %v971, %v970
          %vm974 = vcmask 64512
          %975 = vst.msk [vmem:[#allocation2] sm:$0xff] %vm974, %v960
          %976 = vst.msk [vmem:[#allocation2 + $0x8] sm:$0xff] %vm974, %v964
          %977 = vst.msk [vmem:[#allocation2 + $0x10] sm:$0xff] %vm974, %v968
          %978 = vst.msk [vmem:[#allocation2 + $0x18] sm:$0xff] %vm974, %v972
          %979 = vrot.lane.b32.xlu0 %v696, 96
          %v980 = vpop.permute.xlu0 %979
          %981 = vrot.lane.b32.xlu0 %v699, 96
          %v982 = vpop.permute.xlu0 %981
          %983 = vrot.lane.b32.xlu0 %v701, 96
          %v984 = vpop.permute.xlu0 %983
          %985 = vrot.lane.b32.xlu0 %v703, 96
          %v986 = vpop.permute.xlu0 %985
          %v989 = vpack.i.b16 %v982, %v980
          %v991 = vshrl.u32 %v980, 16
          %v992 = vshrl.u32 %v982, 16
          %v993 = vpack.i.b16 %v992, %v991
          %v997 = vpack.i.b16 %v986, %v984
          %v999 = vshrl.u32 %v984, 16
          %v1000 = vshrl.u32 %v986, 16
          %v1001 = vpack.i.b16 %v1000, %v999
          %v1003 = vcombine.high %v989, %v721
          %v1005 = vunpack.c.l.s4 1983009808
          %v1006 = vunpack.c.0.s8 %v1005
          %v1007 = vlaneseq
          %v1008 = vshrl.u32 %v1007, 7
          %v1009 = vsub.s32 %v1006, %v1008
          %v1010 = vrot.slane %v989, %v1009
          %v1012 = vunpack.c.l.s4 1983009808
          %v1013 = vunpack.c.0.s8 %v1012
          %v1014 = vlaneseq
          %v1015 = vshrl.u32 %v1014, 7
          %v1016 = vsub.s32 %v1013, %v1015
          %v1017 = vrot.slane %v1003, %v1016
          %v1018 = vcombine.high %v997, %v721
          %v1020 = vunpack.c.l.s4 1983009808
          %v1021 = vunpack.c.0.s8 %v1020
          %v1022 = vlaneseq
          %v1023 = vshrl.u32 %v1022, 7
          %v1024 = vsub.s32 %v1021, %v1023
          %v1025 = vrot.slane %v997, %v1024
          %v1027 = vunpack.c.l.s4 1983009808
          %v1028 = vunpack.c.0.s8 %v1027
          %v1029 = vlaneseq
          %v1030 = vshrl.u32 %v1029, 7
          %v1031 = vsub.s32 %v1028, %v1030
          %v1032 = vrot.slane %v1018, %v1031
          %v1033 = vcombine.low %v1010, %v1025
          %v1034 = vcombine.high %v1010, %v1025
          %v1036 = vunpack.c.l.s4 1934713408
          %v1037 = vunpack.c.0.s8 %v1036
          %v1038 = vlaneseq
          %v1039 = vshrl.u32 %v1038, 7
          %v1040 = vsub.s32 %v1037, %v1039
          %v1041 = vrot.slane %v1033, %v1040
          %v1043 = vunpack.c.l.s4 1934713408
          %v1044 = vunpack.c.0.s8 %v1043
          %v1045 = vlaneseq
          %v1046 = vshrl.u32 %v1045, 7
          %v1047 = vsub.s32 %v1044, %v1046
          %v1048 = vrot.slane %v1034, %v1047
          %v1049 = vcombine.low %v1017, %v1032
          %v1050 = vcombine.high %v1017, %v1032
          %v1052 = vunpack.c.l.s4 1934713408
          %v1053 = vunpack.c.0.s8 %v1052
          %v1054 = vlaneseq
          %v1055 = vshrl.u32 %v1054, 7
          %v1056 = vsub.s32 %v1053, %v1055
          %v1057 = vrot.slane %v1049, %v1056
          %v1059 = vunpack.c.l.s4 1934713408
          %v1060 = vunpack.c.0.s8 %v1059
          %v1061 = vlaneseq
          %v1062 = vshrl.u32 %v1061, 7
          %v1063 = vsub.s32 %v1060, %v1062
          %v1064 = vrot.slane %v1050, %v1063
          %v1065 = vcombine.high %v1041, 0
          %v1066 = vcombine.high %v1048, 0
          %v1067 = vcombine.high %v1057, 0
          %v1068 = vcombine.high %v1064, 0
          %v1069 = vcombine.high %v993, %v724
          %v1071 = vunpack.c.l.s4 1983009808
          %v1072 = vunpack.c.0.s8 %v1071
          %v1073 = vlaneseq
          %v1074 = vshrl.u32 %v1073, 7
          %v1075 = vsub.s32 %v1072, %v1074
          %v1076 = vrot.slane %v993, %v1075
          %v1078 = vunpack.c.l.s4 1983009808
          %v1079 = vunpack.c.0.s8 %v1078
          %v1080 = vlaneseq
          %v1081 = vshrl.u32 %v1080, 7
          %v1082 = vsub.s32 %v1079, %v1081
          %v1083 = vrot.slane %v1069, %v1082
          %v1084 = vcombine.high %v1001, %v724
          %v1086 = vunpack.c.l.s4 1983009808
          %v1087 = vunpack.c.0.s8 %v1086
          %v1088 = vlaneseq
          %v1089 = vshrl.u32 %v1088, 7
          %v1090 = vsub.s32 %v1087, %v1089
          %v1091 = vrot.slane %v1001, %v1090
          %v1093 = vunpack.c.l.s4 1983009808
          %v1094 = vunpack.c.0.s8 %v1093
          %v1095 = vlaneseq
          %v1096 = vshrl.u32 %v1095, 7
          %v1097 = vsub.s32 %v1094, %v1096
          %v1098 = vrot.slane %v1084, %v1097
          %v1099 = vcombine.low %v1076, %v1091
          %v1100 = vcombine.high %v1076, %v1091
          %v1102 = vunpack.c.l.s4 1934713408
          %v1103 = vunpack.c.0.s8 %v1102
          %v1104 = vlaneseq
          %v1105 = vshrl.u32 %v1104, 7
          %v1106 = vsub.s32 %v1103, %v1105
          %v1107 = vrot.slane %v1099, %v1106
          %v1109 = vunpack.c.l.s4 1934713408
          %v1110 = vunpack.c.0.s8 %v1109
          %v1111 = vlaneseq
          %v1112 = vshrl.u32 %v1111, 7
          %v1113 = vsub.s32 %v1110, %v1112
          %v1114 = vrot.slane %v1100, %v1113
          %v1115 = vcombine.low %v1083, %v1098
          %v1116 = vcombine.high %v1083, %v1098
          %v1118 = vunpack.c.l.s4 1934713408
          %v1119 = vunpack.c.0.s8 %v1118
          %v1120 = vlaneseq
          %v1121 = vshrl.u32 %v1120, 7
          %v1122 = vsub.s32 %v1119, %v1121
          %v1123 = vrot.slane %v1115, %v1122
          %v1125 = vunpack.c.l.s4 1934713408
          %v1126 = vunpack.c.0.s8 %v1125
          %v1127 = vlaneseq
          %v1128 = vshrl.u32 %v1127, 7
          %v1129 = vsub.s32 %v1126, %v1128
          %v1130 = vrot.slane %v1116, %v1129
          %v1131 = vcombine.high %v1107, 0
          %v1132 = vcombine.high %v1114, 0
          %v1133 = vcombine.high %v1123, 0
          %v1134 = vcombine.high %v1130, 0
          %v1135 = vcombine.low %v1041, %v1048
          %v1137 = vunpack.c.l.s4 1983009808
          %v1138 = vunpack.c.0.s8 %v1137
          %v1139 = vlaneseq
          %v1140 = vshrl.u32 %v1139, 7
          %v1141 = vsub.s32 %v1138, %v1140
          %v1142 = vrot.slane %v1135, %v1141
          %v1143 = vcombine.low %v1065, %v1066
          %v1145 = vunpack.c.l.s4 1983009808
          %v1146 = vunpack.c.0.s8 %v1145
          %v1147 = vlaneseq
          %v1148 = vshrl.u32 %v1147, 7
          %v1149 = vsub.s32 %v1146, %v1148
          %v1150 = vrot.slane %v1143, %v1149
          %v1151 = vcombine.low %v1057, %v1064
          %v1153 = vunpack.c.l.s4 1983009808
          %v1154 = vunpack.c.0.s8 %v1153
          %v1155 = vlaneseq
          %v1156 = vshrl.u32 %v1155, 7
          %v1157 = vsub.s32 %v1154, %v1156
          %v1158 = vrot.slane %v1151, %v1157
          %v1159 = vcombine.low %v1067, %v1068
          %v1161 = vunpack.c.l.s4 1983009808
          %v1162 = vunpack.c.0.s8 %v1161
          %v1163 = vlaneseq
          %v1164 = vshrl.u32 %v1163, 7
          %v1165 = vsub.s32 %v1162, %v1164
          %v1166 = vrot.slane %v1159, %v1165
          %v1167 = vcombine.low %v1142, %v1150
          %v1169 = vunpack.c.l.s4 1934713408
          %v1170 = vunpack.c.0.s8 %v1169
          %v1171 = vlaneseq
          %v1172 = vshrl.u32 %v1171, 7
          %v1173 = vsub.s32 %v1170, %v1172
          %v1174 = vrot.slane %v1167, %v1173
          %v1175 = vcombine.low %v1158, %v1166
          %v1177 = vunpack.c.l.s4 1934713408
          %v1178 = vunpack.c.0.s8 %v1177
          %v1179 = vlaneseq
          %v1180 = vshrl.u32 %v1179, 7
          %v1181 = vsub.s32 %v1178, %v1180
          %v1182 = vrot.slane %v1175, %v1181
          %v1183 = vcombine.low %v1174, %v1182
          %v1184 = vcombine.high %v1174, %v1182
          %v1185 = vcombine.low %v1107, %v1114
          %v1187 = vunpack.c.l.s4 1983009808
          %v1188 = vunpack.c.0.s8 %v1187
          %v1189 = vlaneseq
          %v1190 = vshrl.u32 %v1189, 7
          %v1191 = vsub.s32 %v1188, %v1190
          %v1192 = vrot.slane %v1185, %v1191
          %v1193 = vcombine.low %v1131, %v1132
          %v1195 = vunpack.c.l.s4 1983009808
          %v1196 = vunpack.c.0.s8 %v1195
          %v1197 = vlaneseq
          %v1198 = vshrl.u32 %v1197, 7
          %v1199 = vsub.s32 %v1196, %v1198
          %v1200 = vrot.slane %v1193, %v1199
          %v1201 = vcombine.low %v1123, %v1130
          %v1203 = vunpack.c.l.s4 1983009808
          %v1204 = vunpack.c.0.s8 %v1203
          %v1205 = vlaneseq
          %v1206 = vshrl.u32 %v1205, 7
          %v1207 = vsub.s32 %v1204, %v1206
          %v1208 = vrot.slane %v1201, %v1207
          %v1209 = vcombine.low %v1133, %v1134
          %v1211 = vunpack.c.l.s4 1983009808
          %v1212 = vunpack.c.0.s8 %v1211
          %v1213 = vlaneseq
          %v1214 = vshrl.u32 %v1213, 7
          %v1215 = vsub.s32 %v1212, %v1214
          %v1216 = vrot.slane %v1209, %v1215
          %v1217 = vcombine.low %v1192, %v1200
          %v1219 = vunpack.c.l.s4 1934713408
          %v1220 = vunpack.c.0.s8 %v1219
          %v1221 = vlaneseq
          %v1222 = vshrl.u32 %v1221, 7
          %v1223 = vsub.s32 %v1220, %v1222
          %v1224 = vrot.slane %v1217, %v1223
          %v1225 = vcombine.low %v1208, %v1216
          %v1227 = vunpack.c.l.s4 1934713408
          %v1228 = vunpack.c.0.s8 %v1227
          %v1229 = vlaneseq
          %v1230 = vshrl.u32 %v1229, 7
          %v1231 = vsub.s32 %v1228, %v1230
          %v1232 = vrot.slane %v1225, %v1231
          %v1233 = vcombine.low %v1224, %v1232
          %v1234 = vcombine.high %v1224, %v1232
          %v1237 = vpack.i.b16 %v1233, %v1183
          %v1239 = vshrl.u32 %v1183, 16
          %v1240 = vshrl.u32 %v1233, 16
          %v1241 = vpack.i.b16 %v1240, %v1239
          %v1245 = vpack.i.b16 %v1234, %v1184
          %v1247 = vshrl.u32 %v1184, 16
          %v1248 = vshrl.u32 %v1234, 16
          %v1249 = vpack.i.b16 %v1248, %v1247
          %1251 = vst.msk [vmem:[#allocation3] sm:$0xff] %vm974, %v1237
          %1252 = vst.msk [vmem:[#allocation3 + $0x8] sm:$0xff] %vm974, %v1241
          %1253 = vst.msk [vmem:[#allocation3 + $0x10] sm:$0xff] %vm974, %v1245
          %1254 = vst.msk [vmem:[#allocation3 + $0x18] sm:$0xff] %vm974, %v1249
        $region104: #{tpu_custom_call.1} parent=79 // pred_fallthru
          _
        %s1255 = smul.u32 %s37, 16
        %s1256 = scalar_lea.vmem %s573, %s1255
        %v1257 = vld [vmem:[%s1256] sm:$0xff]
        %v1258 = vld [vmem:[%s1256 + $0x8] sm:$0xff]
        %vm1259 = vcmask 261120
        %v1260 = vsel %vm1259, %v1257, 0.0
        %1261 = vadd.xlane.f32.xlu0 %v1260
        %v1262 = vpop.xlane.xlu0 %1261
        %v1263 = vsel %vm1259, %v1258, 0.0
        %1264 = vadd.xlane.f32.xlu0 %v1263
        %v1265 = vpop.xlane.xlu0 %1264
        %v1266 = vrcp.pop 32.0
        %v1267 = vmul.f32 %v1262, %v1266
        %v1268 = vmul.f32 %v1265, %v1266
        %v1269 = vsub.f32 %v1257, %v1267
        %v1270 = vsub.f32 %v1258, %v1268
        %v1271 = vmul.f32 %v1269, %v1269
        %v1272 = vmul.f32 %v1270, %v1270
        %v1273 = vsel %vm1259, %v1271, 0.0
        %1274 = vadd.xlane.f32.xlu0 %v1273
        %v1275 = vpop.xlane.xlu0 %1274
        %v1276 = vsel %vm1259, %v1272, 0.0
        %1277 = vadd.xlane.f32.xlu0 %v1276
        %v1278 = vpop.xlane.xlu0 %1277
        %v1279 = vmul.f32 %v1275, %v1266
        %v1280 = vmul.f32 %v1278, %v1266
        %v1281 = vadd.f32 %v1279, 1e-05
        %v1282 = vadd.f32 %v1280, 1e-05
        %v1283 = vrsqrt.pop %v1281
        %v1284 = vrsqrt.pop %v1282
        %v1285 = vmul.f32 %v1269, %v1283
        %v1286 = vmul.f32 %v1270, %v1284
        %v1287 = vld [vmem:[%s1] sm:$0x1]
        %v1289 = vlaneseq
        %v1290 = vshrl.u32 %v1289, 7
        %v1291 = vsub.s32 0, %v1290
        %v1292 = vrot.slane %v1287, %v1291
        %v1294 = vmul.f32 %v1285, %v1292
        %v1295 = vmul.f32 %v1286, %v1292
        %v1296 = vld [vmem:[%s2] sm:$0x1]
        %v1298 = vlaneseq
        %v1299 = vshrl.u32 %v1298, 7
        %v1300 = vsub.s32 0, %v1299
        %v1301 = vrot.slane %v1296, %v1300
        %v1303 = vadd.f32 %v1294, %v1301
        %v1304 = vadd.f32 %v1295, %v1301
        %v1305 = vpack.c.bf16 %v1304, %v1303
        %v1306 = vld [vmem:[%s3] sm:$0xf]
        %v1307 = vld [vmem:[%s3 + $0x4] sm:$0xf]
        %v1308 = vld [vmem:[%s3 + $0x8] sm:$0xf]
        %v1309 = vld [vmem:[%s3 + $0xc] sm:$0xf]
        %v1310 = vld [vmem:[#allocation4] sm:$0x1]
        %v1312 = vlaneseq
        %v1313 = vshrl.u32 %v1312, 7
        %v1314 = vsub.s32 0, %v1313
        %v1315 = vrot.slane %v1310, %v1314
        %v1321 = vunpack.c.l.b16 %v1306
        %v1322 = vunpack.c.l.b16 %v1307
        %v1323 = vunpack.c.l.b16 %v1308
        %v1324 = vunpack.c.l.b16 %v1309
        %v1325 = vpack.c.b16 %v1322, %v1321
        %v1326 = vpack.c.b16 %v1324, %v1323
        %v1330 = vsel %vm1259, %v1305, 0
        %1332 = vmatprep.subr.bf16.mxu0 0
        %1333 = vmatpush1.bf16.msra.mxu0 %v1325
        %1334 = vmatprep.subr.bf16.mxu0 0
        %1335 = vmatpush1.bf16.msra.mxu0 %v1326
        %1336 = vmatprep.subr.bf16.mxu0 0
        %1337 = vmatpush1.bf16.msra.mxu0 0
        %1338 = vmatprep.subr.bf16.mxu0 0
        %1339 = vmatpush1.bf16.msra.mxu0 0
        %1340 = vmatprep.subr.bf16.mxu0 0
        %1341 = vmatpush1.bf16.msra.mxu0 0
        %1342 = vmatprep.subr.bf16.mxu0 0
        %1343 = vmatpush1.bf16.msra.mxu0 0
        %1344 = vmatprep.subr.bf16.mxu0 0
        %1345 = vmatpush1.bf16.msra.mxu0 0
        %1346 = vmatprep.subr.bf16.mxu0 0
        %1347 = vmatpush1.bf16.msra.mxu0 0
        %1348 = vmatprep.subr.bf16.mxu0 0
        %1349 = vmatpush1.bf16.msra.mxu0 0
        %1350 = vmatprep.subr.bf16.mxu0 0
        %1351 = vmatpush1.bf16.msra.mxu0 0
        %1352 = vmatprep.subr.bf16.mxu0 0
        %1353 = vmatpush1.bf16.msra.mxu0 0
        %1354 = vmatprep.subr.bf16.mxu0 0
        %1355 = vmatpush1.bf16.msra.mxu0 0
        %1356 = vmatprep.subr.bf16.mxu0 0
        %1357 = vmatpush1.bf16.msra.mxu0 0
        %1358 = vmatprep.subr.bf16.mxu0 0
        %1359 = vmatpush1.bf16.msra.mxu0 0
        %1360 = vmatprep.subr.bf16.mxu0 0
        %1361 = vmatpush1.bf16.msra.mxu0 0
        %1362 = vmatprep.subr.bf16.mxu0 0
        %1363 = vmatpush1.bf16.msra.mxu0 0
        %1364 = vmatprep.mubr.bf16.mxu0 0
        %1365 = vmatmul.mubr.bf16.gmra.mrb[0].mxu0 %v1330
        %v1366 = vpop.f32.mrb[0].mxu0
        %v1367 = vadd.f32 %v1315, %v1366
        %v1368 = vpop.f32.mrb[0].mxu0
        %v1369 = vpop.f32.mrb[0].mxu0
        %v1370 = vadd.f32 %v1315, %v1369
        %v1371 = vpop.f32.mrb[0].mxu0
        %1372 = vdwg.mxu0
        %1375 = vrot.lane.b32.xlu0 %v1367, 120
        %v1376 = vpop.permute.xlu0 %1375
        %1377 = vrot.lane.b32.xlu0 %v1370, 120
        %v1378 = vpop.permute.xlu0 %1377
        %1381 = vrot.lane.b32.xlu0 %v1367, 112
        %v1382 = vpop.permute.xlu0 %1381
        %1383 = vrot.lane.b32.xlu0 %v1370, 112
        %v1384 = vpop.permute.xlu0 %1383
        %1387 = vrot.lane.b32.xlu0 %v1367, 104
        %v1388 = vpop.permute.xlu0 %1387
        %1389 = vrot.lane.b32.xlu0 %v1370, 104
        %v1390 = vpop.permute.xlu0 %1389
        %v1393 = vcombine.low %v1367, %v1382
        %v1394 = vcombine.high %v1367, %v1382
        %v1396 = vunpack.c.l.s4 1983009808
        %v1397 = vunpack.c.0.s8 %v1396
        %v1398 = vlaneseq
        %v1399 = vshrl.u32 %v1398, 7
        %v1400 = vsub.s32 %v1397, %v1399
        %v1401 = vrot.slane %v1393, %v1400
        %v1403 = vunpack.c.l.s4 1983009808
        %v1404 = vunpack.c.0.s8 %v1403
        %v1405 = vlaneseq
        %v1406 = vshrl.u32 %v1405, 7
        %v1407 = vsub.s32 %v1404, %v1406
        %v1408 = vrot.slane %v1394, %v1407
        %v1409 = vcombine.low %v1376, %v1388
        %v1410 = vcombine.high %v1376, %v1388
        %v1412 = vunpack.c.l.s4 1983009808
        %v1413 = vunpack.c.0.s8 %v1412
        %v1414 = vlaneseq
        %v1415 = vshrl.u32 %v1414, 7
        %v1416 = vsub.s32 %v1413, %v1415
        %v1417 = vrot.slane %v1409, %v1416
        %v1419 = vunpack.c.l.s4 1983009808
        %v1420 = vunpack.c.0.s8 %v1419
        %v1421 = vlaneseq
        %v1422 = vshrl.u32 %v1421, 7
        %v1423 = vsub.s32 %v1420, %v1422
        %v1424 = vrot.slane %v1410, %v1423
        %v1425 = vcombine.low %v1401, %v1417
        %v1426 = vcombine.high %v1401, %v1417
        %v1428 = vunpack.c.l.s4 1934713408
        %v1429 = vunpack.c.0.s8 %v1428
        %v1430 = vlaneseq
        %v1431 = vshrl.u32 %v1430, 7
        %v1432 = vsub.s32 %v1429, %v1431
        %v1433 = vrot.slane %v1425, %v1432
        %v1435 = vunpack.c.l.s4 1934713408
        %v1436 = vunpack.c.0.s8 %v1435
        %v1437 = vlaneseq
        %v1438 = vshrl.u32 %v1437, 7
        %v1439 = vsub.s32 %v1436, %v1438
        %v1440 = vrot.slane %v1426, %v1439
        %v1441 = vcombine.low %v1408, %v1424
        %v1442 = vcombine.high %v1408, %v1424
        %v1444 = vunpack.c.l.s4 1934713408
        %v1445 = vunpack.c.0.s8 %v1444
        %v1446 = vlaneseq
        %v1447 = vshrl.u32 %v1446, 7
        %v1448 = vsub.s32 %v1445, %v1447
        %v1449 = vrot.slane %v1441, %v1448
        %v1451 = vunpack.c.l.s4 1934713408
        %v1452 = vunpack.c.0.s8 %v1451
        %v1453 = vlaneseq
        %v1454 = vshrl.u32 %v1453, 7
        %v1455 = vsub.s32 %v1452, %v1454
        %v1456 = vrot.slane %v1442, %v1455
        %v1457 = vcombine.high %v1433, 0.0
        %v1458 = vcombine.high %v1440, 0.0
        %v1459 = vcombine.high %v1449, 0.0
        %v1460 = vcombine.high %v1456, 0.0
        %v1461 = vcombine.low %v1370, %v1384
        %v1462 = vcombine.high %v1370, %v1384
        %v1464 = vunpack.c.l.s4 1983009808
        %v1465 = vunpack.c.0.s8 %v1464
        %v1466 = vlaneseq
        %v1467 = vshrl.u32 %v1466, 7
        %v1468 = vsub.s32 %v1465, %v1467
        %v1469 = vrot.slane %v1461, %v1468
        %v1471 = vunpack.c.l.s4 1983009808
        %v1472 = vunpack.c.0.s8 %v1471
        %v1473 = vlaneseq
        %v1474 = vshrl.u32 %v1473, 7
        %v1475 = vsub.s32 %v1472, %v1474
        %v1476 = vrot.slane %v1462, %v1475
        %v1477 = vcombine.low %v1378, %v1390
        %v1478 = vcombine.high %v1378, %v1390
        %v1480 = vunpack.c.l.s4 1983009808
        %v1481 = vunpack.c.0.s8 %v1480
        %v1482 = vlaneseq
        %v1483 = vshrl.u32 %v1482, 7
        %v1484 = vsub.s32 %v1481, %v1483
        %v1485 = vrot.slane %v1477, %v1484
        %v1487 = vunpack.c.l.s4 1983009808
        %v1488 = vunpack.c.0.s8 %v1487
        %v1489 = vlaneseq
        %v1490 = vshrl.u32 %v1489, 7
        %v1491 = vsub.s32 %v1488, %v1490
        %v1492 = vrot.slane %v1478, %v1491
        %v1493 = vcombine.low %v1469, %v1485
        %v1494 = vcombine.high %v1469, %v1485
        %v1496 = vunpack.c.l.s4 1934713408
        %v1497 = vunpack.c.0.s8 %v1496
        %v1498 = vlaneseq
        %v1499 = vshrl.u32 %v1498, 7
        %v1500 = vsub.s32 %v1497, %v1499
        %v1501 = vrot.slane %v1493, %v1500
        %v1503 = vunpack.c.l.s4 1934713408
        %v1504 = vunpack.c.0.s8 %v1503
        %v1505 = vlaneseq
        %v1506 = vshrl.u32 %v1505, 7
        %v1507 = vsub.s32 %v1504, %v1506
        %v1508 = vrot.slane %v1494, %v1507
        %v1509 = vcombine.low %v1476, %v1492
        %v1510 = vcombine.high %v1476, %v1492
        %v1512 = vunpack.c.l.s4 1934713408
        %v1513 = vunpack.c.0.s8 %v1512
        %v1514 = vlaneseq
        %v1515 = vshrl.u32 %v1514, 7
        %v1516 = vsub.s32 %v1513, %v1515
        %v1517 = vrot.slane %v1509, %v1516
        %v1519 = vunpack.c.l.s4 1934713408
        %v1520 = vunpack.c.0.s8 %v1519
        %v1521 = vlaneseq
        %v1522 = vshrl.u32 %v1521, 7
        %v1523 = vsub.s32 %v1520, %v1522
        %v1524 = vrot.slane %v1510, %v1523
        %v1525 = vcombine.high %v1501, 0.0
        %v1526 = vcombine.high %v1508, 0.0
        %v1527 = vcombine.high %v1517, 0.0
        %v1528 = vcombine.high %v1524, 0.0
        %v1529 = vcombine.low %v1433, %v1440
        %v1531 = vunpack.c.l.s4 1983009808
        %v1532 = vunpack.c.0.s8 %v1531
        %v1533 = vlaneseq
        %v1534 = vshrl.u32 %v1533, 7
        %v1535 = vsub.s32 %v1532, %v1534
        %v1536 = vrot.slane %v1529, %v1535
        %v1537 = vcombine.low %v1457, %v1458
        %v1539 = vunpack.c.l.s4 1983009808
        %v1540 = vunpack.c.0.s8 %v1539
        %v1541 = vlaneseq
        %v1542 = vshrl.u32 %v1541, 7
        %v1543 = vsub.s32 %v1540, %v1542
        %v1544 = vrot.slane %v1537, %v1543
        %v1545 = vcombine.low %v1449, %v1456
        %v1547 = vunpack.c.l.s4 1983009808
        %v1548 = vunpack.c.0.s8 %v1547
        %v1549 = vlaneseq
        %v1550 = vshrl.u32 %v1549, 7
        %v1551 = vsub.s32 %v1548, %v1550
        %v1552 = vrot.slane %v1545, %v1551
        %v1553 = vcombine.low %v1459, %v1460
        %v1555 = vunpack.c.l.s4 1983009808
        %v1556 = vunpack.c.0.s8 %v1555
        %v1557 = vlaneseq
        %v1558 = vshrl.u32 %v1557, 7
        %v1559 = vsub.s32 %v1556, %v1558
        %v1560 = vrot.slane %v1553, %v1559
        %v1561 = vcombine.low %v1536, %v1544
        %v1562 = vcombine.high %v1536, %v1544
        %v1564 = vunpack.c.l.s4 1934713408
        %v1565 = vunpack.c.0.s8 %v1564
        %v1566 = vlaneseq
        %v1567 = vshrl.u32 %v1566, 7
        %v1568 = vsub.s32 %v1565, %v1567
        %v1569 = vrot.slane %v1561, %v1568
        %v1571 = vunpack.c.l.s4 1934713408
        %v1572 = vunpack.c.0.s8 %v1571
        %v1573 = vlaneseq
        %v1574 = vshrl.u32 %v1573, 7
        %v1575 = vsub.s32 %v1572, %v1574
        %v1576 = vrot.slane %v1562, %v1575
        %v1577 = vcombine.low %v1552, %v1560
        %v1578 = vcombine.high %v1552, %v1560
        %v1580 = vunpack.c.l.s4 1934713408
        %v1581 = vunpack.c.0.s8 %v1580
        %v1582 = vlaneseq
        %v1583 = vshrl.u32 %v1582, 7
        %v1584 = vsub.s32 %v1581, %v1583
        %v1585 = vrot.slane %v1577, %v1584
        %v1587 = vunpack.c.l.s4 1934713408
        %v1588 = vunpack.c.0.s8 %v1587
        %v1589 = vlaneseq
        %v1590 = vshrl.u32 %v1589, 7
        %v1591 = vsub.s32 %v1588, %v1590
        %v1592 = vrot.slane %v1578, %v1591
        %v1593 = vcombine.low %v1569, %v1585
        %v1594 = vcombine.high %v1569, %v1585
        %v1595 = vcombine.low %v1576, %v1592
        %v1596 = vcombine.high %v1576, %v1592
        %v1597 = vcombine.low %v1501, %v1508
        %v1599 = vunpack.c.l.s4 1983009808
        %v1600 = vunpack.c.0.s8 %v1599
        %v1601 = vlaneseq
        %v1602 = vshrl.u32 %v1601, 7
        %v1603 = vsub.s32 %v1600, %v1602
        %v1604 = vrot.slane %v1597, %v1603
        %v1605 = vcombine.low %v1525, %v1526
        %v1607 = vunpack.c.l.s4 1983009808
        %v1608 = vunpack.c.0.s8 %v1607
        %v1609 = vlaneseq
        %v1610 = vshrl.u32 %v1609, 7
        %v1611 = vsub.s32 %v1608, %v1610
        %v1612 = vrot.slane %v1605, %v1611
        %v1613 = vcombine.low %v1517, %v1524
        %v1615 = vunpack.c.l.s4 1983009808
        %v1616 = vunpack.c.0.s8 %v1615
        %v1617 = vlaneseq
        %v1618 = vshrl.u32 %v1617, 7
        %v1619 = vsub.s32 %v1616, %v1618
        %v1620 = vrot.slane %v1613, %v1619
        %v1621 = vcombine.low %v1527, %v1528
        %v1623 = vunpack.c.l.s4 1983009808
        %v1624 = vunpack.c.0.s8 %v1623
        %v1625 = vlaneseq
        %v1626 = vshrl.u32 %v1625, 7
        %v1627 = vsub.s32 %v1624, %v1626
        %v1628 = vrot.slane %v1621, %v1627
        %v1629 = vcombine.low %v1604, %v1612
        %v1630 = vcombine.high %v1604, %v1612
        %v1632 = vunpack.c.l.s4 1934713408
        %v1633 = vunpack.c.0.s8 %v1632
        %v1634 = vlaneseq
        %v1635 = vshrl.u32 %v1634, 7
        %v1636 = vsub.s32 %v1633, %v1635
        %v1637 = vrot.slane %v1629, %v1636
        %v1639 = vunpack.c.l.s4 1934713408
        %v1640 = vunpack.c.0.s8 %v1639
        %v1641 = vlaneseq
        %v1642 = vshrl.u32 %v1641, 7
        %v1643 = vsub.s32 %v1640, %v1642
        %v1644 = vrot.slane %v1630, %v1643
        %v1645 = vcombine.low %v1620, %v1628
        %v1646 = vcombine.high %v1620, %v1628
        %v1648 = vunpack.c.l.s4 1934713408
        %v1649 = vunpack.c.0.s8 %v1648
        %v1650 = vlaneseq
        %v1651 = vshrl.u32 %v1650, 7
        %v1652 = vsub.s32 %v1649, %v1651
        %v1653 = vrot.slane %v1645, %v1652
        %v1655 = vunpack.c.l.s4 1934713408
        %v1656 = vunpack.c.0.s8 %v1655
        %v1657 = vlaneseq
        %v1658 = vshrl.u32 %v1657, 7
        %v1659 = vsub.s32 %v1656, %v1658
        %v1660 = vrot.slane %v1646, %v1659
        %v1661 = vcombine.low %v1637, %v1653
        %v1662 = vcombine.high %v1637, %v1653
        %v1663 = vcombine.low %v1644, %v1660
        %v1664 = vcombine.high %v1644, %v1660
        %v1665 = vpack.c.bf16 %v1661, %v1593
        %v1666 = vpack.c.bf16 %v1662, %v1594
        %v1667 = vpack.c.bf16 %v1663, %v1595
        %v1668 = vpack.c.bf16 %v1664, %v1596
        %v1669 = vld [vmem:[#allocation2] sm:$0xff]
        %v1670 = vld [vmem:[#allocation2 + $0x8] sm:$0xff]
        %v1671 = vld [vmem:[#allocation2 + $0x10] sm:$0xff]
        %v1672 = vld [vmem:[#allocation2 + $0x18] sm:$0xff]
        %v1673 = vld [vmem:[#allocation3] sm:$0xff]
        %v1674 = vld [vmem:[#allocation3 + $0x8] sm:$0xff]
        %v1675 = vld [vmem:[#allocation3 + $0x10] sm:$0xff]
        %v1676 = vld [vmem:[#allocation3 + $0x18] sm:$0xff]
        %vm1677 = vcmask 64512
        %v1679 = vsel %vm1677, %v1665, 0
        %v1682 = vsel %vm1677, %v1669, 0
        %1684 = vmatprep.subr.bf16.mxu0 0
        %1685 = vmatpush1.bf16.xpose.msra.mxu0 %v1682
        %1686 = vmatprep.subr.bf16.mxu0 0
        %1687 = vmatpush1.bf16.xpose.msra.mxu0 0
        %1688 = vmatprep.subr.bf16.mxu0 0
        %1689 = vmatpush1.bf16.xpose.msra.mxu0 0
        %1690 = vmatprep.subr.bf16.mxu0 0
        %1691 = vmatpush1.bf16.xpose.msra.mxu0 0
        %1692 = vmatprep.subr.bf16.mxu0 0
        %1693 = vmatpush1.bf16.xpose.msra.mxu0 0
        %1694 = vmatprep.subr.bf16.mxu0 0
        %1695 = vmatpush1.bf16.xpose.msra.mxu0 0
        %1696 = vmatprep.subr.bf16.mxu0 0
        %1697 = vmatpush1.bf16.xpose.msra.mxu0 0
        %1698 = vmatprep.subr.bf16.mxu0 0
        %1699 = vmatpush1.bf16.xpose.msra.mxu0 0
        %1700 = vmatprep.subr.bf16.mxu0 0
        %1701 = vmatpush1.bf16.xpose.msra.mxu0 0
        %1702 = vmatprep.subr.bf16.mxu0 0
        %1703 = vmatpush1.bf16.xpose.msra.mxu0 0
        %1704 = vmatprep.subr.bf16.mxu0 0
        %1705 = vmatpush1.bf16.xpose.msra.mxu0 0
        %1706 = vmatprep.subr.bf16.mxu0 0
        %1707 = vmatpush1.bf16.xpose.msra.mxu0 0
        %1708 = vmatprep.subr.bf16.mxu0 0
        %1709 = vmatpush1.bf16.xpose.msra.mxu0 0
        %1710 = vmatprep.subr.bf16.mxu0 0
        %1711 = vmatpush1.bf16.xpose.msra.mxu0 0
        %1712 = vmatprep.subr.bf16.mxu0 0
        %1713 = vmatpush1.bf16.xpose.msra.mxu0 0
        %1714 = vmatprep.subr.bf16.mxu0 0
        %1715 = vmatpush1.bf16.xpose.msra.mxu0 0
        %1716 = vmatprep.mubr.bf16.mxu0 0
        %1717 = vmatmul.mubr.bf16.gmra.mrb[0].mxu0 %v1679
        %v1718 = vpop.f32.mrb[0].mxu0
        %v1719 = vadd.f32 0.0, %v1718
        %v1720 = vpop.f32.mrb[0].mxu0
        %v1721 = vpop.f32.mrb[0].mxu0
        %v1722 = vadd.f32 0.0, %v1721
        %v1723 = vpop.f32.mrb[0].mxu0
        %1724 = vdwg.mxu0
        %v1726 = vsel %vm1677, %v1666, 0
        %v1729 = vsel %vm1677, %v1670, 0
        %1731 = vmatprep.subr.bf16.mxu0 0
        %1732 = vmatpush1.bf16.xpose.msra.mxu0 %v1729
        %1733 = vmatprep.subr.bf16.mxu0 0
        %1734 = vmatpush1.bf16.xpose.msra.mxu0 0
        %1735 = vmatprep.subr.bf16.mxu0 0
        %1736 = vmatpush1.bf16.xpose.msra.mxu0 0
        %1737 = vmatprep.subr.bf16.mxu0 0
        %1738 = vmatpush1.bf16.xpose.msra.mxu0 0
        %1739 = vmatprep.subr.bf16.mxu0 0
        %1740 = vmatpush1.bf16.xpose.msra.mxu0 0
        %1741 = vmatprep.subr.bf16.mxu0 0
        %1742 = vmatpush1.bf16.xpose.msra.mxu0 0
        %1743 = vmatprep.subr.bf16.mxu0 0
        %1744 = vmatpush1.bf16.xpose.msra.mxu0 0
        %1745 = vmatprep.subr.bf16.mxu0 0
        %1746 = vmatpush1.bf16.xpose.msra.mxu0 0
        %1747 = vmatprep.subr.bf16.mxu0 0
        %1748 = vmatpush1.bf16.xpose.msra.mxu0 0
        %1749 = vmatprep.subr.bf16.mxu0 0
        %1750 = vmatpush1.bf16.xpose.msra.mxu0 0
        %1751 = vmatprep.subr.bf16.mxu0 0
        %1752 = vmatpush1.bf16.xpose.msra.mxu0 0
        %1753 = vmatprep.subr.bf16.mxu0 0
        %1754 = vmatpush1.bf16.xpose.msra.mxu0 0
        %1755 = vmatprep.subr.bf16.mxu0 0
        %1756 = vmatpush1.bf16.xpose.msra.mxu0 0
        %1757 = vmatprep.subr.bf16.mxu0 0
        %1758 = vmatpush1.bf16.xpose.msra.mxu0 0
        %1759 = vmatprep.subr.bf16.mxu0 0
        %1760 = vmatpush1.bf16.xpose.msra.mxu0 0
        %1761 = vmatprep.subr.bf16.mxu0 0
        %1762 = vmatpush1.bf16.xpose.msra.mxu0 0
        %1763 = vmatprep.mubr.bf16.mxu0 0
        %1764 = vmatmul.mubr.bf16.gmra.mrb[0].mxu0 %v1726
        %v1765 = vpop.f32.mrb[0].mxu0
        %v1766 = vadd.f32 0.0, %v1765
        %v1767 = vpop.f32.mrb[0].mxu0
        %v1768 = vpop.f32.mrb[0].mxu0
        %v1769 = vadd.f32 0.0, %v1768
        %v1770 = vpop.f32.mrb[0].mxu0
        %1771 = vdwg.mxu0
        %v1773 = vsel %vm1677, %v1667, 0
        %v1776 = vsel %vm1677, %v1671, 0
        %1778 = vmatprep.subr.bf16.mxu0 0
        %1779 = vmatpush1.bf16.xpose.msra.mxu0 %v1776
        %1780 = vmatprep.subr.bf16.mxu0 0
        %1781 = vmatpush1.bf16.xpose.msra.mxu0 0
        %1782 = vmatprep.subr.bf16.mxu0 0
        %1783 = vmatpush1.bf16.xpose.msra.mxu0 0
        %1784 = vmatprep.subr.bf16.mxu0 0
        %1785 = vmatpush1.bf16.xpose.msra.mxu0 0
        %1786 = vmatprep.subr.bf16.mxu0 0
        %1787 = vmatpush1.bf16.xpose.msra.mxu0 0
        %1788 = vmatprep.subr.bf16.mxu0 0
        %1789 = vmatpush1.bf16.xpose.msra.mxu0 0
        %1790 = vmatprep.subr.bf16.mxu0 0
        %1791 = vmatpush1.bf16.xpose.msra.mxu0 0
        %1792 = vmatprep.subr.bf16.mxu0 0
        %1793 = vmatpush1.bf16.xpose.msra.mxu0 0
        %1794 = vmatprep.subr.bf16.mxu0 0
        %1795 = vmatpush1.bf16.xpose.msra.mxu0 0
        %1796 = vmatprep.subr.bf16.mxu0 0
        %1797 = vmatpush1.bf16.xpose.msra.mxu0 0
        %1798 = vmatprep.subr.bf16.mxu0 0
        %1799 = vmatpush1.bf16.xpose.msra.mxu0 0
        %1800 = vmatprep.subr.bf16.mxu0 0
        %1801 = vmatpush1.bf16.xpose.msra.mxu0 0
        %1802 = vmatprep.subr.bf16.mxu0 0
        %1803 = vmatpush1.bf16.xpose.msra.mxu0 0
        %1804 = vmatprep.subr.bf16.mxu0 0
        %1805 = vmatpush1.bf16.xpose.msra.mxu0 0
        %1806 = vmatprep.subr.bf16.mxu0 0
        %1807 = vmatpush1.bf16.xpose.msra.mxu0 0
        %1808 = vmatprep.subr.bf16.mxu0 0
        %1809 = vmatpush1.bf16.xpose.msra.mxu0 0
        %1810 = vmatprep.mubr.bf16.mxu0 0
        %1811 = vmatmul.mubr.bf16.gmra.mrb[0].mxu0 %v1773
        %v1812 = vpop.f32.mrb[0].mxu0
        %v1813 = vadd.f32 0.0, %v1812
        %v1814 = vpop.f32.mrb[0].mxu0
        %v1815 = vpop.f32.mrb[0].mxu0
        %v1816 = vadd.f32 0.0, %v1815
        %v1817 = vpop.f32.mrb[0].mxu0
        %1818 = vdwg.mxu0
        %v1820 = vsel %vm1677, %v1668, 0
        %v1823 = vsel %vm1677, %v1672, 0
        %1825 = vmatprep.subr.bf16.mxu0 0
        %1826 = vmatpush1.bf16.xpose.msra.mxu0 %v1823
        %1827 = vmatprep.subr.bf16.mxu0 0
        %1828 = vmatpush1.bf16.xpose.msra.mxu0 0
        %1829 = vmatprep.subr.bf16.mxu0 0
        %1830 = vmatpush1.bf16.xpose.msra.mxu0 0
        %1831 = vmatprep.subr.bf16.mxu0 0
        %1832 = vmatpush1.bf16.xpose.msra.mxu0 0
        %1833 = vmatprep.subr.bf16.mxu0 0
        %1834 = vmatpush1.bf16.xpose.msra.mxu0 0
        %1835 = vmatprep.subr.bf16.mxu0 0
        %1836 = vmatpush1.bf16.xpose.msra.mxu0 0
        %1837 = vmatprep.subr.bf16.mxu0 0
        %1838 = vmatpush1.bf16.xpose.msra.mxu0 0
        %1839 = vmatprep.subr.bf16.mxu0 0
        %1840 = vmatpush1.bf16.xpose.msra.mxu0 0
        %1841 = vmatprep.subr.bf16.mxu0 0
        %1842 = vmatpush1.bf16.xpose.msra.mxu0 0
        %1843 = vmatprep.subr.bf16.mxu0 0
        %1844 = vmatpush1.bf16.xpose.msra.mxu0 0
        %1845 = vmatprep.subr.bf16.mxu0 0
        %1846 = vmatpush1.bf16.xpose.msra.mxu0 0
        %1847 = vmatprep.subr.bf16.mxu0 0
        %1848 = vmatpush1.bf16.xpose.msra.mxu0 0
        %1849 = vmatprep.subr.bf16.mxu0 0
        %1850 = vmatpush1.bf16.xpose.msra.mxu0 0
        %1851 = vmatprep.subr.bf16.mxu0 0
        %1852 = vmatpush1.bf16.xpose.msra.mxu0 0
        %1853 = vmatprep.subr.bf16.mxu0 0
        %1854 = vmatpush1.bf16.xpose.msra.mxu0 0
        %1855 = vmatprep.subr.bf16.mxu0 0
        %1856 = vmatpush1.bf16.xpose.msra.mxu0 0
        %1857 = vmatprep.mubr.bf16.mxu0 0
        %1858 = vmatmul.mubr.bf16.gmra.mrb[0].mxu0 %v1820
        %v1859 = vpop.f32.mrb[0].mxu0
        %v1860 = vadd.f32 0.0, %v1859
        %v1861 = vpop.f32.mrb[0].mxu0
        %v1862 = vpop.f32.mrb[0].mxu0
        %v1863 = vadd.f32 0.0, %v1862
        %v1864 = vpop.f32.mrb[0].mxu0
        %1865 = vdwg.mxu0
        %vm1866 = vcmask 130048
        %v1867 = vsel %vm1866, %v1719, -inf
        %1868 = vmax.xlane.f32.xlu0 %v1867
        %v1869 = vpop.xlane.xlu0 %1868
        %v1870 = vsel %vm1866, %v1722, -inf
        %1871 = vmax.xlane.f32.xlu0 %v1870
        %v1872 = vpop.xlane.xlu0 %1871
        %v1873 = vsel %vm1866, %v1766, -inf
        %1874 = vmax.xlane.f32.xlu0 %v1873
        %v1875 = vpop.xlane.xlu0 %1874
        %v1876 = vsel %vm1866, %v1769, -inf
        %1877 = vmax.xlane.f32.xlu0 %v1876
        %v1878 = vpop.xlane.xlu0 %1877
        %v1879 = vsel %vm1866, %v1813, -inf
        %1880 = vmax.xlane.f32.xlu0 %v1879
        %v1881 = vpop.xlane.xlu0 %1880
        %v1882 = vsel %vm1866, %v1816, -inf
        %1883 = vmax.xlane.f32.xlu0 %v1882
        %v1884 = vpop.xlane.xlu0 %1883
        %v1885 = vsel %vm1866, %v1860, -inf
        %1886 = vmax.xlane.f32.xlu0 %v1885
        %v1887 = vpop.xlane.xlu0 %1886
        %v1888 = vsel %vm1866, %v1863, -inf
        %1889 = vmax.xlane.f32.xlu0 %v1888
        %v1890 = vpop.xlane.xlu0 %1889
        %v1891 = vsub.f32 -inf, %v1869
        %v1892 = vsub.f32 -inf, %v1872
        %v1893 = vsub.f32 -inf, %v1875
        %v1894 = vsub.f32 -inf, %v1878
        %v1895 = vsub.f32 -inf, %v1881
        %v1896 = vsub.f32 -inf, %v1884
        %v1897 = vsub.f32 -inf, %v1887
        %v1898 = vsub.f32 -inf, %v1890
        %v1899 = vmul.f32 %v1891, 1.442695
        %v1900 = vpow.pop %v1899
        %v1901 = vmul.f32 %v1892, 1.442695
        %v1902 = vpow.pop %v1901
        %v1903 = vmul.f32 %v1893, 1.442695
        %v1904 = vpow.pop %v1903
        %v1905 = vmul.f32 %v1894, 1.442695
        %v1906 = vpow.pop %v1905
        %v1907 = vmul.f32 %v1895, 1.442695
        %v1908 = vpow.pop %v1907
        %v1909 = vmul.f32 %v1896, 1.442695
        %v1910 = vpow.pop %v1909
        %v1911 = vmul.f32 %v1897, 1.442695
        %v1912 = vpow.pop %v1911
        %v1913 = vmul.f32 %v1898, 1.442695
        %v1914 = vpow.pop %v1913
        %v1915 = vsub.f32 %v1719, %v1869
        %v1916 = vsub.f32 %v1722, %v1872
        %v1917 = vsub.f32 %v1766, %v1875
        %v1918 = vsub.f32 %v1769, %v1878
        %v1919 = vsub.f32 %v1813, %v1881
        %v1920 = vsub.f32 %v1816, %v1884
        %v1921 = vsub.f32 %v1860, %v1887
        %v1922 = vsub.f32 %v1863, %v1890
        %v1923 = vmul.f32 %v1915, 1.442695
        %v1924 = vpow.pop %v1923
        %v1925 = vmul.f32 %v1916, 1.442695
        %v1926 = vpow.pop %v1925
        %v1927 = vmul.f32 %v1917, 1.442695
        %v1928 = vpow.pop %v1927
        %v1929 = vmul.f32 %v1918, 1.442695
        %v1930 = vpow.pop %v1929
        %v1931 = vmul.f32 %v1919, 1.442695
        %v1932 = vpow.pop %v1931
        %v1933 = vmul.f32 %v1920, 1.442695
        %v1934 = vpow.pop %v1933
        %v1935 = vmul.f32 %v1921, 1.442695
        %v1936 = vpow.pop %v1935
        %v1937 = vmul.f32 %v1922, 1.442695
        %v1938 = vpow.pop %v1937
        %v1939 = vmul.f32 %v1900, 0.0
        %v1940 = vmul.f32 %v1902, 0.0
        %v1941 = vmul.f32 %v1904, 0.0
        %v1942 = vmul.f32 %v1906, 0.0
        %v1943 = vmul.f32 %v1908, 0.0
        %v1944 = vmul.f32 %v1910, 0.0
        %v1945 = vmul.f32 %v1912, 0.0
        %v1946 = vmul.f32 %v1914, 0.0
        %v1947 = vsel %vm1866, %v1924, 0.0
        %1948 = vadd.xlane.f32.xlu0 %v1947
        %v1949 = vpop.xlane.xlu0 %1948
        %v1950 = vsel %vm1866, %v1926, 0.0
        %1951 = vadd.xlane.f32.xlu0 %v1950
        %v1952 = vpop.xlane.xlu0 %1951
        %v1953 = vsel %vm1866, %v1928, 0.0
        %1954 = vadd.xlane.f32.xlu0 %v1953
        %v1955 = vpop.xlane.xlu0 %1954
        %v1956 = vsel %vm1866, %v1930, 0.0
        %1957 = vadd.xlane.f32.xlu0 %v1956
        %v1958 = vpop.xlane.xlu0 %1957
        %v1959 = vsel %vm1866, %v1932, 0.0
        %1960 = vadd.xlane.f32.xlu0 %v1959
        %v1961 = vpop.xlane.xlu0 %1960
        %v1962 = vsel %vm1866, %v1934, 0.0
        %1963 = vadd.xlane.f32.xlu0 %v1962
        %v1964 = vpop.xlane.xlu0 %1963
        %v1965 = vsel %vm1866, %v1936, 0.0
        %1966 = vadd.xlane.f32.xlu0 %v1965
        %v1967 = vpop.xlane.xlu0 %1966
        %v1968 = vsel %vm1866, %v1938, 0.0
        %1969 = vadd.xlane.f32.xlu0 %v1968
        %v1970 = vpop.xlane.xlu0 %1969
        %v1971 = vadd.f32 %v1939, %v1949
        %v1972 = vadd.f32 %v1940, %v1952
        %v1973 = vadd.f32 %v1941, %v1955
        %v1974 = vadd.f32 %v1942, %v1958
        %v1975 = vadd.f32 %v1943, %v1961
        %v1976 = vadd.f32 %v1944, %v1964
        %v1977 = vadd.f32 %v1945, %v1967
        %v1978 = vadd.f32 %v1946, %v1970
        %v1979 = vpack.c.bf16 %v1926, %v1924
        %v1980 = vpack.c.bf16 %v1930, %v1928
        %v1981 = vpack.c.bf16 %v1934, %v1932
        %v1982 = vpack.c.bf16 %v1938, %v1936
        %v1984 = vsel %vm1866, %v1979, 0
        %1986 = vmatprep.subr.bf16.mxu0 0
        %1987 = vmatpush1.bf16.msra.mxu0 %v1673
        %1988 = vmatprep.subr.bf16.mxu0 0
        %1989 = vmatpush1.bf16.msra.mxu0 0
        %1990 = vmatprep.subr.bf16.mxu0 0
        %1991 = vmatpush1.bf16.msra.mxu0 0
        %1992 = vmatprep.subr.bf16.mxu0 0
        %1993 = vmatpush1.bf16.msra.mxu0 0
        %1994 = vmatprep.subr.bf16.mxu0 0
        %1995 = vmatpush1.bf16.msra.mxu0 0
        %1996 = vmatprep.subr.bf16.mxu0 0
        %1997 = vmatpush1.bf16.msra.mxu0 0
        %1998 = vmatprep.subr.bf16.mxu0 0
        %1999 = vmatpush1.bf16.msra.mxu0 0
        %2000 = vmatprep.subr.bf16.mxu0 0
        %2001 = vmatpush1.bf16.msra.mxu0 0
        %2002 = vmatprep.subr.bf16.mxu0 0
        %2003 = vmatpush1.bf16.msra.mxu0 0
        %2004 = vmatprep.subr.bf16.mxu0 0
        %2005 = vmatpush1.bf16.msra.mxu0 0
        %2006 = vmatprep.subr.bf16.mxu0 0
        %2007 = vmatpush1.bf16.msra.mxu0 0
        %2008 = vmatprep.subr.bf16.mxu0 0
        %2009 = vmatpush1.bf16.msra.mxu0 0
        %2010 = vmatprep.subr.bf16.mxu0 0
        %2011 = vmatpush1.bf16.msra.mxu0 0
        %2012 = vmatprep.subr.bf16.mxu0 0
        %2013 = vmatpush1.bf16.msra.mxu0 0
        %2014 = vmatprep.subr.bf16.mxu0 0
        %2015 = vmatpush1.bf16.msra.mxu0 0
        %2016 = vmatprep.subr.bf16.mxu0 0
        %2017 = vmatpush1.bf16.msra.mxu0 0
        %2018 = vmatprep.mubr.bf16.mxu0 0
        %2019 = vmatmul.mubr.bf16.gmra.mrb[0].mxu0 %v1984
        %v2020 = vpop.f32.mrb[0].mxu0
        %v2021 = vadd.f32 0.0, %v2020
        %v2022 = vpop.f32.mrb[0].mxu0
        %v2023 = vpop.f32.mrb[0].mxu0
        %v2024 = vadd.f32 0.0, %v2023
        %v2025 = vpop.f32.mrb[0].mxu0
        %2026 = vdwg.mxu0
        %v2028 = vsel %vm1866, %v1980, 0
        %2030 = vmatprep.subr.bf16.mxu0 0
        %2031 = vmatpush1.bf16.msra.mxu0 %v1674
        %2032 = vmatprep.subr.bf16.mxu0 0
        %2033 = vmatpush1.bf16.msra.mxu0 0
        %2034 = vmatprep.subr.bf16.mxu0 0
        %2035 = vmatpush1.bf16.msra.mxu0 0
        %2036 = vmatprep.subr.bf16.mxu0 0
        %2037 = vmatpush1.bf16.msra.mxu0 0
        %2038 = vmatprep.subr.bf16.mxu0 0
        %2039 = vmatpush1.bf16.msra.mxu0 0
        %2040 = vmatprep.subr.bf16.mxu0 0
        %2041 = vmatpush1.bf16.msra.mxu0 0
        %2042 = vmatprep.subr.bf16.mxu0 0
        %2043 = vmatpush1.bf16.msra.mxu0 0
        %2044 = vmatprep.subr.bf16.mxu0 0
        %2045 = vmatpush1.bf16.msra.mxu0 0
        %2046 = vmatprep.subr.bf16.mxu0 0
        %2047 = vmatpush1.bf16.msra.mxu0 0
        %2048 = vmatprep.subr.bf16.mxu0 0
        %2049 = vmatpush1.bf16.msra.mxu0 0
        %2050 = vmatprep.subr.bf16.mxu0 0
        %2051 = vmatpush1.bf16.msra.mxu0 0
        %2052 = vmatprep.subr.bf16.mxu0 0
        %2053 = vmatpush1.bf16.msra.mxu0 0
        %2054 = vmatprep.subr.bf16.mxu0 0
        %2055 = vmatpush1.bf16.msra.mxu0 0
        %2056 = vmatprep.subr.bf16.mxu0 0
        %2057 = vmatpush1.bf16.msra.mxu0 0
        %2058 = vmatprep.subr.bf16.mxu0 0
        %2059 = vmatpush1.bf16.msra.mxu0 0
        %2060 = vmatprep.subr.bf16.mxu0 0
        %2061 = vmatpush1.bf16.msra.mxu0 0
        %2062 = vmatprep.mubr.bf16.mxu0 0
        %2063 = vmatmul.mubr.bf16.gmra.mrb[0].mxu0 %v2028
        %v2064 = vpop.f32.mrb[0].mxu0
        %v2065 = vadd.f32 0.0, %v2064
        %v2066 = vpop.f32.mrb[0].mxu0
        %v2067 = vpop.f32.mrb[0].mxu0
        %v2068 = vadd.f32 0.0, %v2067
        %v2069 = vpop.f32.mrb[0].mxu0
        %2070 = vdwg.mxu0
        %v2072 = vsel %vm1866, %v1981, 0
        %2074 = vmatprep.subr.bf16.mxu0 0
        %2075 = vmatpush1.bf16.msra.mxu0 %v1675
        %2076 = vmatprep.subr.bf16.mxu0 0
        %2077 = vmatpush1.bf16.msra.mxu0 0
        %2078 = vmatprep.subr.bf16.mxu0 0
        %2079 = vmatpush1.bf16.msra.mxu0 0
        %2080 = vmatprep.subr.bf16.mxu0 0
        %2081 = vmatpush1.bf16.msra.mxu0 0
        %2082 = vmatprep.subr.bf16.mxu0 0
        %2083 = vmatpush1.bf16.msra.mxu0 0
        %2084 = vmatprep.subr.bf16.mxu0 0
        %2085 = vmatpush1.bf16.msra.mxu0 0
        %2086 = vmatprep.subr.bf16.mxu0 0
        %2087 = vmatpush1.bf16.msra.mxu0 0
        %2088 = vmatprep.subr.bf16.mxu0 0
        %2089 = vmatpush1.bf16.msra.mxu0 0
        %2090 = vmatprep.subr.bf16.mxu0 0
        %2091 = vmatpush1.bf16.msra.mxu0 0
        %2092 = vmatprep.subr.bf16.mxu0 0
        %2093 = vmatpush1.bf16.msra.mxu0 0
        %2094 = vmatprep.subr.bf16.mxu0 0
        %2095 = vmatpush1.bf16.msra.mxu0 0
        %2096 = vmatprep.subr.bf16.mxu0 0
        %2097 = vmatpush1.bf16.msra.mxu0 0
        %2098 = vmatprep.subr.bf16.mxu0 0
        %2099 = vmatpush1.bf16.msra.mxu0 0
        %2100 = vmatprep.subr.bf16.mxu0 0
        %2101 = vmatpush1.bf16.msra.mxu0 0
        %2102 = vmatprep.subr.bf16.mxu0 0
        %2103 = vmatpush1.bf16.msra.mxu0 0
        %2104 = vmatprep.subr.bf16.mxu0 0
        %2105 = vmatpush1.bf16.msra.mxu0 0
        %2106 = vmatprep.mubr.bf16.mxu0 0
        %2107 = vmatmul.mubr.bf16.gmra.mrb[0].mxu0 %v2072
        %v2108 = vpop.f32.mrb[0].mxu0
        %v2109 = vadd.f32 0.0, %v2108
        %v2110 = vpop.f32.mrb[0].mxu0
        %v2111 = vpop.f32.mrb[0].mxu0
        %v2112 = vadd.f32 0.0, %v2111
        %v2113 = vpop.f32.mrb[0].mxu0
        %2114 = vdwg.mxu0
        %v2116 = vsel %vm1866, %v1982, 0
        %2118 = vmatprep.subr.bf16.mxu0 0
        %2119 = vmatpush1.bf16.msra.mxu0 %v1676
        %2120 = vmatprep.subr.bf16.mxu0 0
        %2121 = vmatpush1.bf16.msra.mxu0 0
        %2122 = vmatprep.subr.bf16.mxu0 0
        %2123 = vmatpush1.bf16.msra.mxu0 0
        %2124 = vmatprep.subr.bf16.mxu0 0
        %2125 = vmatpush1.bf16.msra.mxu0 0
        %2126 = vmatprep.subr.bf16.mxu0 0
        %2127 = vmatpush1.bf16.msra.mxu0 0
        %2128 = vmatprep.subr.bf16.mxu0 0
        %2129 = vmatpush1.bf16.msra.mxu0 0
        %2130 = vmatprep.subr.bf16.mxu0 0
        %2131 = vmatpush1.bf16.msra.mxu0 0
        %2132 = vmatprep.subr.bf16.mxu0 0
        %2133 = vmatpush1.bf16.msra.mxu0 0
        %2134 = vmatprep.subr.bf16.mxu0 0
        %2135 = vmatpush1.bf16.msra.mxu0 0
        %2136 = vmatprep.subr.bf16.mxu0 0
        %2137 = vmatpush1.bf16.msra.mxu0 0
        %2138 = vmatprep.subr.bf16.mxu0 0
        %2139 = vmatpush1.bf16.msra.mxu0 0
        %2140 = vmatprep.subr.bf16.mxu0 0
        %2141 = vmatpush1.bf16.msra.mxu0 0
        %2142 = vmatprep.subr.bf16.mxu0 0
        %2143 = vmatpush1.bf16.msra.mxu0 0
        %2144 = vmatprep.subr.bf16.mxu0 0
        %2145 = vmatpush1.bf16.msra.mxu0 0
        %2146 = vmatprep.subr.bf16.mxu0 0
        %2147 = vmatpush1.bf16.msra.mxu0 0
        %2148 = vmatprep.subr.bf16.mxu0 0
        %2149 = vmatpush1.bf16.msra.mxu0 0
        %2150 = vmatprep.mubr.bf16.mxu0 0
        %2151 = vmatmul.mubr.bf16.gmra.mrb[0].mxu0 %v2116
        %v2152 = vpop.f32.mrb[0].mxu0
        %v2153 = vadd.f32 0.0, %v2152
        %v2154 = vpop.f32.mrb[0].mxu0
        %v2155 = vpop.f32.mrb[0].mxu0
        %v2156 = vadd.f32 0.0, %v2155
        %v2157 = vpop.f32.mrb[0].mxu0
        %2158 = vdwg.mxu0
        %v2159 = vadd.f32 %v1939, %v2021
        %v2160 = vadd.f32 %v1940, %v2024
        %v2161 = vadd.f32 %v1941, %v2065
        %v2162 = vadd.f32 %v1942, %v2068
        %v2163 = vadd.f32 %v1943, %v2109
        %v2164 = vadd.f32 %v1944, %v2112
        %v2165 = vadd.f32 %v1945, %v2153
        %v2166 = vadd.f32 %v1946, %v2156
        %v2167 = vrcp.pop %v1971
        %v2168 = vrcp.pop %v1972
        %v2169 = vrcp.pop %v1973
        %v2170 = vrcp.pop %v1974
        %v2171 = vrcp.pop %v1975
        %v2172 = vrcp.pop %v1976
        %v2173 = vrcp.pop %v1977
        %v2174 = vrcp.pop %v1978
        %v2175 = vmul.f32 %v2159, %v2167
        %v2176 = vmul.f32 %v2160, %v2168
        %v2177 = vmul.f32 %v2161, %v2169
        %v2178 = vmul.f32 %v2162, %v2170
        %v2179 = vmul.f32 %v2163, %v2171
        %v2180 = vmul.f32 %v2164, %v2172
        %v2181 = vmul.f32 %v2165, %v2173
        %v2182 = vmul.f32 %v2166, %v2174
        %v2183 = vcombine.low %v2175, %v2179
        %v2184 = vcombine.high %v2175, %v2179
        %v2186 = vunpack.c.l.s4 1983009808
        %v2187 = vunpack.c.0.s8 %v2186
        %v2188 = vlaneseq
        %v2189 = vshrl.u32 %v2188, 7
        %v2190 = vsub.s32 %v2187, %v2189
        %v2191 = vrot.slane %v2183, %v2190
        %v2193 = vunpack.c.l.s4 1983009808
        %v2194 = vunpack.c.0.s8 %v2193
        %v2195 = vlaneseq
        %v2196 = vshrl.u32 %v2195, 7
        %v2197 = vsub.s32 %v2194, %v2196
        %v2198 = vrot.slane %v2184, %v2197
        %v2199 = vcombine.low %v2177, %v2181
        %v2200 = vcombine.high %v2177, %v2181
        %v2202 = vunpack.c.l.s4 1983009808
        %v2203 = vunpack.c.0.s8 %v2202
        %v2204 = vlaneseq
        %v2205 = vshrl.u32 %v2204, 7
        %v2206 = vsub.s32 %v2203, %v2205
        %v2207 = vrot.slane %v2199, %v2206
        %v2209 = vunpack.c.l.s4 1983009808
        %v2210 = vunpack.c.0.s8 %v2209
        %v2211 = vlaneseq
        %v2212 = vshrl.u32 %v2211, 7
        %v2213 = vsub.s32 %v2210, %v2212
        %v2214 = vrot.slane %v2200, %v2213
        %v2215 = vcombine.low %v2191, %v2207
        %v2216 = vcombine.high %v2191, %v2207
        %v2218 = vunpack.c.l.s4 1934713408
        %v2219 = vunpack.c.0.s8 %v2218
        %v2220 = vlaneseq
        %v2221 = vshrl.u32 %v2220, 7
        %v2222 = vsub.s32 %v2219, %v2221
        %v2223 = vrot.slane %v2215, %v2222
        %v2225 = vunpack.c.l.s4 1934713408
        %v2226 = vunpack.c.0.s8 %v2225
        %v2227 = vlaneseq
        %v2228 = vshrl.u32 %v2227, 7
        %v2229 = vsub.s32 %v2226, %v2228
        %v2230 = vrot.slane %v2216, %v2229
        %v2231 = vcombine.low %v2198, %v2214
        %v2232 = vcombine.high %v2198, %v2214
        %v2234 = vunpack.c.l.s4 1934713408
        %v2235 = vunpack.c.0.s8 %v2234
        %v2236 = vlaneseq
        %v2237 = vshrl.u32 %v2236, 7
        %v2238 = vsub.s32 %v2235, %v2237
        %v2239 = vrot.slane %v2231, %v2238
        %v2241 = vunpack.c.l.s4 1934713408
        %v2242 = vunpack.c.0.s8 %v2241
        %v2243 = vlaneseq
        %v2244 = vshrl.u32 %v2243, 7
        %v2245 = vsub.s32 %v2242, %v2244
        %v2246 = vrot.slane %v2232, %v2245
        %v2247 = vcombine.high %v2223, 0.0
        %v2248 = vcombine.high %v2230, 0.0
        %v2249 = vcombine.high %v2239, 0.0
        %v2250 = vcombine.high %v2246, 0.0
        %v2251 = vcombine.low %v2176, %v2180
        %v2252 = vcombine.high %v2176, %v2180
        %v2254 = vunpack.c.l.s4 1983009808
        %v2255 = vunpack.c.0.s8 %v2254
        %v2256 = vlaneseq
        %v2257 = vshrl.u32 %v2256, 7
        %v2258 = vsub.s32 %v2255, %v2257
        %v2259 = vrot.slane %v2251, %v2258
        %v2261 = vunpack.c.l.s4 1983009808
        %v2262 = vunpack.c.0.s8 %v2261
        %v2263 = vlaneseq
        %v2264 = vshrl.u32 %v2263, 7
        %v2265 = vsub.s32 %v2262, %v2264
        %v2266 = vrot.slane %v2252, %v2265
        %v2267 = vcombine.low %v2178, %v2182
        %v2268 = vcombine.high %v2178, %v2182
        %v2270 = vunpack.c.l.s4 1983009808
        %v2271 = vunpack.c.0.s8 %v2270
        %v2272 = vlaneseq
        %v2273 = vshrl.u32 %v2272, 7
        %v2274 = vsub.s32 %v2271, %v2273
        %v2275 = vrot.slane %v2267, %v2274
        %v2277 = vunpack.c.l.s4 1983009808
        %v2278 = vunpack.c.0.s8 %v2277
        %v2279 = vlaneseq
        %v2280 = vshrl.u32 %v2279, 7
        %v2281 = vsub.s32 %v2278, %v2280
        %v2282 = vrot.slane %v2268, %v2281
        %v2283 = vcombine.low %v2259, %v2275
        %v2284 = vcombine.high %v2259, %v2275
        %v2286 = vunpack.c.l.s4 1934713408
        %v2287 = vunpack.c.0.s8 %v2286
        %v2288 = vlaneseq
        %v2289 = vshrl.u32 %v2288, 7
        %v2290 = vsub.s32 %v2287, %v2289
        %v2291 = vrot.slane %v2283, %v2290
        %v2293 = vunpack.c.l.s4 1934713408
        %v2294 = vunpack.c.0.s8 %v2293
        %v2295 = vlaneseq
        %v2296 = vshrl.u32 %v2295, 7
        %v2297 = vsub.s32 %v2294, %v2296
        %v2298 = vrot.slane %v2284, %v2297
        %v2299 = vcombine.low %v2266, %v2282
        %v2300 = vcombine.high %v2266, %v2282
        %v2302 = vunpack.c.l.s4 1934713408
        %v2303 = vunpack.c.0.s8 %v2302
        %v2304 = vlaneseq
        %v2305 = vshrl.u32 %v2304, 7
        %v2306 = vsub.s32 %v2303, %v2305
        %v2307 = vrot.slane %v2299, %v2306
        %v2309 = vunpack.c.l.s4 1934713408
        %v2310 = vunpack.c.0.s8 %v2309
        %v2311 = vlaneseq
        %v2312 = vshrl.u32 %v2311, 7
        %v2313 = vsub.s32 %v2310, %v2312
        %v2314 = vrot.slane %v2300, %v2313
        %v2315 = vcombine.high %v2291, 0.0
        %v2316 = vcombine.high %v2298, 0.0
        %v2317 = vcombine.high %v2307, 0.0
        %v2318 = vcombine.high %v2314, 0.0
        %v2319 = vcombine.low %v2223, %v2230
        %v2321 = vunpack.c.l.s4 1983009808
        %v2322 = vunpack.c.0.s8 %v2321
        %v2323 = vlaneseq
        %v2324 = vshrl.u32 %v2323, 7
        %v2325 = vsub.s32 %v2322, %v2324
        %v2326 = vrot.slane %v2319, %v2325
        %v2327 = vcombine.low %v2247, %v2248
        %v2329 = vunpack.c.l.s4 1983009808
        %v2330 = vunpack.c.0.s8 %v2329
        %v2331 = vlaneseq
        %v2332 = vshrl.u32 %v2331, 7
        %v2333 = vsub.s32 %v2330, %v2332
        %v2334 = vrot.slane %v2327, %v2333
        %v2335 = vcombine.low %v2239, %v2246
        %v2337 = vunpack.c.l.s4 1983009808
        %v2338 = vunpack.c.0.s8 %v2337
        %v2339 = vlaneseq
        %v2340 = vshrl.u32 %v2339, 7
        %v2341 = vsub.s32 %v2338, %v2340
        %v2342 = vrot.slane %v2335, %v2341
        %v2343 = vcombine.low %v2249, %v2250
        %v2345 = vunpack.c.l.s4 1983009808
        %v2346 = vunpack.c.0.s8 %v2345
        %v2347 = vlaneseq
        %v2348 = vshrl.u32 %v2347, 7
        %v2349 = vsub.s32 %v2346, %v2348
        %v2350 = vrot.slane %v2343, %v2349
        %v2351 = vcombine.low %v2326, %v2334
        %v2352 = vcombine.high %v2326, %v2334
        %v2354 = vunpack.c.l.s4 1934713408
        %v2355 = vunpack.c.0.s8 %v2354
        %v2356 = vlaneseq
        %v2357 = vshrl.u32 %v2356, 7
        %v2358 = vsub.s32 %v2355, %v2357
        %v2359 = vrot.slane %v2351, %v2358
        %v2361 = vunpack.c.l.s4 1934713408
        %v2362 = vunpack.c.0.s8 %v2361
        %v2363 = vlaneseq
        %v2364 = vshrl.u32 %v2363, 7
        %v2365 = vsub.s32 %v2362, %v2364
        %v2366 = vrot.slane %v2352, %v2365
        %v2367 = vcombine.low %v2342, %v2350
        %v2368 = vcombine.high %v2342, %v2350
        %v2370 = vunpack.c.l.s4 1934713408
        %v2371 = vunpack.c.0.s8 %v2370
        %v2372 = vlaneseq
        %v2373 = vshrl.u32 %v2372, 7
        %v2374 = vsub.s32 %v2371, %v2373
        %v2375 = vrot.slane %v2367, %v2374
        %v2377 = vunpack.c.l.s4 1934713408
        %v2378 = vunpack.c.0.s8 %v2377
        %v2379 = vlaneseq
        %v2380 = vshrl.u32 %v2379, 7
        %v2381 = vsub.s32 %v2378, %v2380
        %v2382 = vrot.slane %v2368, %v2381
        %v2383 = vcombine.low %v2359, %v2375
        %v2384 = vcombine.high %v2359, %v2375
        %v2385 = vcombine.low %v2366, %v2382
        %v2386 = vcombine.high %v2366, %v2382
        %v2387 = vcombine.low %v2291, %v2298
        %v2389 = vunpack.c.l.s4 1983009808
        %v2390 = vunpack.c.0.s8 %v2389
        %v2391 = vlaneseq
        %v2392 = vshrl.u32 %v2391, 7
        %v2393 = vsub.s32 %v2390, %v2392
        %v2394 = vrot.slane %v2387, %v2393
        %v2395 = vcombine.low %v2315, %v2316
        %v2397 = vunpack.c.l.s4 1983009808
        %v2398 = vunpack.c.0.s8 %v2397
        %v2399 = vlaneseq
        %v2400 = vshrl.u32 %v2399, 7
        %v2401 = vsub.s32 %v2398, %v2400
        %v2402 = vrot.slane %v2395, %v2401
        %v2403 = vcombine.low %v2307, %v2314
        %v2405 = vunpack.c.l.s4 1983009808
        %v2406 = vunpack.c.0.s8 %v2405
        %v2407 = vlaneseq
        %v2408 = vshrl.u32 %v2407, 7
        %v2409 = vsub.s32 %v2406, %v2408
        %v2410 = vrot.slane %v2403, %v2409
        %v2411 = vcombine.low %v2317, %v2318
        %v2413 = vunpack.c.l.s4 1983009808
        %v2414 = vunpack.c.0.s8 %v2413
        %v2415 = vlaneseq
        %v2416 = vshrl.u32 %v2415, 7
        %v2417 = vsub.s32 %v2414, %v2416
        %v2418 = vrot.slane %v2411, %v2417
        %v2419 = vcombine.low %v2394, %v2402
        %v2420 = vcombine.high %v2394, %v2402
        %v2422 = vunpack.c.l.s4 1934713408
        %v2423 = vunpack.c.0.s8 %v2422
        %v2424 = vlaneseq
        %v2425 = vshrl.u32 %v2424, 7
        %v2426 = vsub.s32 %v2423, %v2425
        %v2427 = vrot.slane %v2419, %v2426
        %v2429 = vunpack.c.l.s4 1934713408
        %v2430 = vunpack.c.0.s8 %v2429
        %v2431 = vlaneseq
        %v2432 = vshrl.u32 %v2431, 7
        %v2433 = vsub.s32 %v2430, %v2432
        %v2434 = vrot.slane %v2420, %v2433
        %v2435 = vcombine.low %v2410, %v2418
        %v2436 = vcombine.high %v2410, %v2418
        %v2438 = vunpack.c.l.s4 1934713408
        %v2439 = vunpack.c.0.s8 %v2438
        %v2440 = vlaneseq
        %v2441 = vshrl.u32 %v2440, 7
        %v2442 = vsub.s32 %v2439, %v2441
        %v2443 = vrot.slane %v2435, %v2442
        %v2445 = vunpack.c.l.s4 1934713408
        %v2446 = vunpack.c.0.s8 %v2445
        %v2447 = vlaneseq
        %v2448 = vshrl.u32 %v2447, 7
        %v2449 = vsub.s32 %v2446, %v2448
        %v2450 = vrot.slane %v2436, %v2449
        %v2451 = vcombine.low %v2427, %v2443
        %v2452 = vcombine.high %v2427, %v2443
        %v2453 = vcombine.low %v2434, %v2450
        %v2454 = vcombine.high %v2434, %v2450
        %2457 = vrot.lane.b32.xlu0 %v2384, 8
        %v2458 = vpop.permute.xlu0 %2457
        %2459 = vrot.lane.b32.xlu0 %v2452, 8
        %v2460 = vpop.permute.xlu0 %2459
        %2465 = vrot.lane.b32.xlu0 %v2385, 16
        %v2466 = vpop.permute.xlu0 %2465
        %2467 = vrot.lane.b32.xlu0 %v2453, 16
        %v2468 = vpop.permute.xlu0 %2467
        %2473 = vrot.lane.b32.xlu0 %v2386, 24
        %v2474 = vpop.permute.xlu0 %2473
        %2475 = vrot.lane.b32.xlu0 %v2454, 24
        %v2476 = vpop.permute.xlu0 %2475
        %v2479 = vsel %vm1677, %v2383, %v2458
        %v2480 = vsel %vm1677, %v2451, %v2460
        %v2481 = vsel %vm1866, %v2479, %v2466
        %v2482 = vsel %vm1866, %v2480, %v2468
        %vm2483 = vcmask 195584
        %v2484 = vsel %vm2483, %v2481, %v2474
        %v2485 = vsel %vm2483, %v2482, %v2476
        %v2486 = vpack.c.bf16 %v2485, %v2484
        %v2487 = vld [vmem:[#allocation10] sm:$0xf]
        %v2488 = vld [vmem:[#allocation10 + $0x4] sm:$0xf]
        %v2489 = vld [vmem:[#allocation10 + $0x8] sm:$0xf]
        %v2490 = vld [vmem:[#allocation10 + $0xc] sm:$0xf]
        %v2491 = vld [vmem:[#allocation12] sm:$0x1]
        %v2493 = vlaneseq
        %v2494 = vshrl.u32 %v2493, 7
        %v2495 = vsub.s32 0, %v2494
        %v2496 = vrot.slane %v2491, %v2495
        %v2502 = vunpack.c.l.b16 %v2487
        %v2503 = vunpack.c.l.b16 %v2488
        %v2504 = vunpack.c.l.b16 %v2489
        %v2505 = vunpack.c.l.b16 %v2490
        %v2506 = vpack.c.b16 %v2503, %v2502
        %v2507 = vpack.c.b16 %v2505, %v2504
        %v2511 = vsel %vm1259, %v2486, 0
        %2513 = vmatprep.subr.bf16.mxu0 0
        %2514 = vmatpush1.bf16.msra.mxu0 %v2506
        %2515 = vmatprep.subr.bf16.mxu0 0
        %2516 = vmatpush1.bf16.msra.mxu0 %v2507
        %2517 = vmatprep.subr.bf16.mxu0 0
        %2518 = vmatpush1.bf16.msra.mxu0 0
        %2519 = vmatprep.subr.bf16.mxu0 0
        %2520 = vmatpush1.bf16.msra.mxu0 0
        %2521 = vmatprep.subr.bf16.mxu0 0
        %2522 = vmatpush1.bf16.msra.mxu0 0
        %2523 = vmatprep.subr.bf16.mxu0 0
        %2524 = vmatpush1.bf16.msra.mxu0 0
        %2525 = vmatprep.subr.bf16.mxu0 0
        %2526 = vmatpush1.bf16.msra.mxu0 0
        %2527 = vmatprep.subr.bf16.mxu0 0
        %2528 = vmatpush1.bf16.msra.mxu0 0
        %2529 = vmatprep.subr.bf16.mxu0 0
        %2530 = vmatpush1.bf16.msra.mxu0 0
        %2531 = vmatprep.subr.bf16.mxu0 0
        %2532 = vmatpush1.bf16.msra.mxu0 0
        %2533 = vmatprep.subr.bf16.mxu0 0
        %2534 = vmatpush1.bf16.msra.mxu0 0
        %2535 = vmatprep.subr.bf16.mxu0 0
        %2536 = vmatpush1.bf16.msra.mxu0 0
        %2537 = vmatprep.subr.bf16.mxu0 0
        %2538 = vmatpush1.bf16.msra.mxu0 0
        %2539 = vmatprep.subr.bf16.mxu0 0
        %2540 = vmatpush1.bf16.msra.mxu0 0
        %2541 = vmatprep.subr.bf16.mxu0 0
        %2542 = vmatpush1.bf16.msra.mxu0 0
        %2543 = vmatprep.subr.bf16.mxu0 0
        %2544 = vmatpush1.bf16.msra.mxu0 0
        %2545 = vmatprep.mubr.bf16.mxu0 0
        %2546 = vmatmul.mubr.bf16.gmra.mrb[0].mxu0 %v2511
        %v2547 = vpop.f32.mrb[0].mxu0
        %v2548 = vadd.f32 %v2496, %v2547
        %v2549 = vpop.f32.mrb[0].mxu0
        %v2550 = vpop.f32.mrb[0].mxu0
        %v2551 = vadd.f32 %v2496, %v2550
        %v2552 = vpop.f32.mrb[0].mxu0
        %2553 = vdwg.mxu0
        %v2554 = vadd.f32 %v1257, %v2548
        %v2555 = vadd.f32 %v1258, %v2551
        %v2556 = vsel %vm1259, %v2554, 0.0
        %2557 = vadd.xlane.f32.xlu0 %v2556
        %v2558 = vpop.xlane.xlu0 %2557
        %v2559 = vsel %vm1259, %v2555, 0.0
        %2560 = vadd.xlane.f32.xlu0 %v2559
        %v2561 = vpop.xlane.xlu0 %2560
        %v2562 = vmul.f32 %v2558, %v1266
        %v2563 = vmul.f32 %v2561, %v1266
        %v2564 = vsub.f32 %v2554, %v2562
        %v2565 = vsub.f32 %v2555, %v2563
        %v2566 = vmul.f32 %v2564, %v2564
        %v2567 = vmul.f32 %v2565, %v2565
        %v2568 = vsel %vm1259, %v2566, 0.0
        %2569 = vadd.xlane.f32.xlu0 %v2568
        %v2570 = vpop.xlane.xlu0 %2569
        %v2571 = vsel %vm1259, %v2567, 0.0
        %2572 = vadd.xlane.f32.xlu0 %v2571
        %v2573 = vpop.xlane.xlu0 %2572
        %v2574 = vmul.f32 %v2570, %v1266
        %v2575 = vmul.f32 %v2573, %v1266
        %v2576 = vadd.f32 %v2574, 1e-05
        %v2577 = vadd.f32 %v2575, 1e-05
        %v2578 = vrsqrt.pop %v2576
        %v2579 = vrsqrt.pop %v2577
        %v2580 = vmul.f32 %v2564, %v2578
        %v2581 = vmul.f32 %v2565, %v2579
        %v2582 = vld [vmem:[%s13] sm:$0x1]
        %v2584 = vlaneseq
        %v2585 = vshrl.u32 %v2584, 7
        %v2586 = vsub.s32 0, %v2585
        %v2587 = vrot.slane %v2582, %v2586
        %v2589 = vmul.f32 %v2580, %v2587
        %v2590 = vmul.f32 %v2581, %v2587
        %v2591 = vld [vmem:[%s14] sm:$0x1]
        %v2593 = vlaneseq
        %v2594 = vshrl.u32 %v2593, 7
        %v2595 = vsub.s32 0, %v2594
        %v2596 = vrot.slane %v2591, %v2595
        %v2598 = vadd.f32 %v2589, %v2596
        %v2599 = vadd.f32 %v2590, %v2596
        %v2600 = vpack.c.bf16 %v2599, %v2598
        %v2601 = vld [vmem:[%s9] sm:$0xf]
        %v2602 = vld [vmem:[%s9 + $0x4] sm:$0xf]
        %v2603 = vld [vmem:[%s9 + $0x8] sm:$0xf]
        %v2604 = vld [vmem:[%s9 + $0xc] sm:$0xf]
        %v2605 = vld [vmem:[%s10] sm:$0x1]
        %v2607 = vlaneseq
        %v2608 = vshrl.u32 %v2607, 7
        %v2609 = vsub.s32 0, %v2608
        %v2610 = vrot.slane %v2605, %v2609
        %v2616 = vunpack.c.l.b16 %v2601
        %v2617 = vunpack.c.l.b16 %v2602
        %v2618 = vunpack.c.l.b16 %v2603
        %v2619 = vunpack.c.l.b16 %v2604
        %v2620 = vpack.c.b16 %v2617, %v2616
        %v2621 = vpack.c.b16 %v2619, %v2618
        %v2625 = vsel %vm1259, %v2600, 0
        %2627 = vmatprep.subr.bf16.mxu0 0
        %2628 = vmatpush1.bf16.msra.mxu0 %v2620
        %2629 = vmatprep.subr.bf16.mxu0 0
        %2630 = vmatpush1.bf16.msra.mxu0 %v2621
        %2631 = vmatprep.subr.bf16.mxu0 0
        %2632 = vmatpush1.bf16.msra.mxu0 0
        %2633 = vmatprep.subr.bf16.mxu0 0
        %2634 = vmatpush1.bf16.msra.mxu0 0
        %2635 = vmatprep.subr.bf16.mxu0 0
        %2636 = vmatpush1.bf16.msra.mxu0 0
        %2637 = vmatprep.subr.bf16.mxu0 0
        %2638 = vmatpush1.bf16.msra.mxu0 0
        %2639 = vmatprep.subr.bf16.mxu0 0
        %2640 = vmatpush1.bf16.msra.mxu0 0
        %2641 = vmatprep.subr.bf16.mxu0 0
        %2642 = vmatpush1.bf16.msra.mxu0 0
        %2643 = vmatprep.subr.bf16.mxu0 0
        %2644 = vmatpush1.bf16.msra.mxu0 0
        %2645 = vmatprep.subr.bf16.mxu0 0
        %2646 = vmatpush1.bf16.msra.mxu0 0
        %2647 = vmatprep.subr.bf16.mxu0 0
        %2648 = vmatpush1.bf16.msra.mxu0 0
        %2649 = vmatprep.subr.bf16.mxu0 0
        %2650 = vmatpush1.bf16.msra.mxu0 0
        %2651 = vmatprep.subr.bf16.mxu0 0
        %2652 = vmatpush1.bf16.msra.mxu0 0
        %2653 = vmatprep.subr.bf16.mxu0 0
        %2654 = vmatpush1.bf16.msra.mxu0 0
        %2655 = vmatprep.subr.bf16.mxu0 0
        %2656 = vmatpush1.bf16.msra.mxu0 0
        %2657 = vmatprep.subr.bf16.mxu0 0
        %2658 = vmatpush1.bf16.msra.mxu0 0
        %2659 = vmatprep.mubr.bf16.mxu0 0
        %2660 = vmatmul.mubr.bf16.gmra.mrb[0].mxu0 %v2625
        %v2661 = vpop.f32.mrb[0].mxu0
        %v2662 = vadd.f32 %v2610, %v2661
        %v2663 = vpop.f32.mrb[0].mxu0
        %v2664 = vpop.f32.mrb[0].mxu0
        %v2665 = vadd.f32 %v2610, %v2664
        %v2666 = vpop.f32.mrb[0].mxu0
        %2667 = vdwg.mxu0
        %v2668 = vmax.f32 %v2662, 0.0
        %v2669 = vmax.f32 %v2665, 0.0
        %v2670 = vpack.c.bf16 %v2669, %v2668
        %v2671 = vld [vmem:[%s11] sm:$0xf]
        %v2672 = vld [vmem:[%s11 + $0x4] sm:$0xf]
        %v2673 = vld [vmem:[%s11 + $0x8] sm:$0xf]
        %v2674 = vld [vmem:[%s11 + $0xc] sm:$0xf]
        %v2675 = vld [vmem:[%s11 + $0x10] sm:$0xf]
        %v2676 = vld [vmem:[%s11 + $0x14] sm:$0xf]
        %v2677 = vld [vmem:[%s11 + $0x18] sm:$0xf]
        %v2678 = vld [vmem:[%s11 + $0x1c] sm:$0xf]
        %v2679 = vld [vmem:[%s12] sm:$0x1]
        %v2681 = vlaneseq
        %v2682 = vshrl.u32 %v2681, 7
        %v2683 = vsub.s32 0, %v2682
        %v2684 = vrot.slane %v2679, %v2683
        %v2694 = vunpack.c.l.b16 %v2671
        %v2695 = vunpack.c.l.b16 %v2672
        %v2696 = vunpack.c.l.b16 %v2673
        %v2697 = vunpack.c.l.b16 %v2674
        %v2698 = vunpack.c.l.b16 %v2675
        %v2699 = vunpack.c.l.b16 %v2676
        %v2700 = vunpack.c.l.b16 %v2677
        %v2701 = vunpack.c.l.b16 %v2678
        %v2702 = vpack.c.b16 %v2695, %v2694
        %v2703 = vpack.c.b16 %v2697, %v2696
        %v2704 = vpack.c.b16 %v2699, %v2698
        %v2705 = vpack.c.b16 %v2701, %v2700
        %vm2710 = vcmask 523264
        %v2712 = vsel %vm2710, %v2670, 0
        %2714 = vmatprep.subr.bf16.mxu0 0
        %2715 = vmatpush1.bf16.msra.mxu0 %v2702
        %2716 = vmatprep.subr.bf16.mxu0 0
        %2717 = vmatpush1.bf16.msra.mxu0 %v2703
        %2718 = vmatprep.subr.bf16.mxu0 0
        %2719 = vmatpush1.bf16.msra.mxu0 %v2704
        %2720 = vmatprep.subr.bf16.mxu0 0
        %2721 = vmatpush1.bf16.msra.mxu0 %v2705
        %2722 = vmatprep.subr.bf16.mxu0 0
        %2723 = vmatpush1.bf16.msra.mxu0 0
        %2724 = vmatprep.subr.bf16.mxu0 0
        %2725 = vmatpush1.bf16.msra.mxu0 0
        %2726 = vmatprep.subr.bf16.mxu0 0
        %2727 = vmatpush1.bf16.msra.mxu0 0
        %2728 = vmatprep.subr.bf16.mxu0 0
        %2729 = vmatpush1.bf16.msra.mxu0 0
        %2730 = vmatprep.subr.bf16.mxu0 0
        %2731 = vmatpush1.bf16.msra.mxu0 0
        %2732 = vmatprep.subr.bf16.mxu0 0
        %2733 = vmatpush1.bf16.msra.mxu0 0
        %2734 = vmatprep.subr.bf16.mxu0 0
        %2735 = vmatpush1.bf16.msra.mxu0 0
        %2736 = vmatprep.subr.bf16.mxu0 0
        %2737 = vmatpush1.bf16.msra.mxu0 0
        %2738 = vmatprep.subr.bf16.mxu0 0
        %2739 = vmatpush1.bf16.msra.mxu0 0
        %2740 = vmatprep.subr.bf16.mxu0 0
        %2741 = vmatpush1.bf16.msra.mxu0 0
        %2742 = vmatprep.subr.bf16.mxu0 0
        %2743 = vmatpush1.bf16.msra.mxu0 0
        %2744 = vmatprep.subr.bf16.mxu0 0
        %2745 = vmatpush1.bf16.msra.mxu0 0
        %2746 = vmatprep.mubr.bf16.mxu0 0
        %2747 = vmatmul.mubr.bf16.gmra.mrb[0].mxu0 %v2712
        %v2748 = vpop.f32.mrb[0].mxu0
        %v2749 = vadd.f32 %v2684, %v2748
        %v2750 = vpop.f32.mrb[0].mxu0
        %v2751 = vpop.f32.mrb[0].mxu0
        %v2752 = vadd.f32 %v2684, %v2751
        %v2753 = vpop.f32.mrb[0].mxu0
        %2754 = vdwg.mxu0
        %v2755 = vadd.f32 %v2554, %v2749
        %v2756 = vadd.f32 %v2555, %v2752
        %2757 = vst.msk [vmem:[%s568] sm:$0xff] %vm1259, %v2755
        %2758 = vst.msk [vmem:[%s568 + $0x8] sm:$0xff] %vm1259, %v2756
        %s2759 = sand.u32 %s374, 1
        %s2760 = scalar_lea.sflag [#allocation6], %s2759
        %s2761 = sand.u32 %s374, 1
        %s2762 = smul.addr %s2761, 16
        %s2763 = scalar_lea.vmem [#allocation13], %s2762
        // Predicated region
        $region105: #{tpu_custom_call.1} parent=79 // pred_check
          %p2764 = pneg %p384
        $region106: #{tpu_custom_call.1} parent=79 // pred_check_branch
          %2766 = sbr.rel (%p2764) target = $region108
        $region107: #{tpu_custom_call.1} parent=79 // pred_region
          %s2767 = smul.u32 2, %s37
          %s2769 = ssub.s32 256, 256
          %2770 = vsyncadd %s2760, %s2769
          %s2771 = smul.addr %s36, 2
          %s2772 = sadd.s32 %s2767, %s2771
          %s2773 = smul.addr %s2772, 128
          %s2774 = scalar_lea.hbm %s15, %s2773
          %s2775 = sshll.u32 %s2763, 4
          %s2776 = int_to_ptr.vmem [resolvable:$true] %s2775
          %2781 = dma.vmem_to_hbm [thread:$0]  %s2776, 256, %s2774, %s2760, 128, 128, 8
        $region108: #{tpu_custom_call.1} parent=79 // pred_fallthru
          _
      $region80: #{tpu_custom_call.1} parent=5 // pred_fallthru
        _
      %p2782 = scmp.le.s32.totalorder 2, %s27
      // Predicated region
      $region109: #{tpu_custom_call.1} parent=5 // pred_check
        %p2783 = pneg %p2782
      $region110: #{tpu_custom_call.1} parent=5 // pred_check_branch
        %2785 = sbr.rel (%p2783) target = $region112
      $region111: #{tpu_custom_call.1} parent=5 // pred_region
        %s2786 = ssub.s32 %s27, 2
        // Predicated region
        $region113: #{tpu_custom_call.1} parent=111 // pred_check
          %p2787 = pneg %p390
        $region114: #{tpu_custom_call.1} parent=111 // pred_check_branch
          %2789 = sbr.rel (%p2787) target = $region116
        $region115: #{tpu_custom_call.1} parent=111 // pred_region
          %s2790 = sand.u32 %s375, 1
          %s2791 = scalar_lea.sflag [#allocation6], %s2790
          %s2792 = sand.u32 %s375, 1
          %s2793 = smul.addr %s2792, 16
          %s2794 = scalar_lea.vmem [#allocation13], %s2793
          %2795 = dma.done %s2791, 256
        $region116: #{tpu_custom_call.1} parent=111 // pred_fallthru
          _
      $region112: #{tpu_custom_call.1} parent=5 // pred_fallthru
        _
    $region6: #{tpu_custom_call.1} parent=1 // loop_footer
      %s31 = sadd.s32 1, %s27
    $region7: #{tpu_custom_call.1} parent=1 // loop_footer_branch
      %26 = sbr.rel target = $region3
    $region8: #{tpu_custom_call.1} parent=1 // loop_exit
      _
    %2796 = vsyncpa [#allocation5], 1
    %s2797 = scalar_lea.sflag [#allocation5], 1
    %2798 = vsyncpa %s2797, 1
    %2799 = vsyncpa [#allocation8], 1
    %2800 = vsyncpa [#allocation11], 1
    %2801 = vsyncpa [#allocation6], 1
    %s2802 = scalar_lea.sflag [#allocation6], 1
    %2803 = vsyncpa %s2802, 1

// kernel: tpu_custom_call.1
$region0: #{tpu_custom_call.1}
  #allocation0 [shape = 'u32[]', space=smem, size = 0x4, offset = 0x4, fixed_abs, tag = 'smem constant byte address 0x4 - core index']
  #allocation1 [shape = 'u32[144,128]{1,0:T(1,128)}', space=vmem, size = 0x12000, scoped, tag = 'internal scratch']
  #allocation2 [shape = 'bf16[4,16,8]{2,1,0:T(16,128)(2,1)}', space=vmem, size = 0x4000, scoped, tag = 'scratch operand']
  #allocation3 [shape = 'bf16[4,16,8]{2,1,0:T(16,128)(2,1)}', space=vmem, size = 0x4000, scoped, tag = 'scratch operand']
  %s0 = inlined_call_operand.vmem [shape: f32[2,16,32], index: 0, kind: input, shape index: {}]
  %s1 = inlined_call_operand.vmem [shape: f32[1,32], index: 1, kind: input, shape index: {}]
  %s2 = inlined_call_operand.vmem [shape: f32[1,32], index: 2, kind: input, shape index: {}]
  %s3 = inlined_call_operand.vmem [shape: bf16[32,32], index: 3, kind: input, shape index: {}]
  %s4 = inlined_call_operand.hbm [shape: f32[1,32], index: 4, kind: input, shape index: {}]
  %s5 = inlined_call_operand.hbm [shape: bf16[32,64], index: 5, kind: input, shape index: {}]
  %s6 = inlined_call_operand.hbm [shape: f32[1,64], index: 6, kind: input, shape index: {}]
  %s7 = inlined_call_operand.hbm [shape: bf16[32,32], index: 7, kind: input, shape index: {}]
  %s8 = inlined_call_operand.hbm [shape: f32[1,32], index: 8, kind: input, shape index: {}]
  %s9 = inlined_call_operand.vmem [shape: bf16[32,64], index: 9, kind: input, shape index: {}]
  %s10 = inlined_call_operand.vmem [shape: f32[1,64], index: 10, kind: input, shape index: {}]
  %s11 = inlined_call_operand.vmem [shape: bf16[64,32], index: 11, kind: input, shape index: {}]
  %s12 = inlined_call_operand.vmem [shape: f32[1,32], index: 12, kind: input, shape index: {}]
  %s13 = inlined_call_operand.vmem [shape: f32[1,32], index: 13, kind: input, shape index: {}]
  %s14 = inlined_call_operand.vmem [shape: f32[1,32], index: 14, kind: input, shape index: {}]
  %s15 = inlined_call_operand.hbm [shape: f32[2,16,32], index: 15, kind: output, shape index: {}]
  %s16 = sld [smem:[#allocation0]]
  $region117: #{tpu_custom_call.1} parent=0
    _
  %s18 = ssub.s32 1, %s16
  %s19 = scalar_select 0, %s18, %s16
  $region1: #{tpu_custom_call.1} parent=0
    #allocation4 [shape = 'u8[512]{0}', space=vmem, size = 0x400, scoped, tag = 'input window, operand 4, single buffered']
    #allocation5 [shape = 's32[2]{0}', space=sflag, size = 0x8, scoped, tag = 'scoped memory for tpu_custom_call.1']
    #allocation6 [shape = 's32[2]{0}', space=sflag, size = 0x8, scoped, tag = 'scoped memory for tpu_custom_call.1']
    #allocation7 [shape = 'u8[8192]{0}', space=vmem, size = 0x2000, scoped, tag = 'input window, operand 5, single buffered']
    #allocation8 [shape = 's32[1]{0}', space=sflag, size = 0x4, scoped, tag = 'scoped memory for tpu_custom_call.1']
    #allocation9 [shape = 'u8[512]{0}', space=vmem, size = 0x400, scoped, tag = 'input window, operand 6, single buffered']
    #allocation10 [shape = 'u8[8192]{0}', space=vmem, size = 0x2000, scoped, tag = 'input window, operand 7, single buffered']
    #allocation11 [shape = 's32[1]{0}', space=sflag, size = 0x4, scoped, tag = 'scoped memory for tpu_custom_call.1']
    #allocation12 [shape = 'u8[512]{0}', space=vmem, size = 0x400, scoped, tag = 'input window, operand 8, single buffered']
    #allocation13 [shape = 'u8[16384]{0}', space=vmem, size = 0x4000, scoped, tag = 'output window, operand 0']
    %20 = vsyncpa [#allocation5], 0
    %21 = vsyncpa [#allocation8], 0
    %22 = vsyncpa [#allocation11], 0
    %23 = vsyncpa [#allocation6], 0
    %s24 = scalar_lea.sflag [#allocation6], 1
    %25 = vsyncpa %s24, 0
    loop: start=0, step=1, limit=4
    $region2: #{tpu_custom_call.1} parent=1 // loop_pre_header
      _
    $region3: #{tpu_custom_call.1} parent=1 // loop_header
      %s27 = sphi 0, %s31
      %p28 = scmp.ge.s32.totalorder %s27, 4
      %s34 = sphi 0, %s46
      %s35 = sphi 0, %s42
      %s36 = sphi 0, %s34
      %s37 = sphi 0, %s35
      %s38 = sphi 0, %s36
      %s39 = sphi 0, %s37
      %s49 = sphi 0, %s51
      %s52 = sphi 0, %s49
      %s53 = sphi 0, %s52
      %s69 = sphi 0, %s53
      %s73 = sphi 0, %s73
      %s75 = sphi 0, %s73
      %s76 = sphi 0, %s75
      %s90 = sphi 0, %s76
      %s94 = sphi 0, %s94
      %s96 = sphi 0, %s94
      %s97 = sphi 0, %s96
      %s111 = sphi 0, %s97
      %s115 = sphi 0, %s115
      %s117 = sphi 0, %s115
      %s118 = sphi 0, %s117
      %s132 = sphi 0, %s118
      %s136 = sphi 0, %s136
      %s138 = sphi 0, %s136
      %s139 = sphi 0, %s138
      %s153 = sphi 0, %s139
      %s157 = sphi 0, %s157
      %s159 = sphi 0, %s157
      %s160 = sphi 0, %s159
      %s174 = sphi 0, %s160
      %s178 = sphi 0, %s178
      %s180 = sphi 0, %s178
      %s181 = sphi 0, %s180
      %s195 = sphi 0, %s181
      %s199 = sphi 0, %s199
      %s201 = sphi 0, %s199
      %s202 = sphi 0, %s201
      %s216 = sphi 0, %s202
      %s220 = sphi 0, %s220
      %s222 = sphi 0, %s220
      %s223 = sphi 0, %s222
      %s237 = sphi 0, %s223
      %s241 = sphi 0, %s241
      %s243 = sphi 0, %s241
      %s244 = sphi 0, %s243
      %s258 = sphi 0, %s244
      %s262 = sphi 0, %s262
      %s264 = sphi 0, %s262
      %s265 = sphi 0, %s264
      %s279 = sphi 0, %s265
      %s283 = sphi 0, %s283
      %s285 = sphi 0, %s283
      %s286 = sphi 0, %s285
      %s300 = sphi 0, %s286
      %s304 = sphi 0, %s304
      %s306 = sphi 0, %s304
      %s307 = sphi 0, %s306
      %s321 = sphi 0, %s307
      %s325 = sphi 0, %s325
      %s327 = sphi 0, %s325
      %s328 = sphi 0, %s327
      %s342 = sphi 0, %s328
      %s346 = sphi 0, %s346
      %s348 = sphi 0, %s346
      %s349 = sphi 0, %s348
      %s363 = sphi 0, %s349
      %s371 = sphi 0, %s373
      %s374 = sphi 0, %s371
      %s375 = sphi 0, %s374
      %s391 = sphi 0, %s375
    $region4: #{tpu_custom_call.1} parent=1 // loop_header_branch
      %30 = sbr.rel (%p28) target = $region8
    $region5: #{tpu_custom_call.1} parent=1 // loop_body
      %s32 = ssub.s32 %s27, 1
      %s33 = ssub.s32 %s27, 2
      %s40 = sadd.s32 1, %s35
      %p41 = scmp.ge.s32.totalorder %s40, 1
      %s42 = scalar_select %p41, 0, %s40
      %s43 = sadd.s32 1, %s34
      %s44 = scalar_select %p41, %s43, %s34
      %p45 = scmp.ge.s32.totalorder %s44, 2
      %s46 = scalar_select %p45, 0, %s44
      %s47 = ssub.s32 %s34, %s46
      %p48 = scmp.eq.s32.totalorder %s47, 0
      %s50 = sadd.s32 %s49, 1
      %s51 = scalar_select %p48, %s49, %s50
      %p54 = pneg %p48
      %p55 = scmp.eq.s32.totalorder %s27, 1
      %p56 = por %p54, %p55
      %p57 = scmp.ne.s32.totalorder %s49, %s52
      %p58 = scmp.eq.s32.totalorder %s27, 0
      %p59 = por %p57, %p58
      %p60 = scmp.ne.s32.totalorder %s49, %s52
      %p61 = scmp.eq.s32.totalorder %s32, 1
      %p62 = por %p60, %p61
      %p63 = scmp.ne.s32.totalorder %s52, %s53
      %p64 = scmp.eq.s32.totalorder %s32, 0
      %p65 = por %p63, %p64
      %p66 = scmp.ne.s32.totalorder %s52, %s53
      %p67 = scmp.eq.s32.totalorder %s33, 1
      %p68 = por %p66, %p67
      %p70 = scmp.ne.s32.totalorder %s53, %s69
      %p71 = scmp.eq.s32.totalorder %s33, 0
      %p72 = por %p70, %p71
      %s74 = sadd.s32 %s73, 1
      %p77 = scmp.eq.s32.totalorder %s27, 1
      %p78 = scmp.ne.s32.totalorder %s73, %s75
      %p79 = scmp.eq.s32.totalorder %s27, 0
      %p80 = por %p78, %p79
      %p81 = scmp.ne.s32.totalorder %s73, %s75
      %p82 = scmp.eq.s32.totalorder %s32, 1
      %p83 = por %p81, %p82
      %p84 = scmp.ne.s32.totalorder %s75, %s76
      %p85 = scmp.eq.s32.totalorder %s32, 0
      %p86 = por %p84, %p85
      %p87 = scmp.ne.s32.totalorder %s75, %s76
      %p88 = scmp.eq.s32.totalorder %s33, 1
      %p89 = por %p87, %p88
      %p91 = scmp.ne.s32.totalorder %s76, %s90
      %p92 = scmp.eq.s32.totalorder %s33, 0
      %p93 = por %p91, %p92
      %s95 = sadd.s32 %s94, 1
      %p98 = scmp.eq.s32.totalorder %s27, 1
      %p99 = scmp.ne.s32.totalorder %s94, %s96
      %p100 = scmp.eq.s32.totalorder %s27, 0
      %p101 = por %p99, %p100
      %p102 = scmp.ne.s32.totalorder %s94, %s96
      %p103 = scmp.eq.s32.totalorder %s32, 1
      %p104 = por %p102, %p103
      %p105 = scmp.ne.s32.totalorder %s96, %s97
      %p106 = scmp.eq.s32.totalorder %s32, 0
      %p107 = por %p105, %p106
      %p108 = scmp.ne.s32.totalorder %s96, %s97
      %p109 = scmp.eq.s32.totalorder %s33, 1
      %p110 = por %p108, %p109
      %p112 = scmp.ne.s32.totalorder %s97, %s111
      %p113 = scmp.eq.s32.totalorder %s33, 0
      %p114 = por %p112, %p113
      %s116 = sadd.s32 %s115, 1
      %p119 = scmp.eq.s32.totalorder %s27, 1
      %p120 = scmp.ne.s32.totalorder %s115, %s117
      %p121 = scmp.eq.s32.totalorder %s27, 0
      %p122 = por %p120, %p121
      %p123 = scmp.ne.s32.totalorder %s115, %s117
      %p124 = scmp.eq.s32.totalorder %s32, 1
      %p125 = por %p123, %p124
      %p126 = scmp.ne.s32.totalorder %s117, %s118
      %p127 = scmp.eq.s32.totalorder %s32, 0
      %p128 = por %p126, %p127
      %p129 = scmp.ne.s32.totalorder %s117, %s118
      %p130 = scmp.eq.s32.totalorder %s33, 1
      %p131 = por %p129, %p130
      %p133 = scmp.ne.s32.totalorder %s118, %s132
      %p134 = scmp.eq.s32.totalorder %s33, 0
      %p135 = por %p133, %p134
      %s137 = sadd.s32 %s136, 1
      %p140 = scmp.eq.s32.totalorder %s27, 1
      %p141 = scmp.ne.s32.totalorder %s136, %s138
      %p142 = scmp.eq.s32.totalorder %s27, 0
      %p143 = por %p141, %p142
      %p144 = scmp.ne.s32.totalorder %s136, %s138
      %p145 = scmp.eq.s32.totalorder %s32, 1
      %p146 = por %p144, %p145
      %p147 = scmp.ne.s32.totalorder %s138, %s139
      %p148 = scmp.eq.s32.totalorder %s32, 0
      %p149 = por %p147, %p148
      %p150 = scmp.ne.s32.totalorder %s138, %s139
      %p151 = scmp.eq.s32.totalorder %s33, 1
      %p152 = por %p150, %p151
      %p154 = scmp.ne.s32.totalorder %s139, %s153
      %p155 = scmp.eq.s32.totalorder %s33, 0
      %p156 = por %p154, %p155
      %s158 = sadd.s32 %s157, 1
      %p161 = scmp.eq.s32.totalorder %s27, 1
      %p162 = scmp.ne.s32.totalorder %s157, %s159
      %p163 = scmp.eq.s32.totalorder %s27, 0
      %p164 = por %p162, %p163
      %p165 = scmp.ne.s32.totalorder %s157, %s159
      %p166 = scmp.eq.s32.totalorder %s32, 1
      %p167 = por %p165, %p166
      %p168 = scmp.ne.s32.totalorder %s159, %s160
      %p169 = scmp.eq.s32.totalorder %s32, 0
      %p170 = por %p168, %p169
      %p171 = scmp.ne.s32.totalorder %s159, %s160
      %p172 = scmp.eq.s32.totalorder %s33, 1
      %p173 = por %p171, %p172
      %p175 = scmp.ne.s32.totalorder %s160, %s174
      %p176 = scmp.eq.s32.totalorder %s33, 0
      %p177 = por %p175, %p176
      %s179 = sadd.s32 %s178, 1
      %p182 = scmp.eq.s32.totalorder %s27, 1
      %p183 = scmp.ne.s32.totalorder %s178, %s180
      %p184 = scmp.eq.s32.totalorder %s27, 0
      %p185 = por %p183, %p184
      %p186 = scmp.ne.s32.totalorder %s178, %s180
      %p187 = scmp.eq.s32.totalorder %s32, 1
      %p188 = por %p186, %p187
      %p189 = scmp.ne.s32.totalorder %s180, %s181
      %p190 = scmp.eq.s32.totalorder %s32, 0
      %p191 = por %p189, %p190
      %p192 = scmp.ne.s32.totalorder %s180, %s181
      %p193 = scmp.eq.s32.totalorder %s33, 1
      %p194 = por %p192, %p193
      %p196 = scmp.ne.s32.totalorder %s181, %s195
      %p197 = scmp.eq.s32.totalorder %s33, 0
      %p198 = por %p196, %p197
      %s200 = sadd.s32 %s199, 1
      %p203 = scmp.eq.s32.totalorder %s27, 1
      %p204 = scmp.ne.s32.totalorder %s199, %s201
      %p205 = scmp.eq.s32.totalorder %s27, 0
      %p206 = por %p204, %p205
      %p207 = scmp.ne.s32.totalorder %s199, %s201
      %p208 = scmp.eq.s32.totalorder %s32, 1
      %p209 = por %p207, %p208
      %p210 = scmp.ne.s32.totalorder %s201, %s202
      %p211 = scmp.eq.s32.totalorder %s32, 0
      %p212 = por %p210, %p211
      %p213 = scmp.ne.s32.totalorder %s201, %s202
      %p214 = scmp.eq.s32.totalorder %s33, 1
      %p215 = por %p213, %p214
      %p217 = scmp.ne.s32.totalorder %s202, %s216
      %p218 = scmp.eq.s32.totalorder %s33, 0
      %p219 = por %p217, %p218
      %s221 = sadd.s32 %s220, 1
      %p224 = scmp.eq.s32.totalorder %s27, 1
      %p225 = scmp.ne.s32.totalorder %s220, %s222
      %p226 = scmp.eq.s32.totalorder %s27, 0
      %p227 = por %p225, %p226
      %p228 = scmp.ne.s32.totalorder %s220, %s222
      %p229 = scmp.eq.s32.totalorder %s32, 1
      %p230 = por %p228, %p229
      %p231 = scmp.ne.s32.totalorder %s222, %s223
      %p232 = scmp.eq.s32.totalorder %s32, 0
      %p233 = por %p231, %p232
      %p234 = scmp.ne.s32.totalorder %s222, %s223
      %p235 = scmp.eq.s32.totalorder %s33, 1
      %p236 = por %p234, %p235
      %p238 = scmp.ne.s32.totalorder %s223, %s237
      %p239 = scmp.eq.s32.totalorder %s33, 0
      %p240 = por %p238, %p239
      %s242 = sadd.s32 %s241, 1
      %p245 = scmp.eq.s32.totalorder %s27, 1
      %p246 = scmp.ne.s32.totalorder %s241, %s243
      %p247 = scmp.eq.s32.totalorder %s27, 0
      %p248 = por %p246, %p247
      %p249 = scmp.ne.s32.totalorder %s241, %s243
      %p250 = scmp.eq.s32.totalorder %s32, 1
      %p251 = por %p249, %p250
      %p252 = scmp.ne.s32.totalorder %s243, %s244
      %p253 = scmp.eq.s32.totalorder %s32, 0
      %p254 = por %p252, %p253
      %p255 = scmp.ne.s32.totalorder %s243, %s244
      %p256 = scmp.eq.s32.totalorder %s33, 1
      %p257 = por %p255, %p256
      %p259 = scmp.ne.s32.totalorder %s244, %s258
      %p260 = scmp.eq.s32.totalorder %s33, 0
      %p261 = por %p259, %p260
      %s263 = sadd.s32 %s262, 1
      %p266 = scmp.eq.s32.totalorder %s27, 1
      %p267 = scmp.ne.s32.totalorder %s262, %s264
      %p268 = scmp.eq.s32.totalorder %s27, 0
      %p269 = por %p267, %p268
      %p270 = scmp.ne.s32.totalorder %s262, %s264
      %p271 = scmp.eq.s32.totalorder %s32, 1
      %p272 = por %p270, %p271
      %p273 = scmp.ne.s32.totalorder %s264, %s265
      %p274 = scmp.eq.s32.totalorder %s32, 0
      %p275 = por %p273, %p274
      %p276 = scmp.ne.s32.totalorder %s264, %s265
      %p277 = scmp.eq.s32.totalorder %s33, 1
      %p278 = por %p276, %p277
      %p280 = scmp.ne.s32.totalorder %s265, %s279
      %p281 = scmp.eq.s32.totalorder %s33, 0
      %p282 = por %p280, %p281
      %s284 = sadd.s32 %s283, 1
      %p287 = scmp.eq.s32.totalorder %s27, 1
      %p288 = scmp.ne.s32.totalorder %s283, %s285
      %p289 = scmp.eq.s32.totalorder %s27, 0
      %p290 = por %p288, %p289
      %p291 = scmp.ne.s32.totalorder %s283, %s285
      %p292 = scmp.eq.s32.totalorder %s32, 1
      %p293 = por %p291, %p292
      %p294 = scmp.ne.s32.totalorder %s285, %s286
      %p295 = scmp.eq.s32.totalorder %s32, 0
      %p296 = por %p294, %p295
      %p297 = scmp.ne.s32.totalorder %s285, %s286
      %p298 = scmp.eq.s32.totalorder %s33, 1
      %p299 = por %p297, %p298
      %p301 = scmp.ne.s32.totalorder %s286, %s300
      %p302 = scmp.eq.s32.totalorder %s33, 0
      %p303 = por %p301, %p302
      %s305 = sadd.s32 %s304, 1
      %p308 = scmp.eq.s32.totalorder %s27, 1
      %p309 = scmp.ne.s32.totalorder %s304, %s306
      %p310 = scmp.eq.s32.totalorder %s27, 0
      %p311 = por %p309, %p310
      %p312 = scmp.ne.s32.totalorder %s304, %s306
      %p313 = scmp.eq.s32.totalorder %s32, 1
      %p314 = por %p312, %p313
      %p315 = scmp.ne.s32.totalorder %s306, %s307
      %p316 = scmp.eq.s32.totalorder %s32, 0
      %p317 = por %p315, %p316
      %p318 = scmp.ne.s32.totalorder %s306, %s307
      %p319 = scmp.eq.s32.totalorder %s33, 1
      %p320 = por %p318, %p319
      %p322 = scmp.ne.s32.totalorder %s307, %s321
      %p323 = scmp.eq.s32.totalorder %s33, 0
      %p324 = por %p322, %p323
      %s326 = sadd.s32 %s325, 1
      %p329 = scmp.eq.s32.totalorder %s27, 1
      %p330 = scmp.ne.s32.totalorder %s325, %s327
      %p331 = scmp.eq.s32.totalorder %s27, 0
      %p332 = por %p330, %p331
      %p333 = scmp.ne.s32.totalorder %s325, %s327
      %p334 = scmp.eq.s32.totalorder %s32, 1
      %p335 = por %p333, %p334
      %p336 = scmp.ne.s32.totalorder %s327, %s328
      %p337 = scmp.eq.s32.totalorder %s32, 0
      %p338 = por %p336, %p337
      %p339 = scmp.ne.s32.totalorder %s327, %s328
      %p340 = scmp.eq.s32.totalorder %s33, 1
      %p341 = por %p339, %p340
      %p343 = scmp.ne.s32.totalorder %s328, %s342
      %p344 = scmp.eq.s32.totalorder %s33, 0
      %p345 = por %p343, %p344
      %s347 = sadd.s32 %s346, 1
      %p350 = scmp.eq.s32.totalorder %s27, 1
      %p351 = scmp.ne.s32.totalorder %s346, %s348
      %p352 = scmp.eq.s32.totalorder %s27, 0
      %p353 = por %p351, %p352
      %p354 = scmp.ne.s32.totalorder %s346, %s348
      %p355 = scmp.eq.s32.totalorder %s32, 1
      %p356 = por %p354, %p355
      %p357 = scmp.ne.s32.totalorder %s348, %s349
      %p358 = scmp.eq.s32.totalorder %s32, 0
      %p359 = por %p357, %p358
      %p360 = scmp.ne.s32.totalorder %s348, %s349
      %p361 = scmp.eq.s32.totalorder %s33, 1
      %p362 = por %p360, %p361
      %p364 = scmp.ne.s32.totalorder %s349, %s363
      %p365 = scmp.eq.s32.totalorder %s33, 0
      %p366 = por %p364, %p365
      %s367 = ssub.s32 %s34, %s46
      %s368 = ssub.s32 %s35, %s42
      %s369 = sor.u32 %s367, %s368
      %p370 = scmp.eq.s32.totalorder %s369, 0
      %s372 = sadd.s32 %s371, 1
      %s373 = scalar_select %p370, %s371, %s372
      %p376 = pneg %p370
      %p377 = scmp.eq.s32.totalorder %s27, 1
      %p378 = por %p376, %p377
      %p379 = scmp.ne.s32.totalorder %s371, %s374
      %p380 = scmp.eq.s32.totalorder %s27, 0
      %p381 = por %p379, %p380
      %p382 = scmp.ne.s32.totalorder %s371, %s374
      %p383 = scmp.eq.s32.totalorder %s32, 1
      %p384 = por %p382, %p383
      %p385 = scmp.ne.s32.totalorder %s374, %s375
      %p386 = scmp.eq.s32.totalorder %s32, 0
      %p387 = por %p385, %p386
      %p388 = scmp.ne.s32.totalorder %s374, %s375
      %p389 = scmp.eq.s32.totalorder %s33, 1
      %p390 = por %p388, %p389
      %p392 = scmp.ne.s32.totalorder %s375, %s391
      %p393 = scmp.eq.s32.totalorder %s33, 0
      %p394 = por %p392, %p393
      %p395 = scmp.le.s32.totalorder 1, %s27
      %p396 = scmp.lt.s32.totalorder %s27, 3
      %p397 = pnand %p395, %p396
      %p398 = pneg %p397
      // Predicated region
      $region9: #{tpu_custom_call.1} parent=5 // pred_check
        _
      $region10: #{tpu_custom_call.1} parent=5 // pred_check_branch
        %400 = sbr.rel (%p397) target = $region12
      $region11: #{tpu_custom_call.1} parent=5 // pred_region
        %s401 = ssub.s32 %s27, 1
        // Predicated region
        $region13: #{tpu_custom_call.1} parent=11 // pred_check
          %p402 = pneg %p86
        $region14: #{tpu_custom_call.1} parent=11 // pred_check_branch
          %404 = sbr.rel (%p402) target = $region16
        $region15: #{tpu_custom_call.1} parent=11 // pred_region
          _
        $region16: #{tpu_custom_call.1} parent=11 // pred_fallthru
          _
        // Predicated region
        $region17: #{tpu_custom_call.1} parent=11 // pred_check
          %p405 = pneg %p107
        $region18: #{tpu_custom_call.1} parent=11 // pred_check_branch
          %407 = sbr.rel (%p405) target = $region20
        $region19: #{tpu_custom_call.1} parent=11 // pred_region
          _
        $region20: #{tpu_custom_call.1} parent=11 // pred_fallthru
          _
        // Predicated region
        $region21: #{tpu_custom_call.1} parent=11 // pred_check
          %p408 = pneg %p128
        $region22: #{tpu_custom_call.1} parent=11 // pred_check_branch
          %410 = sbr.rel (%p408) target = $region24
        $region23: #{tpu_custom_call.1} parent=11 // pred_region
          _
        $region24: #{tpu_custom_call.1} parent=11 // pred_fallthru
          _
        // Predicated region
        $region25: #{tpu_custom_call.1} parent=11 // pred_check
          %p411 = pneg %p149
        $region26: #{tpu_custom_call.1} parent=11 // pred_check_branch
          %413 = sbr.rel (%p411) target = $region28
        $region27: #{tpu_custom_call.1} parent=11 // pred_region
          %s415 = ssub.s32 16, 16
          %416 = vsyncadd [#allocation5], %s415
          %s418 = sshll.u32 [#allocation4], 4
          %s419 = int_to_ptr.vmem [resolvable:$true] %s418
          %421 = dma.hbm_to_vmem [thread:$0]  %s4, 16, %s419, [#allocation5]
        $region28: #{tpu_custom_call.1} parent=11 // pred_fallthru
          _
        // Predicated region
        $region29: #{tpu_custom_call.1} parent=11 // pred_check
          %p422 = pneg %p170
        $region30: #{tpu_custom_call.1} parent=11 // pred_check_branch
          %424 = sbr.rel (%p422) target = $region32
        $region31: #{tpu_custom_call.1} parent=11 // pred_region
          %s426 = ssub.s32 256, 256
          %427 = vsyncadd [#allocation8], %s426
          %s428 = sshll.u32 [#allocation7], 4
          %s429 = int_to_ptr.vmem [resolvable:$true] %s428
          %434 = dma.hbm_to_vmem [thread:$0]  %s5, 256, %s429, [#allocation8], 64, 64, 4
        $region32: #{tpu_custom_call.1} parent=11 // pred_fallthru
          _
        // Predicated region
        $region33: #{tpu_custom_call.1} parent=11 // pred_check
          %p435 = pneg %p191
        $region34: #{tpu_custom_call.1} parent=11 // pred_check_branch
          %437 = sbr.rel (%p435) target = $region36
        $region35: #{tpu_custom_call.1} parent=11 // pred_region
          %s439 = ssub.s32 16, 16
          %440 = vsyncadd [#allocation8], %s439
          %s442 = sshll.u32 [#allocation9], 4
          %s443 = int_to_ptr.vmem [resolvable:$true] %s442
          %445 = dma.hbm_to_vmem [thread:$0]  %s6, 16, %s443, [#allocation8]
        $region36: #{tpu_custom_call.1} parent=11 // pred_fallthru
          _
        // Predicated region
        $region37: #{tpu_custom_call.1} parent=11 // pred_check
          %p446 = pneg %p212
        $region38: #{tpu_custom_call.1} parent=11 // pred_check_branch
          %448 = sbr.rel (%p446) target = $region40
        $region39: #{tpu_custom_call.1} parent=11 // pred_region
          %s450 = ssub.s32 256, 256
          %451 = vsyncadd [#allocation11], %s450
          %s452 = sshll.u32 [#allocation10], 4
          %s453 = int_to_ptr.vmem [resolvable:$true] %s452
          %458 = dma.hbm_to_vmem [thread:$0]  %s7, 256, %s453, [#allocation11], 64, 64, 4
        $region40: #{tpu_custom_call.1} parent=11 // pred_fallthru
          _
        // Predicated region
        $region41: #{tpu_custom_call.1} parent=11 // pred_check
          %p459 = pneg %p233
        $region42: #{tpu_custom_call.1} parent=11 // pred_check_branch
          %461 = sbr.rel (%p459) target = $region44
        $region43: #{tpu_custom_call.1} parent=11 // pred_region
          %s463 = ssub.s32 16, 16
          %464 = vsyncadd [#allocation11], %s463
          %s466 = sshll.u32 [#allocation12], 4
          %s467 = int_to_ptr.vmem [resolvable:$true] %s466
          %469 = dma.hbm_to_vmem [thread:$0]  %s8, 16, %s467, [#allocation11]
        $region44: #{tpu_custom_call.1} parent=11 // pred_fallthru
          _
        // Predicated region
        $region45: #{tpu_custom_call.1} parent=11 // pred_check
          %p470 = pneg %p254
        $region46: #{tpu_custom_call.1} parent=11 // pred_check_branch
          %472 = sbr.rel (%p470) target = $region48
        $region47: #{tpu_custom_call.1} parent=11 // pred_region
          _
        $region48: #{tpu_custom_call.1} parent=11 // pred_fallthru
          _
        // Predicated region
        $region49: #{tpu_custom_call.1} parent=11 // pred_check
          %p473 = pneg %p275
        $region50: #{tpu_custom_call.1} parent=11 // pred_check_branch
          %475 = sbr.rel (%p473) target = $region52
        $region51: #{tpu_custom_call.1} parent=11 // pred_region
          _
        $region52: #{tpu_custom_call.1} parent=11 // pred_fallthru
          _
        // Predicated region
        $region53: #{tpu_custom_call.1} parent=11 // pred_check
          %p476 = pneg %p296
        $region54: #{tpu_custom_call.1} parent=11 // pred_check_branch
          %478 = sbr.rel (%p476) target = $region56
        $region55: #{tpu_custom_call.1} parent=11 // pred_region
          _
        $region56: #{tpu_custom_call.1} parent=11 // pred_fallthru
          _
        // Predicated region
        $region57: #{tpu_custom_call.1} parent=11 // pred_check
          %p479 = pneg %p317
        $region58: #{tpu_custom_call.1} parent=11 // pred_check_branch
          %481 = sbr.rel (%p479) target = $region60
        $region59: #{tpu_custom_call.1} parent=11 // pred_region
          _
        $region60: #{tpu_custom_call.1} parent=11 // pred_fallthru
          _
        // Predicated region
        $region61: #{tpu_custom_call.1} parent=11 // pred_check
          %p482 = pneg %p338
        $region62: #{tpu_custom_call.1} parent=11 // pred_check_branch
          %484 = sbr.rel (%p482) target = $region64
        $region63: #{tpu_custom_call.1} parent=11 // pred_region
          _
        $region64: #{tpu_custom_call.1} parent=11 // pred_fallthru
          _
        // Predicated region
        $region65: #{tpu_custom_call.1} parent=11 // pred_check
          %p485 = pneg %p359
        $region66: #{tpu_custom_call.1} parent=11 // pred_check_branch
          %487 = sbr.rel (%p485) target = $region68
        $region67: #{tpu_custom_call.1} parent=11 // pred_region
          _
        $region68: #{tpu_custom_call.1} parent=11 // pred_fallthru
          _
      $region12: #{tpu_custom_call.1} parent=5 // pred_fallthru
        _
      %p488 = scmp.lt.s32.totalorder %s27, 2
      // Predicated region
      $region69: #{tpu_custom_call.1} parent=5 // pred_check
        %p489 = pneg %p488
      $region70: #{tpu_custom_call.1} parent=5 // pred_check_branch
        %491 = sbr.rel (%p489) target = $region72
      $region71: #{tpu_custom_call.1} parent=5 // pred_region
        // Predicated region
        $region73: #{tpu_custom_call.1} parent=71 // pred_check
          %p492 = pneg %p59
        $region74: #{tpu_custom_call.1} parent=71 // pred_check_branch
          %494 = sbr.rel (%p492) target = $region76
        $region75: #{tpu_custom_call.1} parent=71 // pred_region
          %p495 = scmp.lt.s32.totalorder %s34, 1
          %s496 = scalar_select %p495, %s34, 1
          %s497 = smul.addr %s496, 2
          %s498 = smul.addr %s497, 8
          %s499 = scalar_lea.vmem %s0, %s498
        $region76: #{tpu_custom_call.1} parent=71 // pred_fallthru
          _
      $region72: #{tpu_custom_call.1} parent=5 // pred_fallthru
        _
      %p500 = scmp.le.s32.totalorder 1, %s27
      %p501 = scmp.lt.s32.totalorder %s27, 3
      %p502 = pnand %p500, %p501
      %p503 = pneg %p502
      // Predicated region
      $region77: #{tpu_custom_call.1} parent=5 // pred_check
        _
      $region78: #{tpu_custom_call.1} parent=5 // pred_check_branch
        %505 = sbr.rel (%p502) target = $region80
      $region79: #{tpu_custom_call.1} parent=5 // pred_region
        %s506 = ssub.s32 %s27, 1
        // Predicated region
        $region81: #{tpu_custom_call.1} parent=79 // pred_check
          %p507 = pneg %p149
        $region82: #{tpu_custom_call.1} parent=79 // pred_check_branch
          %509 = sbr.rel (%p507) target = $region84
        $region83: #{tpu_custom_call.1} parent=79 // pred_region
          %510 = dma.done [#allocation5], 16
        $region84: #{tpu_custom_call.1} parent=79 // pred_fallthru
          _
        // Predicated region
        $region85: #{tpu_custom_call.1} parent=79 // pred_check
          %p511 = pneg %p170
        $region86: #{tpu_custom_call.1} parent=79 // pred_check_branch
          %513 = sbr.rel (%p511) target = $region88
        $region87: #{tpu_custom_call.1} parent=79 // pred_region
          %514 = dma.done [#allocation8], 256
        $region88: #{tpu_custom_call.1} parent=79 // pred_fallthru
          _
        // Predicated region
        $region89: #{tpu_custom_call.1} parent=79 // pred_check
          %p515 = pneg %p191
        $region90: #{tpu_custom_call.1} parent=79 // pred_check_branch
          %517 = sbr.rel (%p515) target = $region92
        $region91: #{tpu_custom_call.1} parent=79 // pred_region
          %518 = dma.done [#allocation8], 16
        $region92: #{tpu_custom_call.1} parent=79 // pred_fallthru
          _
        // Predicated region
        $region93: #{tpu_custom_call.1} parent=79 // pred_check
          %p519 = pneg %p212
        $region94: #{tpu_custom_call.1} parent=79 // pred_check_branch
          %521 = sbr.rel (%p519) target = $region96
        $region95: #{tpu_custom_call.1} parent=79 // pred_region
          %522 = dma.done [#allocation11], 256
        $region96: #{tpu_custom_call.1} parent=79 // pred_fallthru
          _
        // Predicated region
        $region97: #{tpu_custom_call.1} parent=79 // pred_check
          %p523 = pneg %p233
        $region98: #{tpu_custom_call.1} parent=79 // pred_check_branch
          %525 = sbr.rel (%p523) target = $region100
        $region99: #{tpu_custom_call.1} parent=79 // pred_region
          %526 = dma.done [#allocation11], 16
        $region100: #{tpu_custom_call.1} parent=79 // pred_fallthru
          _
        %p527 = scmp.lt.s32.totalorder %s36, 1
        %s528 = scalar_select %p527, %s36, 1
        %s529 = smul.addr %s528, 2
        %s530 = smul.addr %s529, 8
        %s531 = scalar_lea.vmem %s0, %s530
        %p532 = pneg %p65
        %p533 = pneg %p62
        %p534 = pneg %p86
        %p535 = pneg %p83
        %p536 = pneg %p107
        %p537 = pneg %p104
        %p538 = pneg %p128
        %p539 = pneg %p125
        %p540 = pneg %p149
        %p541 = pneg %p146
        %p542 = pneg %p170
        %p543 = pneg %p167
        %p544 = pneg %p191
        %p545 = pneg %p188
        %p546 = pneg %p212
        %p547 = pneg %p209
        %p548 = pneg %p233
        %p549 = pneg %p230
        %p550 = pneg %p254
        %p551 = pneg %p251
        %p552 = pneg %p275
        %p553 = pneg %p272
        %p554 = pneg %p296
        %p555 = pneg %p293
        %p556 = pneg %p317
        %p557 = pneg %p314
        %p558 = pneg %p338
        %p559 = pneg %p335
        %p560 = pneg %p359
        %p561 = pneg %p356
        %p562 = pneg %p387
        %p563 = pneg %p384
        %s564 = sand.u32 %s374, 1
        %s565 = scalar_lea.sflag [#allocation6], %s564
        %s566 = sand.u32 %s374, 1
        %s567 = smul.addr %s566, 16
        %s568 = scalar_lea.vmem [#allocation13], %s567
        %p569 = scmp.lt.s32.totalorder %s36, 1
        %s570 = scalar_select %p569, %s36, 1
        %s571 = smul.addr %s570, 2
        %s572 = smul.addr %s571, 8
        %s573 = scalar_lea.vmem %s0, %s572
        %s574 = smul.u32 2, %s37
        %p576 = scmp.eq.s32.totalorder %s37, 0
        // Predicated region
        $region101: #{tpu_custom_call.1} parent=79 // pred_check
          %p577 = pneg %p576
        $region102: #{tpu_custom_call.1} parent=79 // pred_check_branch
          %579 = sbr.rel (%p577) target = $region104
        $region103: #{tpu_custom_call.1} parent=79 // pred_region
          %v580 = vld [vmem:[%s573] sm:$0xff]
          %v581 = vld [vmem:[%s573 + $0x8] sm:$0xff]
          %vm582 = vcmask 261120
          %v583 = vsel %vm582, %v580, 0.0
          %584 = vadd.xlane.f32.xlu0 %v583
          %v585 = vpop.xlane.xlu0 %584
          %v586 = vsel %vm582, %v581, 0.0
          %587 = vadd.xlane.f32.xlu0 %v586
          %v588 = vpop.xlane.xlu0 %587
          %v589 = vrcp.pop 32.0
          %v590 = vmul.f32 %v585, %v589
          %v591 = vmul.f32 %v588, %v589
          %v592 = vsub.f32 %v580, %v590
          %v593 = vsub.f32 %v581, %v591
          %v594 = vmul.f32 %v592, %v592
          %v595 = vmul.f32 %v593, %v593
          %v596 = vsel %vm582, %v594, 0.0
          %597 = vadd.xlane.f32.xlu0 %v596
          %v598 = vpop.xlane.xlu0 %597
          %v599 = vsel %vm582, %v595, 0.0
          %600 = vadd.xlane.f32.xlu0 %v599
          %v601 = vpop.xlane.xlu0 %600
          %v602 = vmul.f32 %v598, %v589
          %v603 = vmul.f32 %v601, %v589
          %v604 = vadd.f32 %v602, 1e-05
          %v605 = vadd.f32 %v603, 1e-05
          %v606 = vrsqrt.pop %v604
          %v607 = vrsqrt.pop %v605
          %v608 = vmul.f32 %v592, %v606
          %v609 = vmul.f32 %v593, %v607
          %v610 = vld [vmem:[%s1] sm:$0x1]
          %v612 = vlaneseq
          %v613 = vshrl.u32 %v612, 7
          %v614 = vsub.s32 0, %v613
          %v615 = vrot.slane %v610, %v614
          %v617 = vmul.f32 %v608, %v615
          %v618 = vmul.f32 %v609, %v615
          %v619 = vld [vmem:[%s2] sm:$0x1]
          %v621 = vlaneseq
          %v622 = vshrl.u32 %v621, 7
          %v623 = vsub.s32 0, %v622
          %v624 = vrot.slane %v619, %v623
          %v626 = vadd.f32 %v617, %v624
          %v627 = vadd.f32 %v618, %v624
          %v628 = vpack.c.bf16 %v627, %v626
          %v629 = vld [vmem:[#allocation7] sm:$0xf]
          %v630 = vld [vmem:[#allocation7 + $0x4] sm:$0xf]
          %v631 = vld [vmem:[#allocation7 + $0x8] sm:$0xf]
          %v632 = vld [vmem:[#allocation7 + $0xc] sm:$0xf]
          %v633 = vld [vmem:[#allocation9] sm:$0x1]
          %v635 = vlaneseq
          %v636 = vshrl.u32 %v635, 7
          %v637 = vsub.s32 0, %v636
          %v638 = vrot.slane %v633, %v637
          %v644 = vunpack.c.l.b16 %v629
          %v645 = vunpack.c.l.b16 %v630
          %v646 = vunpack.c.l.b16 %v631
          %v647 = vunpack.c.l.b16 %v632
          %v648 = vpack.c.b16 %v645, %v644
          %v649 = vpack.c.b16 %v647, %v646
          %v653 = vsel %vm582, %v628, 0
          %655 = vmatprep.subr.bf16.mxu0 0
          %656 = vmatpush1.bf16.msra.mxu0 %v648
          %657 = vmatprep.subr.bf16.mxu0 0
          %658 = vmatpush1.bf16.msra.mxu0 %v649
          %659 = vmatprep.subr.bf16.mxu0 0
          %660 = vmatpush1.bf16.msra.mxu0 0
          %661 = vmatprep.subr.bf16.mxu0 0
          %662 = vmatpush1.bf16.msra.mxu0 0
          %663 = vmatprep.subr.bf16.mxu0 0
          %664 = vmatpush1.bf16.msra.mxu0 0
          %665 = vmatprep.subr.bf16.mxu0 0
          %666 = vmatpush1.bf16.msra.mxu0 0
          %667 = vmatprep.subr.bf16.mxu0 0
          %668 = vmatpush1.bf16.msra.mxu0 0
          %669 = vmatprep.subr.bf16.mxu0 0
          %670 = vmatpush1.bf16.msra.mxu0 0
          %671 = vmatprep.subr.bf16.mxu0 0
          %672 = vmatpush1.bf16.msra.mxu0 0
          %673 = vmatprep.subr.bf16.mxu0 0
          %674 = vmatpush1.bf16.msra.mxu0 0
          %675 = vmatprep.subr.bf16.mxu0 0
          %676 = vmatpush1.bf16.msra.mxu0 0
          %677 = vmatprep.subr.bf16.mxu0 0
          %678 = vmatpush1.bf16.msra.mxu0 0
          %679 = vmatprep.subr.bf16.mxu0 0
          %680 = vmatpush1.bf16.msra.mxu0 0
          %681 = vmatprep.subr.bf16.mxu0 0
          %682 = vmatpush1.bf16.msra.mxu0 0
          %683 = vmatprep.subr.bf16.mxu0 0
          %684 = vmatpush1.bf16.msra.mxu0 0
          %685 = vmatprep.subr.bf16.mxu0 0
          %686 = vmatpush1.bf16.msra.mxu0 0
          %687 = vmatprep.mubr.bf16.mxu0 0
          %688 = vmatmul.mubr.bf16.gmra.mrb[0].mxu0 %v653
          %v689 = vpop.f32.mrb[0].mxu0
          %v690 = vadd.f32 %v638, %v689
          %v691 = vpop.f32.mrb[0].mxu0
          %v692 = vpop.f32.mrb[0].mxu0
          %v693 = vadd.f32 %v638, %v692
          %v694 = vpop.f32.mrb[0].mxu0
          %695 = vdwg.mxu0
          %v696 = vpack.c.bf16 %v693, %v690
          %698 = vrot.lane.b32.xlu0 %v696, 120
          %v699 = vpop.permute.xlu0 %698
          %700 = vrot.lane.b32.xlu0 %v696, 112
          %v701 = vpop.permute.xlu0 %700
          %702 = vrot.lane.b32.xlu0 %v696, 104
          %v703 = vpop.permute.xlu0 %702
          %v706 = vpack.i.b16 %v699, %v696
          %v708 = vshrl.u32 %v696, 16
          %v709 = vshrl.u32 %v699, 16
          %v710 = vpack.i.b16 %v709, %v708
          %v714 = vpack.i.b16 %v703, %v701
          %v716 = vshrl.u32 %v701, 16
          %v717 = vshrl.u32 %v703, 16
          %v718 = vpack.i.b16 %v717, %v716
          %v721 = vpack.i.b16 0, 0
          %v723 = vshrl.u32 0, 16
          %v724 = vpack.i.b16 %v723, %v723
          %v726 = vcombine.high %v706, %v721
          %v728 = vunpack.c.l.s4 1983009808
          %v729 = vunpack.c.0.s8 %v728
          %v730 = vlaneseq
          %v731 = vshrl.u32 %v730, 7
          %v732 = vsub.s32 %v729, %v731
          %v733 = vrot.slane %v706, %v732
          %v735 = vunpack.c.l.s4 1983009808
          %v736 = vunpack.c.0.s8 %v735
          %v737 = vlaneseq
          %v738 = vshrl.u32 %v737, 7
          %v739 = vsub.s32 %v736, %v738
          %v740 = vrot.slane %v726, %v739
          %v741 = vcombine.high %v714, %v721
          %v743 = vunpack.c.l.s4 1983009808
          %v744 = vunpack.c.0.s8 %v743
          %v745 = vlaneseq
          %v746 = vshrl.u32 %v745, 7
          %v747 = vsub.s32 %v744, %v746
          %v748 = vrot.slane %v714, %v747
          %v750 = vunpack.c.l.s4 1983009808
          %v751 = vunpack.c.0.s8 %v750
          %v752 = vlaneseq
          %v753 = vshrl.u32 %v752, 7
          %v754 = vsub.s32 %v751, %v753
          %v755 = vrot.slane %v741, %v754
          %v756 = vcombine.low %v733, %v748
          %v757 = vcombine.high %v733, %v748
          %v759 = vunpack.c.l.s4 1934713408
          %v760 = vunpack.c.0.s8 %v759
          %v761 = vlaneseq
          %v762 = vshrl.u32 %v761, 7
          %v763 = vsub.s32 %v760, %v762
          %v764 = vrot.slane %v756, %v763
          %v766 = vunpack.c.l.s4 1934713408
          %v767 = vunpack.c.0.s8 %v766
          %v768 = vlaneseq
          %v769 = vshrl.u32 %v768, 7
          %v770 = vsub.s32 %v767, %v769
          %v771 = vrot.slane %v757, %v770
          %v772 = vcombine.low %v740, %v755
          %v773 = vcombine.high %v740, %v755
          %v775 = vunpack.c.l.s4 1934713408
          %v776 = vunpack.c.0.s8 %v775
          %v777 = vlaneseq
          %v778 = vshrl.u32 %v777, 7
          %v779 = vsub.s32 %v776, %v778
          %v780 = vrot.slane %v772, %v779
          %v782 = vunpack.c.l.s4 1934713408
          %v783 = vunpack.c.0.s8 %v782
          %v784 = vlaneseq
          %v785 = vshrl.u32 %v784, 7
          %v786 = vsub.s32 %v783, %v785
          %v787 = vrot.slane %v773, %v786
          %v788 = vcombine.high %v764, 0
          %v789 = vcombine.high %v771, 0
          %v790 = vcombine.high %v780, 0
          %v791 = vcombine.high %v787, 0
          %v792 = vcombine.high %v710, %v724
          %v794 = vunpack.c.l.s4 1983009808
          %v795 = vunpack.c.0.s8 %v794
          %v796 = vlaneseq
          %v797 = vshrl.u32 %v796, 7
          %v798 = vsub.s32 %v795, %v797
          %v799 = vrot.slane %v710, %v798
          %v801 = vunpack.c.l.s4 1983009808
          %v802 = vunpack.c.0.s8 %v801
          %v803 = vlaneseq
          %v804 = vshrl.u32 %v803, 7
          %v805 = vsub.s32 %v802, %v804
          %v806 = vrot.slane %v792, %v805
          %v807 = vcombine.high %v718, %v724
          %v809 = vunpack.c.l.s4 1983009808
          %v810 = vunpack.c.0.s8 %v809
          %v811 = vlaneseq
          %v812 = vshrl.u32 %v811, 7
          %v813 = vsub.s32 %v810, %v812
          %v814 = vrot.slane %v718, %v813
          %v816 = vunpack.c.l.s4 1983009808
          %v817 = vunpack.c.0.s8 %v816
          %v818 = vlaneseq
          %v819 = vshrl.u32 %v818, 7
          %v820 = vsub.s32 %v817, %v819
          %v821 = vrot.slane %v807, %v820
          %v822 = vcombine.low %v799, %v814
          %v823 = vcombine.high %v799, %v814
          %v825 = vunpack.c.l.s4 1934713408
          %v826 = vunpack.c.0.s8 %v825
          %v827 = vlaneseq
          %v828 = vshrl.u32 %v827, 7
          %v829 = vsub.s32 %v826, %v828
          %v830 = vrot.slane %v822, %v829
          %v832 = vunpack.c.l.s4 1934713408
          %v833 = vunpack.c.0.s8 %v832
          %v834 = vlaneseq
          %v835 = vshrl.u32 %v834, 7
          %v836 = vsub.s32 %v833, %v835
          %v837 = vrot.slane %v823, %v836
          %v838 = vcombine.low %v806, %v821
          %v839 = vcombine.high %v806, %v821
          %v841 = vunpack.c.l.s4 1934713408
          %v842 = vunpack.c.0.s8 %v841
          %v843 = vlaneseq
          %v844 = vshrl.u32 %v843, 7
          %v845 = vsub.s32 %v842, %v844
          %v846 = vrot.slane %v838, %v845
          %v848 = vunpack.c.l.s4 1934713408
          %v849 = vunpack.c.0.s8 %v848
          %v850 = vlaneseq
          %v851 = vshrl.u32 %v850, 7
          %v852 = vsub.s32 %v849, %v851
          %v853 = vrot.slane %v839, %v852
          %v854 = vcombine.high %v830, 0
          %v855 = vcombine.high %v837, 0
          %v856 = vcombine.high %v846, 0
          %v857 = vcombine.high %v853, 0
          %v858 = vcombine.low %v764, %v771
          %v860 = vunpack.c.l.s4 1983009808
          %v861 = vunpack.c.0.s8 %v860
          %v862 = vlaneseq
          %v863 = vshrl.u32 %v862, 7
          %v864 = vsub.s32 %v861, %v863
          %v865 = vrot.slane %v858, %v864
          %v866 = vcombine.low %v788, %v789
          %v868 = vunpack.c.l.s4 1983009808
          %v869 = vunpack.c.0.s8 %v868
          %v870 = vlaneseq
          %v871 = vshrl.u32 %v870, 7
          %v872 = vsub.s32 %v869, %v871
          %v873 = vrot.slane %v866, %v872
          %v874 = vcombine.low %v780, %v787
          %v876 = vunpack.c.l.s4 1983009808
          %v877 = vunpack.c.0.s8 %v876
          %v878 = vlaneseq
          %v879 = vshrl.u32 %v878, 7
          %v880 = vsub.s32 %v877, %v879
          %v881 = vrot.slane %v874, %v880
          %v882 = vcombine.low %v790, %v791
          %v884 = vunpack.c.l.s4 1983009808
          %v885 = vunpack.c.0.s8 %v884
          %v886 = vlaneseq
          %v887 = vshrl.u32 %v886, 7
          %v888 = vsub.s32 %v885, %v887
          %v889 = vrot.slane %v882, %v888
          %v890 = vcombine.low %v865, %v873
          %v892 = vunpack.c.l.s4 1934713408
          %v893 = vunpack.c.0.s8 %v892
          %v894 = vlaneseq
          %v895 = vshrl.u32 %v894, 7
          %v896 = vsub.s32 %v893, %v895
          %v897 = vrot.slane %v890, %v896
          %v898 = vcombine.low %v881, %v889
          %v900 = vunpack.c.l.s4 1934713408
          %v901 = vunpack.c.0.s8 %v900
          %v902 = vlaneseq
          %v903 = vshrl.u32 %v902, 7
          %v904 = vsub.s32 %v901, %v903
          %v905 = vrot.slane %v898, %v904
          %v906 = vcombine.low %v897, %v905
          %v907 = vcombine.high %v897, %v905
          %v908 = vcombine.low %v830, %v837
          %v910 = vunpack.c.l.s4 1983009808
          %v911 = vunpack.c.0.s8 %v910
          %v912 = vlaneseq
          %v913 = vshrl.u32 %v912, 7
          %v914 = vsub.s32 %v911, %v913
          %v915 = vrot.slane %v908, %v914
          %v916 = vcombine.low %v854, %v855
          %v918 = vunpack.c.l.s4 1983009808
          %v919 = vunpack.c.0.s8 %v918
          %v920 = vlaneseq
          %v921 = vshrl.u32 %v920, 7
          %v922 = vsub.s32 %v919, %v921
          %v923 = vrot.slane %v916, %v922
          %v924 = vcombine.low %v846, %v853
          %v926 = vunpack.c.l.s4 1983009808
          %v927 = vunpack.c.0.s8 %v926
          %v928 = vlaneseq
          %v929 = vshrl.u32 %v928, 7
          %v930 = vsub.s32 %v927, %v929
          %v931 = vrot.slane %v924, %v930
          %v932 = vcombine.low %v856, %v857
          %v934 = vunpack.c.l.s4 1983009808
          %v935 = vunpack.c.0.s8 %v934
          %v936 = vlaneseq
          %v937 = vshrl.u32 %v936, 7
          %v938 = vsub.s32 %v935, %v937
          %v939 = vrot.slane %v932, %v938
          %v940 = vcombine.low %v915, %v923
          %v942 = vunpack.c.l.s4 1934713408
          %v943 = vunpack.c.0.s8 %v942
          %v944 = vlaneseq
          %v945 = vshrl.u32 %v944, 7
          %v946 = vsub.s32 %v943, %v945
          %v947 = vrot.slane %v940, %v946
          %v948 = vcombine.low %v931, %v939
          %v950 = vunpack.c.l.s4 1934713408
          %v951 = vunpack.c.0.s8 %v950
          %v952 = vlaneseq
          %v953 = vshrl.u32 %v952, 7
          %v954 = vsub.s32 %v951, %v953
          %v955 = vrot.slane %v948, %v954
          %v956 = vcombine.low %v947, %v955
          %v957 = vcombine.high %v947, %v955
          %v960 = vpack.i.b16 %v956, %v906
          %v962 = vshrl.u32 %v906, 16
          %v963 = vshrl.u32 %v956, 16
          %v964 = vpack.i.b16 %v963, %v962
          %v968 = vpack.i.b16 %v957, %v907
          %v970 = vshrl.u32 %v907, 16
          %v971 = vshrl.u32 %v957, 16
          %v972 = vpack.i.b16 %v971, %v970
          %vm974 = vcmask 64512
          %975 = vst.msk [vmem:[#allocation2] sm:$0xff] %vm974, %v960
          %976 = vst.msk [vmem:[#allocation2 + $0x8] sm:$0xff] %vm974, %v964
          %977 = vst.msk [vmem:[#allocation2 + $0x10] sm:$0xff] %vm974, %v968
          %978 = vst.msk [vmem:[#allocation2 + $0x18] sm:$0xff] %vm974, %v972
          %979 = vrot.lane.b32.xlu0 %v696, 96
          %v980 = vpop.permute.xlu0 %979
          %981 = vrot.lane.b32.xlu0 %v699, 96
          %v982 = vpop.permute.xlu0 %981
          %983 = vrot.lane.b32.xlu0 %v701, 96
          %v984 = vpop.permute.xlu0 %983
          %985 = vrot.lane.b32.xlu0 %v703, 96
          %v986 = vpop.permute.xlu0 %985
          %v989 = vpack.i.b16 %v982, %v980
          %v991 = vshrl.u32 %v980, 16
          %v992 = vshrl.u32 %v982, 16
          %v993 = vpack.i.b16 %v992, %v991
          %v997 = vpack.i.b16 %v986, %v984
          %v999 = vshrl.u32 %v984, 16
          %v1000 = vshrl.u32 %v986, 16
          %v1001 = vpack.i.b16 %v1000, %v999
          %v1003 = vcombine.high %v989, %v721
          %v1005 = vunpack.c.l.s4 1983009808
          %v1006 = vunpack.c.0.s8 %v1005
          %v1007 = vlaneseq
          %v1008 = vshrl.u32 %v1007, 7
          %v1009 = vsub.s32 %v1006, %v1008
          %v1010 = vrot.slane %v989, %v1009
          %v1012 = vunpack.c.l.s4 1983009808
          %v1013 = vunpack.c.0.s8 %v1012
          %v1014 = vlaneseq
          %v1015 = vshrl.u32 %v1014, 7
          %v1016 = vsub.s32 %v1013, %v1015
          %v1017 = vrot.slane %v1003, %v1016
          %v1018 = vcombine.high %v997, %v721
          %v1020 = vunpack.c.l.s4 1983009808
          %v1021 = vunpack.c.0.s8 %v1020
          %v1022 = vlaneseq
          %v1023 = vshrl.u32 %v1022, 7
          %v1024 = vsub.s32 %v1021, %v1023
          %v1025 = vrot.slane %v997, %v1024
          %v1027 = vunpack.c.l.s4 1983009808
          %v1028 = vunpack.c.0.s8 %v1027
          %v1029 = vlaneseq
          %v1030 = vshrl.u32 %v1029, 7
          %v1031 = vsub.s32 %v1028, %v1030
          %v1032 = vrot.slane %v1018, %v1031
          %v1033 = vcombine.low %v1010, %v1025
          %v1034 = vcombine.high %v1010, %v1025
          %v1036 = vunpack.c.l.s4 1934713408
          %v1037 = vunpack.c.0.s8 %v1036
          %v1038 = vlaneseq
          %v1039 = vshrl.u32 %v1038, 7
          %v1040 = vsub.s32 %v1037, %v1039
          %v1041 = vrot.slane %v1033, %v1040
          %v1043 = vunpack.c.l.s4 1934713408
          %v1044 = vunpack.c.0.s8 %v1043
          %v1045 = vlaneseq
          %v1046 = vshrl.u32 %v1045, 7
          %v1047 = vsub.s32 %v1044, %v1046
          %v1048 = vrot.slane %v1034, %v1047
          %v1049 = vcombine.low %v1017, %v1032
          %v1050 = vcombine.high %v1017, %v1032
          %v1052 = vunpack.c.l.s4 1934713408
          %v1053 = vunpack.c.0.s8 %v1052
          %v1054 = vlaneseq
          %v1055 = vshrl.u32 %v1054, 7
          %v1056 = vsub.s32 %v1053, %v1055
          %v1057 = vrot.slane %v1049, %v1056
          %v1059 = vunpack.c.l.s4 1934713408
          %v1060 = vunpack.c.0.s8 %v1059
          %v1061 = vlaneseq
          %v1062 = vshrl.u32 %v1061, 7
          %v1063 = vsub.s32 %v1060, %v1062
          %v1064 = vrot.slane %v1050, %v1063
          %v1065 = vcombine.high %v1041, 0
          %v1066 = vcombine.high %v1048, 0
          %v1067 = vcombine.high %v1057, 0
          %v1068 = vcombine.high %v1064, 0
          %v1069 = vcombine.high %v993, %v724
          %v1071 = vunpack.c.l.s4 1983009808
          %v1072 = vunpack.c.0.s8 %v1071
          %v1073 = vlaneseq
          %v1074 = vshrl.u32 %v1073, 7
          %v1075 = vsub.s32 %v1072, %v1074
          %v1076 = vrot.slane %v993, %v1075
          %v1078 = vunpack.c.l.s4 1983009808
          %v1079 = vunpack.c.0.s8 %v1078
          %v1080 = vlaneseq
          %v1081 = vshrl.u32 %v1080, 7
          %v1082 = vsub.s32 %v1079, %v1081
          %v1083 = vrot.slane %v1069, %v1082
          %v1084 = vcombine.high %v1001, %v724
          %v1086 = vunpack.c.l.s4 1983009808
          %v1087 = vunpack.c.0.s8 %v1086
          %v1088 = vlaneseq
          %v1089 = vshrl.u32 %v1088, 7
          %v1090 = vsub.s32 %v1087, %v1089
          %v1091 = vrot.slane %v1001, %v1090
          %v1093 = vunpack.c.l.s4 1983009808
          %v1094 = vunpack.c.0.s8 %v1093
          %v1095 = vlaneseq
          %v1096 = vshrl.u32 %v1095, 7
          %v1097 = vsub.s32 %v1094, %v1096
          %v1098 = vrot.slane %v1084, %v1097
          %v1099 = vcombine.low %v1076, %v1091
          %v1100 = vcombine.high %v1076, %v1091
          %v1102 = vunpack.c.l.s4 1934713408
          %v1103 = vunpack.c.0.s8 %v1102
          %v1104 = vlaneseq
          %v1105 = vshrl.u32 %v1104, 7
          %v1106 = vsub.s32 %v1103, %v1105
          %v1107 = vrot.slane %v1099, %v1106
          %v1109 = vunpack.c.l.s4 1934713408
          %v1110 = vunpack.c.0.s8 %v1109
          %v1111 = vlaneseq
          %v1112 = vshrl.u32 %v1111, 7
          %v1113 = vsub.s32 %v1110, %v1112
          %v1114 = vrot.slane %v1100, %v1113
          %v1115 = vcombine.low %v1083, %v1098
          %v1116 = vcombine.high %v1083, %v1098
          %v1118 = vunpack.c.l.s4 1934713408
          %v1119 = vunpack.c.0.s8 %v1118
          %v1120 = vlaneseq
          %v1121 = vshrl.u32 %v1120, 7
          %v1122 = vsub.s32 %v1119, %v1121
          %v1123 = vrot.slane %v1115, %v1122
          %v1125 = vunpack.c.l.s4 1934713408
          %v1126 = vunpack.c.0.s8 %v1125
          %v1127 = vlaneseq
          %v1128 = vshrl.u32 %v1127, 7
          %v1129 = vsub.s32 %v1126, %v1128
          %v1130 = vrot.slane %v1116, %v1129
          %v1131 = vcombine.high %v1107, 0
          %v1132 = vcombine.high %v1114, 0
          %v1133 = vcombine.high %v1123, 0
          %v1134 = vcombine.high %v1130, 0
          %v1135 = vcombine.low %v1041, %v1048
          %v1137 = vunpack.c.l.s4 1983009808
          %v1138 = vunpack.c.0.s8 %v1137
          %v1139 = vlaneseq
          %v1140 = vshrl.u32 %v1139, 7
          %v1141 = vsub.s32 %v1138, %v1140
          %v1142 = vrot.slane %v1135, %v1141
          %v1143 = vcombine.low %v1065, %v1066
          %v1145 = vunpack.c.l.s4 1983009808
          %v1146 = vunpack.c.0.s8 %v1145
          %v1147 = vlaneseq
          %v1148 = vshrl.u32 %v1147, 7
          %v1149 = vsub.s32 %v1146, %v1148
          %v1150 = vrot.slane %v1143, %v1149
          %v1151 = vcombine.low %v1057, %v1064
          %v1153 = vunpack.c.l.s4 1983009808
          %v1154 = vunpack.c.0.s8 %v1153
          %v1155 = vlaneseq
          %v1156 = vshrl.u32 %v1155, 7
          %v1157 = vsub.s32 %v1154, %v1156
          %v1158 = vrot.slane %v1151, %v1157
          %v1159 = vcombine.low %v1067, %v1068
          %v1161 = vunpack.c.l.s4 1983009808
          %v1162 = vunpack.c.0.s8 %v1161
          %v1163 = vlaneseq
          %v1164 = vshrl.u32 %v1163, 7
          %v1165 = vsub.s32 %v1162, %v1164
          %v1166 = vrot.slane %v1159, %v1165
          %v1167 = vcombine.low %v1142, %v1150
          %v1169 = vunpack.c.l.s4 1934713408
          %v1170 = vunpack.c.0.s8 %v1169
          %v1171 = vlaneseq
          %v1172 = vshrl.u32 %v1171, 7
          %v1173 = vsub.s32 %v1170, %v1172
          %v1174 = vrot.slane %v1167, %v1173
          %v1175 = vcombine.low %v1158, %v1166
          %v1177 = vunpack.c.l.s4 1934713408
          %v1178 = vunpack.c.0.s8 %v1177
          %v1179 = vlaneseq
          %v1180 = vshrl.u32 %v1179, 7
          %v1181 = vsub.s32 %v1178, %v1180
          %v1182 = vrot.slane %v1175, %v1181
          %v1183 = vcombine.low %v1174, %v1182
          %v1184 = vcombine.high %v1174, %v1182
          %v1185 = vcombine.low %v1107, %v1114
          %v1187 = vunpack.c.l.s4 1983009808
          %v1188 = vunpack.c.0.s8 %v1187
          %v1189 = vlaneseq
          %v1190 = vshrl.u32 %v1189, 7
          %v1191 = vsub.s32 %v1188, %v1190
          %v1192 = vrot.slane %v1185, %v1191
          %v1193 = vcombine.low %v1131, %v1132
          %v1195 = vunpack.c.l.s4 1983009808
          %v1196 = vunpack.c.0.s8 %v1195
          %v1197 = vlaneseq
          %v1198 = vshrl.u32 %v1197, 7
          %v1199 = vsub.s32 %v1196, %v1198
          %v1200 = vrot.slane %v1193, %v1199
          %v1201 = vcombine.low %v1123, %v1130
          %v1203 = vunpack.c.l.s4 1983009808
          %v1204 = vunpack.c.0.s8 %v1203
          %v1205 = vlaneseq
          %v1206 = vshrl.u32 %v1205, 7
          %v1207 = vsub.s32 %v1204, %v1206
          %v1208 = vrot.slane %v1201, %v1207
          %v1209 = vcombine.low %v1133, %v1134
          %v1211 = vunpack.c.l.s4 1983009808
          %v1212 = vunpack.c.0.s8 %v1211
          %v1213 = vlaneseq
          %v1214 = vshrl.u32 %v1213, 7
          %v1215 = vsub.s32 %v1212, %v1214
          %v1216 = vrot.slane %v1209, %v1215
          %v1217 = vcombine.low %v1192, %v1200
          %v1219 = vunpack.c.l.s4 1934713408
          %v1220 = vunpack.c.0.s8 %v1219
          %v1221 = vlaneseq
          %v1222 = vshrl.u32 %v1221, 7
          %v1223 = vsub.s32 %v1220, %v1222
          %v1224 = vrot.slane %v1217, %v1223
          %v1225 = vcombine.low %v1208, %v1216
          %v1227 = vunpack.c.l.s4 1934713408
          %v1228 = vunpack.c.0.s8 %v1227
          %v1229 = vlaneseq
          %v1230 = vshrl.u32 %v1229, 7
          %v1231 = vsub.s32 %v1228, %v1230
          %v1232 = vrot.slane %v1225, %v1231
          %v1233 = vcombine.low %v1224, %v1232
          %v1234 = vcombine.high %v1224, %v1232
          %v1237 = vpack.i.b16 %v1233, %v1183
          %v1239 = vshrl.u32 %v1183, 16
          %v1240 = vshrl.u32 %v1233, 16
          %v1241 = vpack.i.b16 %v1240, %v1239
          %v1245 = vpack.i.b16 %v1234, %v1184
          %v1247 = vshrl.u32 %v1184, 16
          %v1248 = vshrl.u32 %v1234, 16
          %v1249 = vpack.i.b16 %v1248, %v1247
          %1251 = vst.msk [vmem:[#allocation3] sm:$0xff] %vm974, %v1237
          %1252 = vst.msk [vmem:[#allocation3 + $0x8] sm:$0xff] %vm974, %v1241
          %1253 = vst.msk [vmem:[#allocation3 + $0x10] sm:$0xff] %vm974, %v1245
          %1254 = vst.msk [vmem:[#allocation3 + $0x18] sm:$0xff] %vm974, %v1249
        $region104: #{tpu_custom_call.1} parent=79 // pred_fallthru
          _
        %s1255 = smul.u32 %s37, 16
        %s1256 = scalar_lea.vmem %s573, %s1255
        %v1257 = vld [vmem:[%s1256] sm:$0xff]
        %v1258 = vld [vmem:[%s1256 + $0x8] sm:$0xff]
        %vm1259 = vcmask 261120
        %v1260 = vsel %vm1259, %v1257, 0.0
        %1261 = vadd.xlane.f32.xlu0 %v1260
        %v1262 = vpop.xlane.xlu0 %1261
        %v1263 = vsel %vm1259, %v1258, 0.0
        %1264 = vadd.xlane.f32.xlu0 %v1263
        %v1265 = vpop.xlane.xlu0 %1264
        %v1266 = vrcp.pop 32.0
        %v1267 = vmul.f32 %v1262, %v1266
        %v1268 = vmul.f32 %v1265, %v1266
        %v1269 = vsub.f32 %v1257, %v1267
        %v1270 = vsub.f32 %v1258, %v1268
        %v1271 = vmul.f32 %v1269, %v1269
        %v1272 = vmul.f32 %v1270, %v1270
        %v1273 = vsel %vm1259, %v1271, 0.0
        %1274 = vadd.xlane.f32.xlu0 %v1273
        %v1275 = vpop.xlane.xlu0 %1274
        %v1276 = vsel %vm1259, %v1272, 0.0
        %1277 = vadd.xlane.f32.xlu0 %v1276
        %v1278 = vpop.xlane.xlu0 %1277
        %v1279 = vmul.f32 %v1275, %v1266
        %v1280 = vmul.f32 %v1278, %v1266
        %v1281 = vadd.f32 %v1279, 1e-05
        %v1282 = vadd.f32 %v1280, 1e-05
        %v1283 = vrsqrt.pop %v1281
        %v1284 = vrsqrt.pop %v1282
        %v1285 = vmul.f32 %v1269, %v1283
        %v1286 = vmul.f32 %v1270, %v1284
        %v1287 = vld [vmem:[%s1] sm:$0x1]
        %v1289 = vlaneseq
        %v1290 = vshrl.u32 %v1289, 7
        %v1291 = vsub.s32 0, %v1290
        %v1292 = vrot.slane %v1287, %v1291
        %v1294 = vmul.f32 %v1285, %v1292
        %v1295 = vmul.f32 %v1286, %v1292
        %v1296 = vld [vmem:[%s2] sm:$0x1]
        %v1298 = vlaneseq
        %v1299 = vshrl.u32 %v1298, 7
        %v1300 = vsub.s32 0, %v1299
        %v1301 = vrot.slane %v1296, %v1300
        %v1303 = vadd.f32 %v1294, %v1301
        %v1304 = vadd.f32 %v1295, %v1301
        %v1305 = vpack.c.bf16 %v1304, %v1303
        %v1306 = vld [vmem:[%s3] sm:$0xf]
        %v1307 = vld [vmem:[%s3 + $0x4] sm:$0xf]
        %v1308 = vld [vmem:[%s3 + $0x8] sm:$0xf]
        %v1309 = vld [vmem:[%s3 + $0xc] sm:$0xf]
        %v1310 = vld [vmem:[#allocation4] sm:$0x1]
        %v1312 = vlaneseq
        %v1313 = vshrl.u32 %v1312, 7
        %v1314 = vsub.s32 0, %v1313
        %v1315 = vrot.slane %v1310, %v1314
        %v1321 = vunpack.c.l.b16 %v1306
        %v1322 = vunpack.c.l.b16 %v1307
        %v1323 = vunpack.c.l.b16 %v1308
        %v1324 = vunpack.c.l.b16 %v1309
        %v1325 = vpack.c.b16 %v1322, %v1321
        %v1326 = vpack.c.b16 %v1324, %v1323
        %v1330 = vsel %vm1259, %v1305, 0
        %1332 = vmatprep.subr.bf16.mxu0 0
        %1333 = vmatpush1.bf16.msra.mxu0 %v1325
        %1334 = vmatprep.subr.bf16.mxu0 0
        %1335 = vmatpush1.bf16.msra.mxu0 %v1326
        %1336 = vmatprep.subr.bf16.mxu0 0
        %1337 = vmatpush1.bf16.msra.mxu0 0
        %1338 = vmatprep.subr.bf16.mxu0 0
        %1339 = vmatpush1.bf16.msra.mxu0 0
        %1340 = vmatprep.subr.bf16.mxu0 0
        %1341 = vmatpush1.bf16.msra.mxu0 0
        %1342 = vmatprep.subr.bf16.mxu0 0
        %1343 = vmatpush1.bf16.msra.mxu0 0
        %1344 = vmatprep.subr.bf16.mxu0 0
        %1345 = vmatpush1.bf16.msra.mxu0 0
        %1346 = vmatprep.subr.bf16.mxu0 0
        %1347 = vmatpush1.bf16.msra.mxu0 0
        %1348 = vmatprep.subr.bf16.mxu0 0
        %1349 = vmatpush1.bf16.msra.mxu0 0
        %1350 = vmatprep.subr.bf16.mxu0 0
        %1351 = vmatpush1.bf16.msra.mxu0 0
        %1352 = vmatprep.subr.bf16.mxu0 0
        %1353 = vmatpush1.bf16.msra.mxu0 0
        %1354 = vmatprep.subr.bf16.mxu0 0
        %1355 = vmatpush1.bf16.msra.mxu0 0
        %1356 = vmatprep.subr.bf16.mxu0 0
        %1357 = vmatpush1.bf16.msra.mxu0 0
        %1358 = vmatprep.subr.bf16.mxu0 0
        %1359 = vmatpush1.bf16.msra.mxu0 0
        %1360 = vmatprep.subr.bf16.mxu0 0
        %1361 = vmatpush1.bf16.msra.mxu0 0
        %1362 = vmatprep.subr.bf16.mxu0 0
        %1363 = vmatpush1.bf16.msra.mxu0 0
        %1364 = vmatprep.mubr.bf16.mxu0 0
        %1365 = vmatmul.mubr.bf16.gmra.mrb[0].mxu0 %v1330
        %v1366 = vpop.f32.mrb[0].mxu0
        %v1367 = vadd.f32 %v1315, %v1366
        %v1368 = vpop.f32.mrb[0].mxu0
        %v1369 = vpop.f32.mrb[0].mxu0
        %v1370 = vadd.f32 %v1315, %v1369
        %v1371 = vpop.f32.mrb[0].mxu0
        %1372 = vdwg.mxu0
        %1375 = vrot.lane.b32.xlu0 %v1367, 120
        %v1376 = vpop.permute.xlu0 %1375
        %1377 = vrot.lane.b32.xlu0 %v1370, 120
        %v1378 = vpop.permute.xlu0 %1377
        %1381 = vrot.lane.b32.xlu0 %v1367, 112
        %v1382 = vpop.permute.xlu0 %1381
        %1383 = vrot.lane.b32.xlu0 %v1370, 112
        %v1384 = vpop.permute.xlu0 %1383
        %1387 = vrot.lane.b32.xlu0 %v1367, 104
        %v1388 = vpop.permute.xlu0 %1387
        %1389 = vrot.lane.b32.xlu0 %v1370, 104
        %v1390 = vpop.permute.xlu0 %1389
        %v1393 = vcombine.low %v1367, %v1382
        %v1394 = vcombine.high %v1367, %v1382
        %v1396 = vunpack.c.l.s4 1983009808
        %v1397 = vunpack.c.0.s8 %v1396
        %v1398 = vlaneseq
        %v1399 = vshrl.u32 %v1398, 7
        %v1400 = vsub.s32 %v1397, %v1399
        %v1401 = vrot.slane %v1393, %v1400
        %v1403 = vunpack.c.l.s4 1983009808
        %v1404 = vunpack.c.0.s8 %v1403
        %v1405 = vlaneseq
        %v1406 = vshrl.u32 %v1405, 7
        %v1407 = vsub.s32 %v1404, %v1406
        %v1408 = vrot.slane %v1394, %v1407
        %v1409 = vcombine.low %v1376, %v1388
        %v1410 = vcombine.high %v1376, %v1388
        %v1412 = vunpack.c.l.s4 1983009808
        %v1413 = vunpack.c.0.s8 %v1412
        %v1414 = vlaneseq
        %v1415 = vshrl.u32 %v1414, 7
        %v1416 = vsub.s32 %v1413, %v1415
        %v1417 = vrot.slane %v1409, %v1416
        %v1419 = vunpack.c.l.s4 1983009808
        %v1420 = vunpack.c.0.s8 %v1419
        %v1421 = vlaneseq
        %v1422 = vshrl.u32 %v1421, 7
        %v1423 = vsub.s32 %v1420, %v1422
        %v1424 = vrot.slane %v1410, %v1423
        %v1425 = vcombine.low %v1401, %v1417
        %v1426 = vcombine.high %v1401, %v1417
        %v1428 = vunpack.c.l.s4 1934713408
        %v1429 = vunpack.c.0.s8 %v1428
        %v1430 = vlaneseq
        %v1431 = vshrl.u32 %v1430, 7
        %v1432 = vsub.s32 %v1429, %v1431
        %v1433 = vrot.slane %v1425, %v1432
        %v1435 = vunpack.c.l.s4 1934713408
        %v1436 = vunpack.c.0.s8 %v1435
        %v1437 = vlaneseq
        %v1438 = vshrl.u32 %v1437, 7
        %v1439 = vsub.s32 %v1436, %v1438
        %v1440 = vrot.slane %v1426, %v1439
        %v1441 = vcombine.low %v1408, %v1424
        %v1442 = vcombine.high %v1408, %v1424
        %v1444 = vunpack.c.l.s4 1934713408
        %v1445 = vunpack.c.0.s8 %v1444
        %v1446 = vlaneseq
        %v1447 = vshrl.u32 %v1446, 7
        %v1448 = vsub.s32 %v1445, %v1447
        %v1449 = vrot.slane %v1441, %v1448
        %v1451 = vunpack.c.l.s4 1934713408
        %v1452 = vunpack.c.0.s8 %v1451
        %v1453 = vlaneseq
        %v1454 = vshrl.u32 %v1453, 7
        %v1455 = vsub.s32 %v1452, %v1454
        %v1456 = vrot.slane %v1442, %v1455
        %v1457 = vcombine.high %v1433, 0.0
        %v1458 = vcombine.high %v1440, 0.0
        %v1459 = vcombine.high %v1449, 0.0
        %v1460 = vcombine.high %v1456, 0.0
        %v1461 = vcombine.low %v1370, %v1384
        %v1462 = vcombine.high %v1370, %v1384
        %v1464 = vunpack.c.l.s4 1983009808
        %v1465 = vunpack.c.0.s8 %v1464
        %v1466 = vlaneseq
        %v1467 = vshrl.u32 %v1466, 7
        %v1468 = vsub.s32 %v1465, %v1467
        %v1469 = vrot.slane %v1461, %v1468
        %v1471 = vunpack.c.l.s4 1983009808
        %v1472 = vunpack.c.0.s8 %v1471
        %v1473 = vlaneseq
        %v1474 = vshrl.u32 %v1473, 7
        %v1475 = vsub.s32 %v1472, %v1474
        %v1476 = vrot.slane %v1462, %v1475
        %v1477 = vcombine.low %v1378, %v1390
        %v1478 = vcombine.high %v1378, %v1390
        %v1480 = vunpack.c.l.s4 1983009808
        %v1481 = vunpack.c.0.s8 %v1480
        %v1482 = vlaneseq
        %v1483 = vshrl.u32 %v1482, 7
        %v1484 = vsub.s32 %v1481, %v1483
        %v1485 = vrot.slane %v1477, %v1484
        %v1487 = vunpack.c.l.s4 1983009808
        %v1488 = vunpack.c.0.s8 %v1487
        %v1489 = vlaneseq
        %v1490 = vshrl.u32 %v1489, 7
        %v1491 = vsub.s32 %v1488, %v1490
        %v1492 = vrot.slane %v1478, %v1491
        %v1493 = vcombine.low %v1469, %v1485
        %v1494 = vcombine.high %v1469, %v1485
        %v1496 = vunpack.c.l.s4 1934713408
        %v1497 = vunpack.c.0.s8 %v1496
        %v1498 = vlaneseq
        %v1499 = vshrl.u32 %v1498, 7
        %v1500 = vsub.s32 %v1497, %v1499
        %v1501 = vrot.slane %v1493, %v1500
        %v1503 = vunpack.c.l.s4 1934713408
        %v1504 = vunpack.c.0.s8 %v1503
        %v1505 = vlaneseq
        %v1506 = vshrl.u32 %v1505, 7
        %v1507 = vsub.s32 %v1504, %v1506
        %v1508 = vrot.slane %v1494, %v1507
        %v1509 = vcombine.low %v1476, %v1492
        %v1510 = vcombine.high %v1476, %v1492
        %v1512 = vunpack.c.l.s4 1934713408
        %v1513 = vunpack.c.0.s8 %v1512
        %v1514 = vlaneseq
        %v1515 = vshrl.u32 %v1514, 7
        %v1516 = vsub.s32 %v1513, %v1515
        %v1517 = vrot.slane %v1509, %v1516
        %v1519 = vunpack.c.l.s4 1934713408
        %v1520 = vunpack.c.0.s8 %v1519
        %v1521 = vlaneseq
        %v1522 = vshrl.u32 %v1521, 7
        %v1523 = vsub.s32 %v1520, %v1522
        %v1524 = vrot.slane %v1510, %v1523
        %v1525 = vcombine.high %v1501, 0.0
        %v1526 = vcombine.high %v1508, 0.0
        %v1527 = vcombine.high %v1517, 0.0
        %v1528 = vcombine.high %v1524, 0.0
        %v1529 = vcombine.low %v1433, %v1440
        %v1531 = vunpack.c.l.s4 1983009808
        %v1532 = vunpack.c.0.s8 %v1531
        %v1533 = vlaneseq
        %v1534 = vshrl.u32 %v1533, 7
        %v1535 = vsub.s32 %v1532, %v1534
        %v1536 = vrot.slane %v1529, %v1535
        %v1537 = vcombine.low %v1457, %v1458
        %v1539 = vunpack.c.l.s4 1983009808
        %v1540 = vunpack.c.0.s8 %v1539
        %v1541 = vlaneseq
        %v1542 = vshrl.u32 %v1541, 7
        %v1543 = vsub.s32 %v1540, %v1542
        %v1544 = vrot.slane %v1537, %v1543
        %v1545 = vcombine.low %v1449, %v1456
        %v1547 = vunpack.c.l.s4 1983009808
        %v1548 = vunpack.c.0.s8 %v1547
        %v1549 = vlaneseq
        %v1550 = vshrl.u32 %v1549, 7
        %v1551 = vsub.s32 %v1548, %v1550
        %v1552 = vrot.slane %v1545, %v1551
        %v1553 = vcombine.low %v1459, %v1460
        %v1555 = vunpack.c.l.s4 1983009808
        %v1556 = vunpack.c.0.s8 %v1555
        %v1557 = vlaneseq
        %v1558 = vshrl.u32 %v1557, 7
        %v1559 = vsub.s32 %v1556, %v1558
        %v1560 = vrot.slane %v1553, %v1559
        %v1561 = vcombine.low %v1536, %v1544
        %v1562 = vcombine.high %v1536, %v1544
        %v1564 = vunpack.c.l.s4 1934713408
        %v1565 = vunpack.c.0.s8 %v1564
        %v1566 = vlaneseq
        %v1567 = vshrl.u32 %v1566, 7
        %v1568 = vsub.s32 %v1565, %v1567
        %v1569 = vrot.slane %v1561, %v1568
        %v1571 = vunpack.c.l.s4 1934713408
        %v1572 = vunpack.c.0.s8 %v1571
        %v1573 = vlaneseq
        %v1574 = vshrl.u32 %v1573, 7
        %v1575 = vsub.s32 %v1572, %v1574
        %v1576 = vrot.slane %v1562, %v1575
        %v1577 = vcombine.low %v1552, %v1560
        %v1578 = vcombine.high %v1552, %v1560
        %v1580 = vunpack.c.l.s4 1934713408
        %v1581 = vunpack.c.0.s8 %v1580
        %v1582 = vlaneseq
        %v1583 = vshrl.u32 %v1582, 7
        %v1584 = vsub.s32 %v1581, %v1583
        %v1585 = vrot.slane %v1577, %v1584
        %v1587 = vunpack.c.l.s4 1934713408
        %v1588 = vunpack.c.0.s8 %v1587
        %v1589 = vlaneseq
        %v1590 = vshrl.u32 %v1589, 7
        %v1591 = vsub.s32 %v1588, %v1590
        %v1592 = vrot.slane %v1578, %v1591
        %v1593 = vcombine.low %v1569, %v1585
        %v1594 = vcombine.high %v1569, %v1585
        %v1595 = vcombine.low %v1576, %v1592
        %v1596 = vcombine.high %v1576, %v1592
        %v1597 = vcombine.low %v1501, %v1508
        %v1599 = vunpack.c.l.s4 1983009808
        %v1600 = vunpack.c.0.s8 %v1599
        %v1601 = vlaneseq
        %v1602 = vshrl.u32 %v1601, 7
        %v1603 = vsub.s32 %v1600, %v1602
        %v1604 = vrot.slane %v1597, %v1603
        %v1605 = vcombine.low %v1525, %v1526
        %v1607 = vunpack.c.l.s4 1983009808
        %v1608 = vunpack.c.0.s8 %v1607
        %v1609 = vlaneseq
        %v1610 = vshrl.u32 %v1609, 7
        %v1611 = vsub.s32 %v1608, %v1610
        %v1612 = vrot.slane %v1605, %v1611
        %v1613 = vcombine.low %v1517, %v1524
        %v1615 = vunpack.c.l.s4 1983009808
        %v1616 = vunpack.c.0.s8 %v1615
        %v1617 = vlaneseq
        %v1618 = vshrl.u32 %v1617, 7
        %v1619 = vsub.s32 %v1616, %v1618
        %v1620 = vrot.slane %v1613, %v1619
        %v1621 = vcombine.low %v1527, %v1528
        %v1623 = vunpack.c.l.s4 1983009808
        %v1624 = vunpack.c.0.s8 %v1623
        %v1625 = vlaneseq
        %v1626 = vshrl.u32 %v1625, 7
        %v1627 = vsub.s32 %v1624, %v1626
        %v1628 = vrot.slane %v1621, %v1627
        %v1629 = vcombine.low %v1604, %v1612
        %v1630 = vcombine.high %v1604, %v1612
        %v1632 = vunpack.c.l.s4 1934713408
        %v1633 = vunpack.c.0.s8 %v1632
        %v1634 = vlaneseq
        %v1635 = vshrl.u32 %v1634, 7
        %v1636 = vsub.s32 %v1633, %v1635
        %v1637 = vrot.slane %v1629, %v1636
        %v1639 = vunpack.c.l.s4 1934713408
        %v1640 = vunpack.c.0.s8 %v1639
        %v1641 = vlaneseq
        %v1642 = vshrl.u32 %v1641, 7
        %v1643 = vsub.s32 %v1640, %v1642
        %v1644 = vrot.slane %v1630, %v1643
        %v1645 = vcombine.low %v1620, %v1628
        %v1646 = vcombine.high %v1620, %v1628
        %v1648 = vunpack.c.l.s4 1934713408
        %v1649 = vunpack.c.0.s8 %v1648
        %v1650 = vlaneseq
        %v1651 = vshrl.u32 %v1650, 7
        %v1652 = vsub.s32 %v1649, %v1651
        %v1653 = vrot.slane %v1645, %v1652
        %v1655 = vunpack.c.l.s4 1934713408
        %v1656 = vunpack.c.0.s8 %v1655
        %v1657 = vlaneseq
        %v1658 = vshrl.u32 %v1657, 7
        %v1659 = vsub.s32 %v1656, %v1658
        %v1660 = vrot.slane %v1646, %v1659
        %v1661 = vcombine.low %v1637, %v1653
        %v1662 = vcombine.high %v1637, %v1653
        %v1663 = vcombine.low %v1644, %v1660
        %v1664 = vcombine.high %v1644, %v1660
        %v1665 = vpack.c.bf16 %v1661, %v1593
        %v1666 = vpack.c.bf16 %v1662, %v1594
        %v1667 = vpack.c.bf16 %v1663, %v1595
        %v1668 = vpack.c.bf16 %v1664, %v1596
        %v1669 = vld [vmem:[#allocation2] sm:$0xff]
        %v1670 = vld [vmem:[#allocation2 + $0x8] sm:$0xff]
        %v1671 = vld [vmem:[#allocation2 + $0x10] sm:$0xff]
        %v1672 = vld [vmem:[#allocation2 + $0x18] sm:$0xff]
        %v1673 = vld [vmem:[#allocation3] sm:$0xff]
        %v1674 = vld [vmem:[#allocation3 + $0x8] sm:$0xff]
        %v1675 = vld [vmem:[#allocation3 + $0x10] sm:$0xff]
        %v1676 = vld [vmem:[#allocation3 + $0x18] sm:$0xff]
        %vm1677 = vcmask 64512
        %v1679 = vsel %vm1677, %v1665, 0
        %v1682 = vsel %vm1677, %v1669, 0
        %1684 = vmatprep.subr.bf16.mxu0 0
        %1685 = vmatpush1.bf16.xpose.msra.mxu0 %v1682
        %1686 = vmatprep.subr.bf16.mxu0 0
        %1687 = vmatpush1.bf16.xpose.msra.mxu0 0
        %1688 = vmatprep.subr.bf16.mxu0 0
        %1689 = vmatpush1.bf16.xpose.msra.mxu0 0
        %1690 = vmatprep.subr.bf16.mxu0 0
        %1691 = vmatpush1.bf16.xpose.msra.mxu0 0
        %1692 = vmatprep.subr.bf16.mxu0 0
        %1693 = vmatpush1.bf16.xpose.msra.mxu0 0
        %1694 = vmatprep.subr.bf16.mxu0 0
        %1695 = vmatpush1.bf16.xpose.msra.mxu0 0
        %1696 = vmatprep.subr.bf16.mxu0 0
        %1697 = vmatpush1.bf16.xpose.msra.mxu0 0
        %1698 = vmatprep.subr.bf16.mxu0 0
        %1699 = vmatpush1.bf16.xpose.msra.mxu0 0
        %1700 = vmatprep.subr.bf16.mxu0 0
        %1701 = vmatpush1.bf16.xpose.msra.mxu0 0
        %1702 = vmatprep.subr.bf16.mxu0 0
        %1703 = vmatpush1.bf16.xpose.msra.mxu0 0
        %1704 = vmatprep.subr.bf16.mxu0 0
        %1705 = vmatpush1.bf16.xpose.msra.mxu0 0
        %1706 = vmatprep.subr.bf16.mxu0 0
        %1707 = vmatpush1.bf16.xpose.msra.mxu0 0
        %1708 = vmatprep.subr.bf16.mxu0 0
        %1709 = vmatpush1.bf16.xpose.msra.mxu0 0
        %1710 = vmatprep.subr.bf16.mxu0 0
        %1711 = vmatpush1.bf16.xpose.msra.mxu0 0
        %1712 = vmatprep.subr.bf16.mxu0 0
        %1713 = vmatpush1.bf16.xpose.msra.mxu0 0
        %1714 = vmatprep.subr.bf16.mxu0 0
        %1715 = vmatpush1.bf16.xpose.msra.mxu0 0
        %1716 = vmatprep.mubr.bf16.mxu0 0
        %1717 = vmatmul.mubr.bf16.gmra.mrb[0].mxu0 %v1679
        %v1718 = vpop.f32.mrb[0].mxu0
        %v1719 = vadd.f32 0.0, %v1718
        %v1720 = vpop.f32.mrb[0].mxu0
        %v1721 = vpop.f32.mrb[0].mxu0
        %v1722 = vadd.f32 0.0, %v1721
        %v1723 = vpop.f32.mrb[0].mxu0
        %1724 = vdwg.mxu0
        %v1726 = vsel %vm1677, %v1666, 0
        %v1729 = vsel %vm1677, %v1670, 0
        %1731 = vmatprep.subr.bf16.mxu0 0
        %1732 = vmatpush1.bf16.xpose.msra.mxu0 %v1729
        %1733 = vmatprep.subr.bf16.mxu0 0
        %1734 = vmatpush1.bf16.xpose.msra.mxu0 0
        %1735 = vmatprep.subr.bf16.mxu0 0
        %1736 = vmatpush1.bf16.xpose.msra.mxu0 0
        %1737 = vmatprep.subr.bf16.mxu0 0
        %1738 = vmatpush1.bf16.xpose.msra.mxu0 0
        %1739 = vmatprep.subr.bf16.mxu0 0
        %1740 = vmatpush1.bf16.xpose.msra.mxu0 0
        %1741 = vmatprep.subr.bf16.mxu0 0
        %1742 = vmatpush1.bf16.xpose.msra.mxu0 0
        %1743 = vmatprep.subr.bf16.mxu0 0
        %1744 = vmatpush1.bf16.xpose.msra.mxu0 0
        %1745 = vmatprep.subr.bf16.mxu0 0
        %1746 = vmatpush1.bf16.xpose.msra.mxu0 0
        %1747 = vmatprep.subr.bf16.mxu0 0
        %1748 = vmatpush1.bf16.xpose.msra.mxu0 0
        %1749 = vmatprep.subr.bf16.mxu0 0
        %1750 = vmatpush1.bf16.xpose.msra.mxu0 0
        %1751 = vmatprep.subr.bf16.mxu0 0
        %1752 = vmatpush1.bf16.xpose.msra.mxu0 0
        %1753 = vmatprep.subr.bf16.mxu0 0
        %1754 = vmatpush1.bf16.xpose.msra.mxu0 0
        %1755 = vmatprep.subr.bf16.mxu0 0
        %1756 = vmatpush1.bf16.xpose.msra.mxu0 0
        %1757 = vmatprep.subr.bf16.mxu0 0
        %1758 = vmatpush1.bf16.xpose.msra.mxu0 0
        %1759 = vmatprep.subr.bf16.mxu0 0
        %1760 = vmatpush1.bf16.xpose.msra.mxu0 0
        %1761 = vmatprep.subr.bf16.mxu0 0
        %1762 = vmatpush1.bf16.xpose.msra.mxu0 0
        %1763 = vmatprep.mubr.bf16.mxu0 0
        %1764 = vmatmul.mubr.bf16.gmra.mrb[0].mxu0 %v1726
        %v1765 = vpop.f32.mrb[0].mxu0
        %v1766 = vadd.f32 0.0, %v1765
        %v1767 = vpop.f32.mrb[0].mxu0
        %v1768 = vpop.f32.mrb[0].mxu0
        %v1769 = vadd.f32 0.0, %v1768
        %v1770 = vpop.f32.mrb[0].mxu0
        %1771 = vdwg.mxu0
        %v1773 = vsel %vm1677, %v1667, 0
        %v1776 = vsel %vm1677, %v1671, 0
        %1778 = vmatprep.subr.bf16.mxu0 0
        %1779 = vmatpush1.bf16.xpose.msra.mxu0 %v1776
        %1780 = vmatprep.subr.bf16.mxu0 0
        %1781 = vmatpush1.bf16.xpose.msra.mxu0 0
        %1782 = vmatprep.subr.bf16.mxu0 0
        %1783 = vmatpush1.bf16.xpose.msra.mxu0 0
        %1784 = vmatprep.subr.bf16.mxu0 0
        %1785 = vmatpush1.bf16.xpose.msra.mxu0 0
        %1786 = vmatprep.subr.bf16.mxu0 0
        %1787 = vmatpush1.bf16.xpose.msra.mxu0 0
        %1788 = vmatprep.subr.bf16.mxu0 0
        %1789 = vmatpush1.bf16.xpose.msra.mxu0 0
        %1790 = vmatprep.subr.bf16.mxu0 0
        %1791 = vmatpush1.bf16.xpose.msra.mxu0 0
        %1792 = vmatprep.subr.bf16.mxu0 0
        %1793 = vmatpush1.bf16.xpose.msra.mxu0 0
        %1794 = vmatprep.subr.bf16.mxu0 0
        %1795 = vmatpush1.bf16.xpose.msra.mxu0 0
        %1796 = vmatprep.subr.bf16.mxu0 0
        %1797 = vmatpush1.bf16.xpose.msra.mxu0 0
        %1798 = vmatprep.subr.bf16.mxu0 0
        %1799 = vmatpush1.bf16.xpose.msra.mxu0 0
        %1800 = vmatprep.subr.bf16.mxu0 0
        %1801 = vmatpush1.bf16.xpose.msra.mxu0 0
        %1802 = vmatprep.subr.bf16.mxu0 0
        %1803 = vmatpush1.bf16.xpose.msra.mxu0 0
        %1804 = vmatprep.subr.bf16.mxu0 0
        %1805 = vmatpush1.bf16.xpose.msra.mxu0 0
        %1806 = vmatprep.subr.bf16.mxu0 0
        %1807 = vmatpush1.bf16.xpose.msra.mxu0 0
        %1808 = vmatprep.subr.bf16.mxu0 0
        %1809 = vmatpush1.bf16.xpose.msra.mxu0 0
        %1810 = vmatprep.mubr.bf16.mxu0 0
        %1811 = vmatmul.mubr.bf16.gmra.mrb[0].mxu0 %v1773
        %v1812 = vpop.f32.mrb[0].mxu0
        %v1813 = vadd.f32 0.0, %v1812
        %v1814 = vpop.f32.mrb[0].mxu0
        %v1815 = vpop.f32.mrb[0].mxu0
        %v1816 = vadd.f32 0.0, %v1815
        %v1817 = vpop.f32.mrb[0].mxu0
        %1818 = vdwg.mxu0
        %v1820 = vsel %vm1677, %v1668, 0
        %v1823 = vsel %vm1677, %v1672, 0
        %1825 = vmatprep.subr.bf16.mxu0 0
        %1826 = vmatpush1.bf16.xpose.msra.mxu0 %v1823
        %1827 = vmatprep.subr.bf16.mxu0 0
        %1828 = vmatpush1.bf16.xpose.msra.mxu0 0
        %1829 = vmatprep.subr.bf16.mxu0 0
        %1830 = vmatpush1.bf16.xpose.msra.mxu0 0
        %1831 = vmatprep.subr.bf16.mxu0 0
        %1832 = vmatpush1.bf16.xpose.msra.mxu0 0
        %1833 = vmatprep.subr.bf16.mxu0 0
        %1834 = vmatpush1.bf16.xpose.msra.mxu0 0
        %1835 = vmatprep.subr.bf16.mxu0 0
        %1836 = vmatpush1.bf16.xpose.msra.mxu0 0
        %1837 = vmatprep.subr.bf16.mxu0 0
        %1838 = vmatpush1.bf16.xpose.msra.mxu0 0
        %1839 = vmatprep.subr.bf16.mxu0 0
        %1840 = vmatpush1.bf16.xpose.msra.mxu0 0
        %1841 = vmatprep.subr.bf16.mxu0 0
        %1842 = vmatpush1.bf16.xpose.msra.mxu0 0
        %1843 = vmatprep.subr.bf16.mxu0 0
        %1844 = vmatpush1.bf16.xpose.msra.mxu0 0
        %1845 = vmatprep.subr.bf16.mxu0 0
        %1846 = vmatpush1.bf16.xpose.msra.mxu0 0
        %1847 = vmatprep.subr.bf16.mxu0 0
        %1848 = vmatpush1.bf16.xpose.msra.mxu0 0
        %1849 = vmatprep.subr.bf16.mxu0 0
        %1850 = vmatpush1.bf16.xpose.msra.mxu0 0
        %1851 = vmatprep.subr.bf16.mxu0 0
        %1852 = vmatpush1.bf16.xpose.msra.mxu0 0
        %1853 = vmatprep.subr.bf16.mxu0 0
        %1854 = vmatpush1.bf16.xpose.msra.mxu0 0
        %1855 = vmatprep.subr.bf16.mxu0 0
        %1856 = vmatpush1.bf16.xpose.msra.mxu0 0
        %1857 = vmatprep.mubr.bf16.mxu0 0
        %1858 = vmatmul.mubr.bf16.gmra.mrb[0].mxu0 %v1820
        %v1859 = vpop.f32.mrb[0].mxu0
        %v1860 = vadd.f32 0.0, %v1859
        %v1861 = vpop.f32.mrb[0].mxu0
        %v1862 = vpop.f32.mrb[0].mxu0
        %v1863 = vadd.f32 0.0, %v1862
        %v1864 = vpop.f32.mrb[0].mxu0
        %1865 = vdwg.mxu0
        %vm1866 = vcmask 130048
        %v1867 = vsel %vm1866, %v1719, -inf
        %1868 = vmax.xlane.f32.xlu0 %v1867
        %v1869 = vpop.xlane.xlu0 %1868
        %v1870 = vsel %vm1866, %v1722, -inf
        %1871 = vmax.xlane.f32.xlu0 %v1870
        %v1872 = vpop.xlane.xlu0 %1871
        %v1873 = vsel %vm1866, %v1766, -inf
        %1874 = vmax.xlane.f32.xlu0 %v1873
        %v1875 = vpop.xlane.xlu0 %1874
        %v1876 = vsel %vm1866, %v1769, -inf
        %1877 = vmax.xlane.f32.xlu0 %v1876
        %v1878 = vpop.xlane.xlu0 %1877
        %v1879 = vsel %vm1866, %v1813, -inf
        %1880 = vmax.xlane.f32.xlu0 %v1879
        %v1881 = vpop.xlane.xlu0 %1880
        %v1882 = vsel %vm1866, %v1816, -inf
        %1883 = vmax.xlane.f32.xlu0 %v1882
        %v1884 = vpop.xlane.xlu0 %1883
        %v1885 = vsel %vm1866, %v1860, -inf
        %1886 = vmax.xlane.f32.xlu0 %v1885
        %v1887 = vpop.xlane.xlu0 %1886
        %v1888 = vsel %vm1866, %v1863, -inf
        %1889 = vmax.xlane.f32.xlu0 %v1888
        %v1890 = vpop.xlane.xlu0 %1889
        %v1891 = vsub.f32 -inf, %v1869
        %v1892 = vsub.f32 -inf, %v1872
        %v1893 = vsub.f32 -inf, %v1875
        %v1894 = vsub.f32 -inf, %v1878
        %v1895 = vsub.f32 -inf, %v1881
        %v1896 = vsub.f32 -inf, %v1884
        %v1897 = vsub.f32 -inf, %v1887
        %v1898 = vsub.f32 -inf, %v1890
        %v1899 = vmul.f32 %v1891, 1.442695
        %v1900 = vpow.pop %v1899
        %v1901 = vmul.f32 %v1892, 1.442695
        %v1902 = vpow.pop %v1901
        %v1903 = vmul.f32 %v1893, 1.442695
        %v1904 = vpow.pop %v1903
        %v1905 = vmul.f32 %v1894, 1.442695
        %v1906 = vpow.pop %v1905
        %v1907 = vmul.f32 %v1895, 1.442695
        %v1908 = vpow.pop %v1907
        %v1909 = vmul.f32 %v1896, 1.442695
        %v1910 = vpow.pop %v1909
        %v1911 = vmul.f32 %v1897, 1.442695
        %v1912 = vpow.pop %v1911
        %v1913 = vmul.f32 %v1898, 1.442695
        %v1914 = vpow.pop %v1913
        %v1915 = vsub.f32 %v1719, %v1869
        %v1916 = vsub.f32 %v1722, %v1872
        %v1917 = vsub.f32 %v1766, %v1875
        %v1918 = vsub.f32 %v1769, %v1878
        %v1919 = vsub.f32 %v1813, %v1881
        %v1920 = vsub.f32 %v1816, %v1884
        %v1921 = vsub.f32 %v1860, %v1887
        %v1922 = vsub.f32 %v1863, %v1890
        %v1923 = vmul.f32 %v1915, 1.442695
        %v1924 = vpow.pop %v1923
        %v1925 = vmul.f32 %v1916, 1.442695
        %v1926 = vpow.pop %v1925
        %v1927 = vmul.f32 %v1917, 1.442695
        %v1928 = vpow.pop %v1927
        %v1929 = vmul.f32 %v1918, 1.442695
        %v1930 = vpow.pop %v1929
        %v1931 = vmul.f32 %v1919, 1.442695
        %v1932 = vpow.pop %v1931
        %v1933 = vmul.f32 %v1920, 1.442695
        %v1934 = vpow.pop %v1933
        %v1935 = vmul.f32 %v1921, 1.442695
        %v1936 = vpow.pop %v1935
        %v1937 = vmul.f32 %v1922, 1.442695
        %v1938 = vpow.pop %v1937
        %v1939 = vmul.f32 %v1900, 0.0
        %v1940 = vmul.f32 %v1902, 0.0
        %v1941 = vmul.f32 %v1904, 0.0
        %v1942 = vmul.f32 %v1906, 0.0
        %v1943 = vmul.f32 %v1908, 0.0
        %v1944 = vmul.f32 %v1910, 0.0
        %v1945 = vmul.f32 %v1912, 0.0
        %v1946 = vmul.f32 %v1914, 0.0
        %v1947 = vsel %vm1866, %v1924, 0.0
        %1948 = vadd.xlane.f32.xlu0 %v1947
        %v1949 = vpop.xlane.xlu0 %1948
        %v1950 = vsel %vm1866, %v1926, 0.0
        %1951 = vadd.xlane.f32.xlu0 %v1950
        %v1952 = vpop.xlane.xlu0 %1951
        %v1953 = vsel %vm1866, %v1928, 0.0
        %1954 = vadd.xlane.f32.xlu0 %v1953
        %v1955 = vpop.xlane.xlu0 %1954
        %v1956 = vsel %vm1866, %v1930, 0.0
        %1957 = vadd.xlane.f32.xlu0 %v1956
        %v1958 = vpop.xlane.xlu0 %1957
        %v1959 = vsel %vm1866, %v1932, 0.0
        %1960 = vadd.xlane.f32.xlu0 %v1959
        %v1961 = vpop.xlane.xlu0 %1960
        %v1962 = vsel %vm1866, %v1934, 0.0
        %1963 = vadd.xlane.f32.xlu0 %v1962
        %v1964 = vpop.xlane.xlu0 %1963
        %v1965 = vsel %vm1866, %v1936, 0.0
        %1966 = vadd.xlane.f32.xlu0 %v1965
        %v1967 = vpop.xlane.xlu0 %1966
        %v1968 = vsel %vm1866, %v1938, 0.0
        %1969 = vadd.xlane.f32.xlu0 %v1968
        %v1970 = vpop.xlane.xlu0 %1969
        %v1971 = vadd.f32 %v1939, %v1949
        %v1972 = vadd.f32 %v1940, %v1952
        %v1973 = vadd.f32 %v1941, %v1955
        %v1974 = vadd.f32 %v1942, %v1958
        %v1975 = vadd.f32 %v1943, %v1961
        %v1976 = vadd.f32 %v1944, %v1964
        %v1977 = vadd.f32 %v1945, %v1967
        %v1978 = vadd.f32 %v1946, %v1970
        %v1979 = vpack.c.bf16 %v1926, %v1924
        %v1980 = vpack.c.bf16 %v1930, %v1928
        %v1981 = vpack.c.bf16 %v1934, %v1932
        %v1982 = vpack.c.bf16 %v1938, %v1936
        %v1984 = vsel %vm1866, %v1979, 0
        %1986 = vmatprep.subr.bf16.mxu0 0
        %1987 = vmatpush1.bf16.msra.mxu0 %v1673
        %1988 = vmatprep.subr.bf16.mxu0 0
        %1989 = vmatpush1.bf16.msra.mxu0 0
        %1990 = vmatprep.subr.bf16.mxu0 0
        %1991 = vmatpush1.bf16.msra.mxu0 0
        %1992 = vmatprep.subr.bf16.mxu0 0
        %1993 = vmatpush1.bf16.msra.mxu0 0
        %1994 = vmatprep.subr.bf16.mxu0 0
        %1995 = vmatpush1.bf16.msra.mxu0 0
        %1996 = vmatprep.subr.bf16.mxu0 0
        %1997 = vmatpush1.bf16.msra.mxu0 0
        %1998 = vmatprep.subr.bf16.mxu0 0
        %1999 = vmatpush1.bf16.msra.mxu0 0
        %2000 = vmatprep.subr.bf16.mxu0 0
        %2001 = vmatpush1.bf16.msra.mxu0 0
        %2002 = vmatprep.subr.bf16.mxu0 0
        %2003 = vmatpush1.bf16.msra.mxu0 0
        %2004 = vmatprep.subr.bf16.mxu0 0
        %2005 = vmatpush1.bf16.msra.mxu0 0
        %2006 = vmatprep.subr.bf16.mxu0 0
        %2007 = vmatpush1.bf16.msra.mxu0 0
        %2008 = vmatprep.subr.bf16.mxu0 0
        %2009 = vmatpush1.bf16.msra.mxu0 0
        %2010 = vmatprep.subr.bf16.mxu0 0
        %2011 = vmatpush1.bf16.msra.mxu0 0
        %2012 = vmatprep.subr.bf16.mxu0 0
        %2013 = vmatpush1.bf16.msra.mxu0 0
        %2014 = vmatprep.subr.bf16.mxu0 0
        %2015 = vmatpush1.bf16.msra.mxu0 0
        %2016 = vmatprep.subr.bf16.mxu0 0
        %2017 = vmatpush1.bf16.msra.mxu0 0
        %2018 = vmatprep.mubr.bf16.mxu0 0
        %2019 = vmatmul.mubr.bf16.gmra.mrb[0].mxu0 %v1984
        %v2020 = vpop.f32.mrb[0].mxu0
        %v2021 = vadd.f32 0.0, %v2020
        %v2022 = vpop.f32.mrb[0].mxu0
        %v2023 = vpop.f32.mrb[0].mxu0
        %v2024 = vadd.f32 0.0, %v2023
        %v2025 = vpop.f32.mrb[0].mxu0
        %2026 = vdwg.mxu0
        %v2028 = vsel %vm1866, %v1980, 0
        %2030 = vmatprep.subr.bf16.mxu0 0
        %2031 = vmatpush1.bf16.msra.mxu0 %v1674
        %2032 = vmatprep.subr.bf16.mxu0 0
        %2033 = vmatpush1.bf16.msra.mxu0 0
        %2034 = vmatprep.subr.bf16.mxu0 0
        %2035 = vmatpush1.bf16.msra.mxu0 0
        %2036 = vmatprep.subr.bf16.mxu0 0
        %2037 = vmatpush1.bf16.msra.mxu0 0
        %2038 = vmatprep.subr.bf16.mxu0 0
        %2039 = vmatpush1.bf16.msra.mxu0 0
        %2040 = vmatprep.subr.bf16.mxu0 0
        %2041 = vmatpush1.bf16.msra.mxu0 0
        %2042 = vmatprep.subr.bf16.mxu0 0
        %2043 = vmatpush1.bf16.msra.mxu0 0
        %2044 = vmatprep.subr.bf16.mxu0 0
        %2045 = vmatpush1.bf16.msra.mxu0 0
        %2046 = vmatprep.subr.bf16.mxu0 0
        %2047 = vmatpush1.bf16.msra.mxu0 0
        %2048 = vmatprep.subr.bf16.mxu0 0
        %2049 = vmatpush1.bf16.msra.mxu0 0
        %2050 = vmatprep.subr.bf16.mxu0 0
        %2051 = vmatpush1.bf16.msra.mxu0 0
        %2052 = vmatprep.subr.bf16.mxu0 0
        %2053 = vmatpush1.bf16.msra.mxu0 0
        %2054 = vmatprep.subr.bf16.mxu0 0
        %2055 = vmatpush1.bf16.msra.mxu0 0
        %2056 = vmatprep.subr.bf16.mxu0 0
        %2057 = vmatpush1.bf16.msra.mxu0 0
        %2058 = vmatprep.subr.bf16.mxu0 0
        %2059 = vmatpush1.bf16.msra.mxu0 0
        %2060 = vmatprep.subr.bf16.mxu0 0
        %2061 = vmatpush1.bf16.msra.mxu0 0
        %2062 = vmatprep.mubr.bf16.mxu0 0
        %2063 = vmatmul.mubr.bf16.gmra.mrb[0].mxu0 %v2028
        %v2064 = vpop.f32.mrb[0].mxu0
        %v2065 = vadd.f32 0.0, %v2064
        %v2066 = vpop.f32.mrb[0].mxu0
        %v2067 = vpop.f32.mrb[0].mxu0
        %v2068 = vadd.f32 0.0, %v2067
        %v2069 = vpop.f32.mrb[0].mxu0
        %2070 = vdwg.mxu0
        %v2072 = vsel %vm1866, %v1981, 0
        %2074 = vmatprep.subr.bf16.mxu0 0
        %2075 = vmatpush1.bf16.msra.mxu0 %v1675
        %2076 = vmatprep.subr.bf16.mxu0 0
        %2077 = vmatpush1.bf16.msra.mxu0 0
        %2078 = vmatprep.subr.bf16.mxu0 0
        %2079 = vmatpush1.bf16.msra.mxu0 0
        %2080 = vmatprep.subr.bf16.mxu0 0
        %2081 = vmatpush1.bf16.msra.mxu0 0
        %2082 = vmatprep.subr.bf16.mxu0 0
        %2083 = vmatpush1.bf16.msra.mxu0 0
        %2084 = vmatprep.subr.bf16.mxu0 0
        %2085 = vmatpush1.bf16.msra.mxu0 0
        %2086 = vmatprep.subr.bf16.mxu0 0
        %2087 = vmatpush1.bf16.msra.mxu0 0
        %2088 = vmatprep.subr.bf16.mxu0 0
        %2089 = vmatpush1.bf16.msra.mxu0 0
        %2090 = vmatprep.subr.bf16.mxu0 0
        %2091 = vmatpush1.bf16.msra.mxu0 0
        %2092 = vmatprep.subr.bf16.mxu0 0
        %2093 = vmatpush1.bf16.msra.mxu0 0
        %2094 = vmatprep.subr.bf16.mxu0 0
        %2095 = vmatpush1.bf16.msra.mxu0 0
        %2096 = vmatprep.subr.bf16.mxu0 0
        %2097 = vmatpush1.bf16.msra.mxu0 0
        %2098 = vmatprep.subr.bf16.mxu0 0
        %2099 = vmatpush1.bf16.msra.mxu0 0
        %2100 = vmatprep.subr.bf16.mxu0 0
        %2101 = vmatpush1.bf16.msra.mxu0 0
        %2102 = vmatprep.subr.bf16.mxu0 0
        %2103 = vmatpush1.bf16.msra.mxu0 0
        %2104 = vmatprep.subr.bf16.mxu0 0
        %2105 = vmatpush1.bf16.msra.mxu0 0
        %2106 = vmatprep.mubr.bf16.mxu0 0
        %2107 = vmatmul.mubr.bf16.gmra.mrb[0].mxu0 %v2072
        %v2108 = vpop.f32.mrb[0].mxu0
        %v2109 = vadd.f32 0.0, %v2108
        %v2110 = vpop.f32.mrb[0].mxu0
        %v2111 = vpop.f32.mrb[0].mxu0
        %v2112 = vadd.f32 0.0, %v2111
        %v2113 = vpop.f32.mrb[0].mxu0
        %2114 = vdwg.mxu0
        %v2116 = vsel %vm1866, %v1982, 0
        %2118 = vmatprep.subr.bf16.mxu0 0
        %2119 = vmatpush1.bf16.msra.mxu0 %v1676
        %2120 = vmatprep.subr.bf16.mxu0 0
        %2121 = vmatpush1.bf16.msra.mxu0 0
        %2122 = vmatprep.subr.bf16.mxu0 0
        %2123 = vmatpush1.bf16.msra.mxu0 0
        %2124 = vmatprep.subr.bf16.mxu0 0
        %2125 = vmatpush1.bf16.msra.mxu0 0
        %2126 = vmatprep.subr.bf16.mxu0 0
        %2127 = vmatpush1.bf16.msra.mxu0 0
        %2128 = vmatprep.subr.bf16.mxu0 0
        %2129 = vmatpush1.bf16.msra.mxu0 0
        %2130 = vmatprep.subr.bf16.mxu0 0
        %2131 = vmatpush1.bf16.msra.mxu0 0
        %2132 = vmatprep.subr.bf16.mxu0 0
        %2133 = vmatpush1.bf16.msra.mxu0 0
        %2134 = vmatprep.subr.bf16.mxu0 0
        %2135 = vmatpush1.bf16.msra.mxu0 0
        %2136 = vmatprep.subr.bf16.mxu0 0
        %2137 = vmatpush1.bf16.msra.mxu0 0
        %2138 = vmatprep.subr.bf16.mxu0 0
        %2139 = vmatpush1.bf16.msra.mxu0 0
        %2140 = vmatprep.subr.bf16.mxu0 0
        %2141 = vmatpush1.bf16.msra.mxu0 0
        %2142 = vmatprep.subr.bf16.mxu0 0
        %2143 = vmatpush1.bf16.msra.mxu0 0
        %2144 = vmatprep.subr.bf16.mxu0 0
        %2145 = vmatpush1.bf16.msra.mxu0 0
        %2146 = vmatprep.subr.bf16.mxu0 0
        %2147 = vmatpush1.bf16.msra.mxu0 0
        %2148 = vmatprep.subr.bf16.mxu0 0
        %2149 = vmatpush1.bf16.msra.mxu0 0
        %2150 = vmatprep.mubr.bf16.mxu0 0
        %2151 = vmatmul.mubr.bf16.gmra.mrb[0].mxu0 %v2116
        %v2152 = vpop.f32.mrb[0].mxu0
        %v2153 = vadd.f32 0.0, %v2152
        %v2154 = vpop.f32.mrb[0].mxu0
        %v2155 = vpop.f32.mrb[0].mxu0
        %v2156 = vadd.f32 0.0, %v2155
        %v2157 = vpop.f32.mrb[0].mxu0
        %2158 = vdwg.mxu0
        %v2159 = vadd.f32 %v1939, %v2021
        %v2160 = vadd.f32 %v1940, %v2024
        %v2161 = vadd.f32 %v1941, %v2065
        %v2162 = vadd.f32 %v1942, %v2068
        %v2163 = vadd.f32 %v1943, %v2109
        %v2164 = vadd.f32 %v1944, %v2112
        %v2165 = vadd.f32 %v1945, %v2153
        %v2166 = vadd.f32 %v1946, %v2156
        %v2167 = vrcp.pop %v1971
        %v2168 = vrcp.pop %v1972
        %v2169 = vrcp.pop %v1973
        %v2170 = vrcp.pop %v1974
        %v2171 = vrcp.pop %v1975
        %v2172 = vrcp.pop %v1976
        %v2173 = vrcp.pop %v1977
        %v2174 = vrcp.pop %v1978
        %v2175 = vmul.f32 %v2159, %v2167
        %v2176 = vmul.f32 %v2160, %v2168
        %v2177 = vmul.f32 %v2161, %v2169
        %v2178 = vmul.f32 %v2162, %v2170
        %v2179 = vmul.f32 %v2163, %v2171
        %v2180 = vmul.f32 %v2164, %v2172
        %v2181 = vmul.f32 %v2165, %v2173
        %v2182 = vmul.f32 %v2166, %v2174
        %v2183 = vcombine.low %v2175, %v2179
        %v2184 = vcombine.high %v2175, %v2179
        %v2186 = vunpack.c.l.s4 1983009808
        %v2187 = vunpack.c.0.s8 %v2186
        %v2188 = vlaneseq
        %v2189 = vshrl.u32 %v2188, 7
        %v2190 = vsub.s32 %v2187, %v2189
        %v2191 = vrot.slane %v2183, %v2190
        %v2193 = vunpack.c.l.s4 1983009808
        %v2194 = vunpack.c.0.s8 %v2193
        %v2195 = vlaneseq
        %v2196 = vshrl.u32 %v2195, 7
        %v2197 = vsub.s32 %v2194, %v2196
        %v2198 = vrot.slane %v2184, %v2197
        %v2199 = vcombine.low %v2177, %v2181
        %v2200 = vcombine.high %v2177, %v2181
        %v2202 = vunpack.c.l.s4 1983009808
        %v2203 = vunpack.c.0.s8 %v2202
        %v2204 = vlaneseq
        %v2205 = vshrl.u32 %v2204, 7
        %v2206 = vsub.s32 %v2203, %v2205
        %v2207 = vrot.slane %v2199, %v2206
        %v2209 = vunpack.c.l.s4 1983009808
        %v2210 = vunpack.c.0.s8 %v2209
        %v2211 = vlaneseq
        %v2212 = vshrl.u32 %v2211, 7
        %v2213 = vsub.s32 %v2210, %v2212
        %v2214 = vrot.slane %v2200, %v2213
        %v2215 = vcombine.low %v2191, %v2207
        %v2216 = vcombine.high %v2191, %v2207
        %v2218 = vunpack.c.l.s4 1934713408
        %v2219 = vunpack.c.0.s8 %v2218
        %v2220 = vlaneseq
        %v2221 = vshrl.u32 %v2220, 7
        %v2222 = vsub.s32 %v2219, %v2221
        %v2223 = vrot.slane %v2215, %v2222
        %v2225 = vunpack.c.l.s4 1934713408
        %v2226 = vunpack.c.0.s8 %v2225
        %v2227 = vlaneseq
        %v2228 = vshrl.u32 %v2227, 7
        %v2229 = vsub.s32 %v2226, %v2228
        %v2230 = vrot.slane %v2216, %v2229
        %v2231 = vcombine.low %v2198, %v2214
        %v2232 = vcombine.high %v2198, %v2214
        %v2234 = vunpack.c.l.s4 1934713408
        %v2235 = vunpack.c.0.s8 %v2234
        %v2236 = vlaneseq
        %v2237 = vshrl.u32 %v2236, 7
        %v2238 = vsub.s32 %v2235, %v2237
        %v2239 = vrot.slane %v2231, %v2238
        %v2241 = vunpack.c.l.s4 1934713408
        %v2242 = vunpack.c.0.s8 %v2241
        %v2243 = vlaneseq
        %v2244 = vshrl.u32 %v2243, 7
        %v2245 = vsub.s32 %v2242, %v2244
        %v2246 = vrot.slane %v2232, %v2245
        %v2247 = vcombine.high %v2223, 0.0
        %v2248 = vcombine.high %v2230, 0.0
        %v2249 = vcombine.high %v2239, 0.0
        %v2250 = vcombine.high %v2246, 0.0
        %v2251 = vcombine.low %v2176, %v2180
        %v2252 = vcombine.high %v2176, %v2180
        %v2254 = vunpack.c.l.s4 1983009808
        %v2255 = vunpack.c.0.s8 %v2254
        %v2256 = vlaneseq
        %v2257 = vshrl.u32 %v2256, 7
        %v2258 = vsub.s32 %v2255, %v2257
        %v2259 = vrot.slane %v2251, %v2258
        %v2261 = vunpack.c.l.s4 1983009808
        %v2262 = vunpack.c.0.s8 %v2261
        %v2263 = vlaneseq
        %v2264 = vshrl.u32 %v2263, 7
        %v2265 = vsub.s32 %v2262, %v2264
        %v2266 = vrot.slane %v2252, %v2265
        %v2267 = vcombine.low %v2178, %v2182
        %v2268 = vcombine.high %v2178, %v2182
        %v2270 = vunpack.c.l.s4 1983009808
        %v2271 = vunpack.c.0.s8 %v2270
        %v2272 = vlaneseq
        %v2273 = vshrl.u32 %v2272, 7
        %v2274 = vsub.s32 %v2271, %v2273
        %v2275 = vrot.slane %v2267, %v2274
        %v2277 = vunpack.c.l.s4 1983009808
        %v2278 = vunpack.c.0.s8 %v2277
        %v2279 = vlaneseq
        %v2280 = vshrl.u32 %v2279, 7
        %v2281 = vsub.s32 %v2278, %v2280
        %v2282 = vrot.slane %v2268, %v2281
        %v2283 = vcombine.low %v2259, %v2275
        %v2284 = vcombine.high %v2259, %v2275
        %v2286 = vunpack.c.l.s4 1934713408
        %v2287 = vunpack.c.0.s8 %v2286
        %v2288 = vlaneseq
        %v2289 = vshrl.u32 %v2288, 7
        %v2290 = vsub.s32 %v2287, %v2289
        %v2291 = vrot.slane %v2283, %v2290
        %v2293 = vunpack.c.l.s4 1934713408
        %v2294 = vunpack.c.0.s8 %v2293
        %v2295 = vlaneseq
        %v2296 = vshrl.u32 %v2295, 7
        %v2297 = vsub.s32 %v2294, %v2296
        %v2298 = vrot.slane %v2284, %v2297
        %v2299 = vcombine.low %v2266, %v2282
        %v2300 = vcombine.high %v2266, %v2282
        %v2302 = vunpack.c.l.s4 1934713408
        %v2303 = vunpack.c.0.s8 %v2302
        %v2304 = vlaneseq
        %v2305 = vshrl.u32 %v2304, 7
        %v2306 = vsub.s32 %v2303, %v2305
        %v2307 = vrot.slane %v2299, %v2306
        %v2309 = vunpack.c.l.s4 1934713408
        %v2310 = vunpack.c.0.s8 %v2309
        %v2311 = vlaneseq
        %v2312 = vshrl.u32 %v2311, 7
        %v2313 = vsub.s32 %v2310, %v2312
        %v2314 = vrot.slane %v2300, %v2313
        %v2315 = vcombine.high %v2291, 0.0
        %v2316 = vcombine.high %v2298, 0.0
        %v2317 = vcombine.high %v2307, 0.0
        %v2318 = vcombine.high %v2314, 0.0
        %v2319 = vcombine.low %v2223, %v2230
        %v2321 = vunpack.c.l.s4 1983009808
        %v2322 = vunpack.c.0.s8 %v2321
        %v2323 = vlaneseq
        %v2324 = vshrl.u32 %v2323, 7
        %v2325 = vsub.s32 %v2322, %v2324
        %v2326 = vrot.slane %v2319, %v2325
        %v2327 = vcombine.low %v2247, %v2248
        %v2329 = vunpack.c.l.s4 1983009808
        %v2330 = vunpack.c.0.s8 %v2329
        %v2331 = vlaneseq
        %v2332 = vshrl.u32 %v2331, 7
        %v2333 = vsub.s32 %v2330, %v2332
        %v2334 = vrot.slane %v2327, %v2333
        %v2335 = vcombine.low %v2239, %v2246
        %v2337 = vunpack.c.l.s4 1983009808
        %v2338 = vunpack.c.0.s8 %v2337
        %v2339 = vlaneseq
        %v2340 = vshrl.u32 %v2339, 7
        %v2341 = vsub.s32 %v2338, %v2340
        %v2342 = vrot.slane %v2335, %v2341
        %v2343 = vcombine.low %v2249, %v2250
        %v2345 = vunpack.c.l.s4 1983009808
        %v2346 = vunpack.c.0.s8 %v2345
        %v2347 = vlaneseq
        %v2348 = vshrl.u32 %v2347, 7
        %v2349 = vsub.s32 %v2346, %v2348
        %v2350 = vrot.slane %v2343, %v2349
        %v2351 = vcombine.low %v2326, %v2334
        %v2352 = vcombine.high %v2326, %v2334
        %v2354 = vunpack.c.l.s4 1934713408
        %v2355 = vunpack.c.0.s8 %v2354
        %v2356 = vlaneseq
        %v2357 = vshrl.u32 %v2356, 7
        %v2358 = vsub.s32 %v2355, %v2357
        %v2359 = vrot.slane %v2351, %v2358
        %v2361 = vunpack.c.l.s4 1934713408
        %v2362 = vunpack.c.0.s8 %v2361
        %v2363 = vlaneseq
        %v2364 = vshrl.u32 %v2363, 7
        %v2365 = vsub.s32 %v2362, %v2364
        %v2366 = vrot.slane %v2352, %v2365
        %v2367 = vcombine.low %v2342, %v2350
        %v2368 = vcombine.high %v2342, %v2350
        %v2370 = vunpack.c.l.s4 1934713408
        %v2371 = vunpack.c.0.s8 %v2370
        %v2372 = vlaneseq
        %v2373 = vshrl.u32 %v2372, 7
        %v2374 = vsub.s32 %v2371, %v2373
        %v2375 = vrot.slane %v2367, %v2374
        %v2377 = vunpack.c.l.s4 1934713408
        %v2378 = vunpack.c.0.s8 %v2377
        %v2379 = vlaneseq
        %v2380 = vshrl.u32 %v2379, 7
        %v2381 = vsub.s32 %v2378, %v2380
        %v2382 = vrot.slane %v2368, %v2381
        %v2383 = vcombine.low %v2359, %v2375
        %v2384 = vcombine.high %v2359, %v2375
        %v2385 = vcombine.low %v2366, %v2382
        %v2386 = vcombine.high %v2366, %v2382
        %v2387 = vcombine.low %v2291, %v2298
        %v2389 = vunpack.c.l.s4 1983009808
        %v2390 = vunpack.c.0.s8 %v2389
        %v2391 = vlaneseq
        %v2392 = vshrl.u32 %v2391, 7
        %v2393 = vsub.s32 %v2390, %v2392
        %v2394 = vrot.slane %v2387, %v2393
        %v2395 = vcombine.low %v2315, %v2316
        %v2397 = vunpack.c.l.s4 1983009808
        %v2398 = vunpack.c.0.s8 %v2397
        %v2399 = vlaneseq
        %v2400 = vshrl.u32 %v2399, 7
        %v2401 = vsub.s32 %v2398, %v2400
        %v2402 = vrot.slane %v2395, %v2401
        %v2403 = vcombine.low %v2307, %v2314
        %v2405 = vunpack.c.l.s4 1983009808
        %v2406 = vunpack.c.0.s8 %v2405
        %v2407 = vlaneseq
        %v2408 = vshrl.u32 %v2407, 7
        %v2409 = vsub.s32 %v2406, %v2408
        %v2410 = vrot.slane %v2403, %v2409
        %v2411 = vcombine.low %v2317, %v2318
        %v2413 = vunpack.c.l.s4 1983009808
        %v2414 = vunpack.c.0.s8 %v2413
        %v2415 = vlaneseq
        %v2416 = vshrl.u32 %v2415, 7
        %v2417 = vsub.s32 %v2414, %v2416
        %v2418 = vrot.slane %v2411, %v2417
        %v2419 = vcombine.low %v2394, %v2402
        %v2420 = vcombine.high %v2394, %v2402
        %v2422 = vunpack.c.l.s4 1934713408
        %v2423 = vunpack.c.0.s8 %v2422
        %v2424 = vlaneseq
        %v2425 = vshrl.u32 %v2424, 7
        %v2426 = vsub.s32 %v2423, %v2425
        %v2427 = vrot.slane %v2419, %v2426
        %v2429 = vunpack.c.l.s4 1934713408
        %v2430 = vunpack.c.0.s8 %v2429
        %v2431 = vlaneseq
        %v2432 = vshrl.u32 %v2431, 7
        %v2433 = vsub.s32 %v2430, %v2432
        %v2434 = vrot.slane %v2420, %v2433
        %v2435 = vcombine.low %v2410, %v2418
        %v2436 = vcombine.high %v2410, %v2418
        %v2438 = vunpack.c.l.s4 1934713408
        %v2439 = vunpack.c.0.s8 %v2438
        %v2440 = vlaneseq
        %v2441 = vshrl.u32 %v2440, 7
        %v2442 = vsub.s32 %v2439, %v2441
        %v2443 = vrot.slane %v2435, %v2442
        %v2445 = vunpack.c.l.s4 1934713408
        %v2446 = vunpack.c.0.s8 %v2445
        %v2447 = vlaneseq
        %v2448 = vshrl.u32 %v2447, 7
        %v2449 = vsub.s32 %v2446, %v2448
        %v2450 = vrot.slane %v2436, %v2449
        %v2451 = vcombine.low %v2427, %v2443
        %v2452 = vcombine.high %v2427, %v2443
        %v2453 = vcombine.low %v2434, %v2450
        %v2454 = vcombine.high %v2434, %v2450
        %2457 = vrot.lane.b32.xlu0 %v2384, 8
        %v2458 = vpop.permute.xlu0 %2457
        %2459 = vrot.lane.b32.xlu0 %v2452, 8
        %v2460 = vpop.permute.xlu0 %2459
        %2465 = vrot.lane.b32.xlu0 %v2385, 16
        %v2466 = vpop.permute.xlu0 %2465
        %2467 = vrot.lane.b32.xlu0 %v2453, 16
        %v2468 = vpop.permute.xlu0 %2467
        %2473 = vrot.lane.b32.xlu0 %v2386, 24
        %v2474 = vpop.permute.xlu0 %2473
        %2475 = vrot.lane.b32.xlu0 %v2454, 24
        %v2476 = vpop.permute.xlu0 %2475
        %v2479 = vsel %vm1677, %v2383, %v2458
        %v2480 = vsel %vm1677, %v2451, %v2460
        %v2481 = vsel %vm1866, %v2479, %v2466
        %v2482 = vsel %vm1866, %v2480, %v2468
        %vm2483 = vcmask 195584
        %v2484 = vsel %vm2483, %v2481, %v2474
        %v2485 = vsel %vm2483, %v2482, %v2476
        %v2486 = vpack.c.bf16 %v2485, %v2484
        %v2487 = vld [vmem:[#allocation10] sm:$0xf]
        %v2488 = vld [vmem:[#allocation10 + $0x4] sm:$0xf]
        %v2489 = vld [vmem:[#allocation10 + $0x8] sm:$0xf]
        %v2490 = vld [vmem:[#allocation10 + $0xc] sm:$0xf]
        %v2491 = vld [vmem:[#allocation12] sm:$0x1]
        %v2493 = vlaneseq
        %v2494 = vshrl.u32 %v2493, 7
        %v2495 = vsub.s32 0, %v2494
        %v2496 = vrot.slane %v2491, %v2495
        %v2502 = vunpack.c.l.b16 %v2487
        %v2503 = vunpack.c.l.b16 %v2488
        %v2504 = vunpack.c.l.b16 %v2489
        %v2505 = vunpack.c.l.b16 %v2490
        %v2506 = vpack.c.b16 %v2503, %v2502
        %v2507 = vpack.c.b16 %v2505, %v2504
        %v2511 = vsel %vm1259, %v2486, 0
        %2513 = vmatprep.subr.bf16.mxu0 0
        %2514 = vmatpush1.bf16.msra.mxu0 %v2506
        %2515 = vmatprep.subr.bf16.mxu0 0
        %2516 = vmatpush1.bf16.msra.mxu0 %v2507
        %2517 = vmatprep.subr.bf16.mxu0 0
        %2518 = vmatpush1.bf16.msra.mxu0 0
        %2519 = vmatprep.subr.bf16.mxu0 0
        %2520 = vmatpush1.bf16.msra.mxu0 0
        %2521 = vmatprep.subr.bf16.mxu0 0
        %2522 = vmatpush1.bf16.msra.mxu0 0
        %2523 = vmatprep.subr.bf16.mxu0 0
        %2524 = vmatpush1.bf16.msra.mxu0 0
        %2525 = vmatprep.subr.bf16.mxu0 0
        %2526 = vmatpush1.bf16.msra.mxu0 0
        %2527 = vmatprep.subr.bf16.mxu0 0
        %2528 = vmatpush1.bf16.msra.mxu0 0
        %2529 = vmatprep.subr.bf16.mxu0 0
        %2530 = vmatpush1.bf16.msra.mxu0 0
        %2531 = vmatprep.subr.bf16.mxu0 0
        %2532 = vmatpush1.bf16.msra.mxu0 0
        %2533 = vmatprep.subr.bf16.mxu0 0
        %2534 = vmatpush1.bf16.msra.mxu0 0
        %2535 = vmatprep.subr.bf16.mxu0 0
        %2536 = vmatpush1.bf16.msra.mxu0 0
        %2537 = vmatprep.subr.bf16.mxu0 0
        %2538 = vmatpush1.bf16.msra.mxu0 0
        %2539 = vmatprep.subr.bf16.mxu0 0
        %2540 = vmatpush1.bf16.msra.mxu0 0
        %2541 = vmatprep.subr.bf16.mxu0 0
        %2542 = vmatpush1.bf16.msra.mxu0 0
        %2543 = vmatprep.subr.bf16.mxu0 0
        %2544 = vmatpush1.bf16.msra.mxu0 0
        %2545 = vmatprep.mubr.bf16.mxu0 0
        %2546 = vmatmul.mubr.bf16.gmra.mrb[0].mxu0 %v2511
        %v2547 = vpop.f32.mrb[0].mxu0
        %v2548 = vadd.f32 %v2496, %v2547
        %v2549 = vpop.f32.mrb[0].mxu0
        %v2550 = vpop.f32.mrb[0].mxu0
        %v2551 = vadd.f32 %v2496, %v2550
        %v2552 = vpop.f32.mrb[0].mxu0
        %2553 = vdwg.mxu0
        %v2554 = vadd.f32 %v1257, %v2548
        %v2555 = vadd.f32 %v1258, %v2551
        %v2556 = vsel %vm1259, %v2554, 0.0
        %2557 = vadd.xlane.f32.xlu0 %v2556
        %v2558 = vpop.xlane.xlu0 %2557
        %v2559 = vsel %vm1259, %v2555, 0.0
        %2560 = vadd.xlane.f32.xlu0 %v2559
        %v2561 = vpop.xlane.xlu0 %2560
        %v2562 = vmul.f32 %v2558, %v1266
        %v2563 = vmul.f32 %v2561, %v1266
        %v2564 = vsub.f32 %v2554, %v2562
        %v2565 = vsub.f32 %v2555, %v2563
        %v2566 = vmul.f32 %v2564, %v2564
        %v2567 = vmul.f32 %v2565, %v2565
        %v2568 = vsel %vm1259, %v2566, 0.0
        %2569 = vadd.xlane.f32.xlu0 %v2568
        %v2570 = vpop.xlane.xlu0 %2569
        %v2571 = vsel %vm1259, %v2567, 0.0
        %2572 = vadd.xlane.f32.xlu0 %v2571
        %v2573 = vpop.xlane.xlu0 %2572
        %v2574 = vmul.f32 %v2570, %v1266
        %v2575 = vmul.f32 %v2573, %v1266
        %v2576 = vadd.f32 %v2574, 1e-05
        %v2577 = vadd.f32 %v2575, 1e-05
        %v2578 = vrsqrt.pop %v2576
        %v2579 = vrsqrt.pop %v2577
        %v2580 = vmul.f32 %v2564, %v2578
        %v2581 = vmul.f32 %v2565, %v2579
        %v2582 = vld [vmem:[%s13] sm:$0x1]
        %v2584 = vlaneseq
        %v2585 = vshrl.u32 %v2584, 7
        %v2586 = vsub.s32 0, %v2585
        %v2587 = vrot.slane %v2582, %v2586
        %v2589 = vmul.f32 %v2580, %v2587
        %v2590 = vmul.f32 %v2581, %v2587
        %v2591 = vld [vmem:[%s14] sm:$0x1]
        %v2593 = vlaneseq
        %v2594 = vshrl.u32 %v2593, 7
        %v2595 = vsub.s32 0, %v2594
        %v2596 = vrot.slane %v2591, %v2595
        %v2598 = vadd.f32 %v2589, %v2596
        %v2599 = vadd.f32 %v2590, %v2596
        %v2600 = vpack.c.bf16 %v2599, %v2598
        %v2601 = vld [vmem:[%s9] sm:$0xf]
        %v2602 = vld [vmem:[%s9 + $0x4] sm:$0xf]
        %v2603 = vld [vmem:[%s9 + $0x8] sm:$0xf]
        %v2604 = vld [vmem:[%s9 + $0xc] sm:$0xf]
        %v2605 = vld [vmem:[%s10] sm:$0x1]
        %v2607 = vlaneseq
        %v2608 = vshrl.u32 %v2607, 7
        %v2609 = vsub.s32 0, %v2608
        %v2610 = vrot.slane %v2605, %v2609
        %v2616 = vunpack.c.l.b16 %v2601
        %v2617 = vunpack.c.l.b16 %v2602
        %v2618 = vunpack.c.l.b16 %v2603
        %v2619 = vunpack.c.l.b16 %v2604
        %v2620 = vpack.c.b16 %v2617, %v2616
        %v2621 = vpack.c.b16 %v2619, %v2618
        %v2625 = vsel %vm1259, %v2600, 0
        %2627 = vmatprep.subr.bf16.mxu0 0
        %2628 = vmatpush1.bf16.msra.mxu0 %v2620
        %2629 = vmatprep.subr.bf16.mxu0 0
        %2630 = vmatpush1.bf16.msra.mxu0 %v2621
        %2631 = vmatprep.subr.bf16.mxu0 0
        %2632 = vmatpush1.bf16.msra.mxu0 0
        %2633 = vmatprep.subr.bf16.mxu0 0
        %2634 = vmatpush1.bf16.msra.mxu0 0
        %2635 = vmatprep.subr.bf16.mxu0 0
        %2636 = vmatpush1.bf16.msra.mxu0 0
        %2637 = vmatprep.subr.bf16.mxu0 0
        %2638 = vmatpush1.bf16.msra.mxu0 0
        %2639 = vmatprep.subr.bf16.mxu0 0
        %2640 = vmatpush1.bf16.msra.mxu0 0
        %2641 = vmatprep.subr.bf16.mxu0 0
        %2642 = vmatpush1.bf16.msra.mxu0 0
        %2643 = vmatprep.subr.bf16.mxu0 0
        %2644 = vmatpush1.bf16.msra.mxu0 0
        %2645 = vmatprep.subr.bf16.mxu0 0
        %2646 = vmatpush1.bf16.msra.mxu0 0
        %2647 = vmatprep.subr.bf16.mxu0 0
        %2648 = vmatpush1.bf16.msra.mxu0 0
        %2649 = vmatprep.subr.bf16.mxu0 0
        %2650 = vmatpush1.bf16.msra.mxu0 0
        %2651 = vmatprep.subr.bf16.mxu0 0
        %2652 = vmatpush1.bf16.msra.mxu0 0
        %2653 = vmatprep.subr.bf16.mxu0 0
        %2654 = vmatpush1.bf16.msra.mxu0 0
        %2655 = vmatprep.subr.bf16.mxu0 0
        %2656 = vmatpush1.bf16.msra.mxu0 0
        %2657 = vmatprep.subr.bf16.mxu0 0
        %2658 = vmatpush1.bf16.msra.mxu0 0
        %2659 = vmatprep.mubr.bf16.mxu0 0
        %2660 = vmatmul.mubr.bf16.gmra.mrb[0].mxu0 %v2625
        %v2661 = vpop.f32.mrb[0].mxu0
        %v2662 = vadd.f32 %v2610, %v2661
        %v2663 = vpop.f32.mrb[0].mxu0
        %v2664 = vpop.f32.mrb[0].mxu0
        %v2665 = vadd.f32 %v2610, %v2664
        %v2666 = vpop.f32.mrb[0].mxu0
        %2667 = vdwg.mxu0
        %v2668 = vmax.f32 %v2662, 0.0
        %v2669 = vmax.f32 %v2665, 0.0
        %v2670 = vpack.c.bf16 %v2669, %v2668
        %v2671 = vld [vmem:[%s11] sm:$0xf]
        %v2672 = vld [vmem:[%s11 + $0x4] sm:$0xf]
        %v2673 = vld [vmem:[%s11 + $0x8] sm:$0xf]
        %v2674 = vld [vmem:[%s11 + $0xc] sm:$0xf]
        %v2675 = vld [vmem:[%s11 + $0x10] sm:$0xf]
        %v2676 = vld [vmem:[%s11 + $0x14] sm:$0xf]
        %v2677 = vld [vmem:[%s11 + $0x18] sm:$0xf]
        %v2678 = vld [vmem:[%s11 + $0x1c] sm:$0xf]
        %v2679 = vld [vmem:[%s12] sm:$0x1]
        %v2681 = vlaneseq
        %v2682 = vshrl.u32 %v2681, 7
        %v2683 = vsub.s32 0, %v2682
        %v2684 = vrot.slane %v2679, %v2683
        %v2694 = vunpack.c.l.b16 %v2671
        %v2695 = vunpack.c.l.b16 %v2672
        %v2696 = vunpack.c.l.b16 %v2673
        %v2697 = vunpack.c.l.b16 %v2674
        %v2698 = vunpack.c.l.b16 %v2675
        %v2699 = vunpack.c.l.b16 %v2676
        %v2700 = vunpack.c.l.b16 %v2677
        %v2701 = vunpack.c.l.b16 %v2678
        %v2702 = vpack.c.b16 %v2695, %v2694
        %v2703 = vpack.c.b16 %v2697, %v2696
        %v2704 = vpack.c.b16 %v2699, %v2698
        %v2705 = vpack.c.b16 %v2701, %v2700
        %vm2710 = vcmask 523264
        %v2712 = vsel %vm2710, %v2670, 0
        %2714 = vmatprep.subr.bf16.mxu0 0
        %2715 = vmatpush1.bf16.msra.mxu0 %v2702
        %2716 = vmatprep.subr.bf16.mxu0 0
        %2717 = vmatpush1.bf16.msra.mxu0 %v2703
        %2718 = vmatprep.subr.bf16.mxu0 0
        %2719 = vmatpush1.bf16.msra.mxu0 %v2704
        %2720 = vmatprep.subr.bf16.mxu0 0
        %2721 = vmatpush1.bf16.msra.mxu0 %v2705
        %2722 = vmatprep.subr.bf16.mxu0 0
        %2723 = vmatpush1.bf16.msra.mxu0 0
        %2724 = vmatprep.subr.bf16.mxu0 0
        %2725 = vmatpush1.bf16.msra.mxu0 0
        %2726 = vmatprep.subr.bf16.mxu0 0
        %2727 = vmatpush1.bf16.msra.mxu0 0
        %2728 = vmatprep.subr.bf16.mxu0 0
        %2729 = vmatpush1.bf16.msra.mxu0 0
        %2730 = vmatprep.subr.bf16.mxu0 0
        %2731 = vmatpush1.bf16.msra.mxu0 0
        %2732 = vmatprep.subr.bf16.mxu0 0
        %2733 = vmatpush1.bf16.msra.mxu0 0
        %2734 = vmatprep.subr.bf16.mxu0 0
        %2735 = vmatpush1.bf16.msra.mxu0 0
        %2736 = vmatprep.subr.bf16.mxu0 0
        %2737 = vmatpush1.bf16.msra.mxu0 0
        %2738 = vmatprep.subr.bf16.mxu0 0
        %2739 = vmatpush1.bf16.msra.mxu0 0
        %2740 = vmatprep.subr.bf16.mxu0 0
        %2741 = vmatpush1.bf16.msra.mxu0 0
        %2742 = vmatprep.subr.bf16.mxu0 0
        %2743 = vmatpush1.bf16.msra.mxu0 0
        %2744 = vmatprep.subr.bf16.mxu0 0
        %2745 = vmatpush1.bf16.msra.mxu0 0
        %2746 = vmatprep.mubr.bf16.mxu0 0
        %2747 = vmatmul.mubr.bf16.gmra.mrb[0].mxu0 %v2712
        %v2748 = vpop.f32.mrb[0].mxu0
        %v2749 = vadd.f32 %v2684, %v2748
        %v2750 = vpop.f32.mrb[0].mxu0
        %v2751 = vpop.f32.mrb[0].mxu0
        %v2752 = vadd.f32 %v2684, %v2751
        %v2753 = vpop.f32.mrb[0].mxu0
        %2754 = vdwg.mxu0
        %v2755 = vadd.f32 %v2554, %v2749
        %v2756 = vadd.f32 %v2555, %v2752
        %2757 = vst.msk [vmem:[%s568] sm:$0xff] %vm1259, %v2755
        %2758 = vst.msk [vmem:[%s568 + $0x8] sm:$0xff] %vm1259, %v2756
        %s2759 = sand.u32 %s374, 1
        %s2760 = scalar_lea.sflag [#allocation6], %s2759
        %s2761 = sand.u32 %s374, 1
        %s2762 = smul.addr %s2761, 16
        %s2763 = scalar_lea.vmem [#allocation13], %s2762
        // Predicated region
        $region105: #{tpu_custom_call.1} parent=79 // pred_check
          %p2764 = pneg %p384
        $region106: #{tpu_custom_call.1} parent=79 // pred_check_branch
          %2766 = sbr.rel (%p2764) target = $region108
        $region107: #{tpu_custom_call.1} parent=79 // pred_region
          %s2767 = smul.u32 2, %s37
          %s2769 = ssub.s32 256, 256
          %2770 = vsyncadd %s2760, %s2769
          %s2771 = smul.addr %s36, 2
          %s2772 = sadd.s32 %s2767, %s2771
          %s2773 = smul.addr %s2772, 128
          %s2774 = scalar_lea.hbm %s15, %s2773
          %s2775 = sshll.u32 %s2763, 4
          %s2776 = int_to_ptr.vmem [resolvable:$true] %s2775
          %2781 = dma.vmem_to_hbm [thread:$0]  %s2776, 256, %s2774, %s2760, 128, 128, 8
        $region108: #{tpu_custom_call.1} parent=79 // pred_fallthru
          _
      $region80: #{tpu_custom_call.1} parent=5 // pred_fallthru
        _
      %p2782 = scmp.le.s32.totalorder 2, %s27
      // Predicated region
      $region109: #{tpu_custom_call.1} parent=5 // pred_check
        %p2783 = pneg %p2782
      $region110: #{tpu_custom_call.1} parent=5 // pred_check_branch
        %2785 = sbr.rel (%p2783) target = $region112
      $region111: #{tpu_custom_call.1} parent=5 // pred_region
        %s2786 = ssub.s32 %s27, 2
        // Predicated region
        $region113: #{tpu_custom_call.1} parent=111 // pred_check
          %p2787 = pneg %p390
        $region114: #{tpu_custom_call.1} parent=111 // pred_check_branch
          %2789 = sbr.rel (%p2787) target = $region116
        $region115: #{tpu_custom_call.1} parent=111 // pred_region
          %s2790 = sand.u32 %s375, 1
          %s2791 = scalar_lea.sflag [#allocation6], %s2790
          %s2792 = sand.u32 %s375, 1
          %s2793 = smul.addr %s2792, 16
          %s2794 = scalar_lea.vmem [#allocation13], %s2793
          %2795 = dma.done %s2791, 256
        $region116: #{tpu_custom_call.1} parent=111 // pred_fallthru
          _
      $region112: #{tpu_custom_call.1} parent=5 // pred_fallthru
        _
    $region6: #{tpu_custom_call.1} parent=1 // loop_footer
      %s31 = sadd.s32 1, %s27
    $region7: #{tpu_custom_call.1} parent=1 // loop_footer_branch
      %26 = sbr.rel target = $region3
    $region8: #{tpu_custom_call.1} parent=1 // loop_exit
      _
    %2796 = vsyncpa [#allocation5], 1
    %s2797 = scalar_lea.sflag [#allocation5], 1
    %2798 = vsyncpa %s2797, 1
    %2799 = vsyncpa [#allocation8], 1
    %2800 = vsyncpa [#allocation11], 1
    %2801 = vsyncpa [#allocation6], 1
    %s2802 = scalar_lea.sflag [#allocation6], 1
    %2803 = vsyncpa %s2802, 1

</llo_original>
